<compile_context>
chip_gen: v5e
topology: v5e:2x2
jax: 0.10.0
libtpu: 0.0.40
codegen_flags: <defaults>
</compile_context>

<pallas_src>
import functools

import jax
import jax.numpy as jnp
from jax.experimental import pallas as pl
from jax.experimental.pallas import tpu as pltpu


def _round_up(v, m):
    return ((v + m - 1) // m) * m


def _task2_kernel(S1, S2, S3, T, H, K1, K2, K3, BT,
                  x_ref, w1_ref, b1_ref, w2_ref, b2_ref, w3_ref, b3_ref,
                  wih_ref, pool_ref, bih_ref, whh_ref, bhh_ref,
                  wl_ref, bl_ref, avg_ref,
                  out_ref,
                  xf_s, xb_s, hf_s, hb_s):
    f32 = jnp.float32
    H3 = 3 * H

    # ---- Conv1d #1 (in_channels=1): slab im2col, K1 shifted slices + one matmul ----
    x = x_ref[0]                                                       # (S0, 1)
    cols1 = jnp.concatenate([x[k:k + S1, :] for k in range(K1)], axis=1)          # (S1, K1)
    y1 = jnp.dot(cols1, w1_ref[...], preferred_element_type=f32) + b1_ref[...]    # (S1, C1)

    # ---- Conv1d #2: slab im2col, K2 shifted slices + one matmul ----
    cols2 = jnp.concatenate([y1[k:k + S2, :] for k in range(K2)], axis=1)         # (S2, K2*C1)
    y2 = jnp.dot(cols2, w2_ref[...], preferred_element_type=f32) + b2_ref[...]    # (S2, C1)

    # ---- Conv1d #3 (+ folded eval-mode BatchNorm) + ReLU ----
    if K3 == 1:
        cols3 = y2[0:S3, :]
    else:
        cols3 = jnp.concatenate([y2[k:k + S3, :] for k in range(K3)], axis=1)
    y3 = jnp.maximum(
        jnp.dot(cols3, w3_ref[...], preferred_element_type=f32) + b3_ref[...], 0.0)  # (S3, C3)

    # ---- Fused fwd|bwd GRU input projection BEFORE pooling (lane-dense pool output) ----
    tproj = jnp.dot(y3, wih_ref[...], preferred_element_type=f32)                 # (S3, 6H)
    # AvgPool(2,2) + slab(batch-major) -> time-major permutation + junk-row drop.
    proj = jnp.dot(pool_ref[...], tproj, preferred_element_type=f32) + bih_ref[...]   # (T*BT, 6H)
    xf_s[...] = proj[:, 0:H3]
    xb_s[...] = proj[:, H3:2 * H3]

    # ---- Bidirectional GRU: fwd/bwd hidden matmuls fused into one MXU issue ----
    whh = whh_ref[...]                                         # (H, 6H) = [whh_f | whh_b]
    bhh = bhh_ref[...]                                         # (1, 6H)
    hcat = jnp.zeros((2 * BT, H), f32)                         # rows 0:BT fwd, BT:2BT bwd
    for i in range(T):
        tf = i
        tb = T - 1 - i
        xgf = xf_s[tf * BT:(tf + 1) * BT, :]                   # (BT, 3H), sublane-aligned
        xgb = xb_s[tb * BT:(tb + 1) * BT, :]
        g = jnp.dot(hcat, whh, preferred_element_type=f32) + bhh       # (2BT, 6H)
        gf = g[0:BT, 0:H3]                                     # valid fwd quadrant
        gb = g[BT:2 * BT, H3:2 * H3]                           # valid bwd quadrant
        hf = hcat[0:BT, :]
        hb = hcat[BT:2 * BT, :]
        rf = jax.nn.sigmoid(xgf[:, 0:H] + gf[:, 0:H])
        zf = jax.nn.sigmoid(xgf[:, H:2 * H] + gf[:, H:2 * H])
        nf = jnp.tanh(xgf[:, 2 * H:H3] + rf * gf[:, 2 * H:H3])
        hf = (1.0 - zf) * nf + zf * hf
        rb = jax.nn.sigmoid(xgb[:, 0:H] + gb[:, 0:H])
        zb = jax.nn.sigmoid(xgb[:, H:2 * H] + gb[:, H:2 * H])
        nb = jnp.tanh(xgb[:, 2 * H:H3] + rb * gb[:, 2 * H:H3])
        hb = (1.0 - zb) * nb + zb * hb
        hf_s[tf * BT:(tf + 1) * BT, :] = hf
        hb_s[tb * BT:(tb + 1) * BT, :] = hb
        hcat = jnp.concatenate([hf, hb], axis=0)

    # ---- Head: Tanh -> fused Linear(2H, DOUT) -> ReLU -> per-batch time mean ----
    hseq = jnp.concatenate([jnp.tanh(hf_s[...]), jnp.tanh(hb_s[...])], axis=1)    # (T*BT, 2H)
    lin = jnp.dot(hseq, wl_ref[...], preferred_element_type=f32) + bl_ref[...]    # (T*BT, DOUT)
    act = jnp.maximum(lin, 0.0)
    out_ref[...] = jnp.dot(avg_ref[...], act,
                           preferred_element_type=f32).astype(out_ref.dtype)


def init_params(key, kernel_size, filter_size):
    C1 = int(16 * kernel_size)
    C3 = int(8 * kernel_size)
    K1 = K2 = int(3 * filter_size)
    K3 = int(1 * filter_size)
    H = int(16 * kernel_size)
    DOUT = int(128 * kernel_size)
    ks = jax.random.split(key, 16)

    def nrm(k, shape, scale=0.1):
        return scale * jax.random.normal(k, shape, dtype=jnp.float32)

    return dict(
        conv1_w=nrm(ks[0], (C1, 1, K1)), conv1_b=nrm(ks[1], (C1,)),
        conv2_w=nrm(ks[2], (C1, C1, K2)), conv2_b=nrm(ks[3], (C1,)),
        conv3_w=nrm(ks[4], (C3, C1, K3)), conv3_b=nrm(ks[5], (C3,)),
        bn_gamma=jnp.ones((C3,), jnp.float32), bn_beta=jnp.zeros((C3,), jnp.float32),
        bn_mean=jnp.zeros((C3,), jnp.float32), bn_var=jnp.ones((C3,), jnp.float32),
        gru_wih_f=nrm(ks[6], (3 * H, C3)), gru_whh_f=nrm(ks[7], (3 * H, H)),
        gru_bih_f=nrm(ks[8], (3 * H,)), gru_bhh_f=nrm(ks[9], (3 * H,)),
        gru_wih_b=nrm(ks[10], (3 * H, C3)), gru_whh_b=nrm(ks[11], (3 * H, H)),
        gru_bih_b=nrm(ks[12], (3 * H,)), gru_bhh_b=nrm(ks[13], (3 * H,)),
        lin_w=nrm(ks[14], (DOUT, 2 * H)), lin_b=nrm(ks[15], (DOUT,)),
    )


def task2_forward(x, params, kernel_size=1, filter_size=1, bn_eps=1e-5):
    f32 = jnp.float32
    B, L = x.shape
    C1 = int(16 * kernel_size)
    C3 = int(8 * kernel_size)
    K1 = K2 = int(3 * filter_size)
    K3 = int(1 * filter_size)
    H = int(16 * kernel_size)
    DOUT = int(128 * kernel_size)
    L1 = L - K1 + 1
    L2 = L1 - K2 + 1
    L3 = L2 - K3 + 1
    T = L3 // 2

    # Always fill 8 sublanes per grid step; padded batch rows are dropped at the end.
    BT = 8
    Bp = _round_up(B, BT)
    G = Bp // BT

    # Slab row budget: samples packed at stride L; each conv stage peeks (K-1) rows past
    # a sample's end (junk rows discarded by the pool/permute selection matrix), so the
    # input slab carries the cumulative (K1+K2+K3-3) extra zero rows at the tail.
    S0 = _round_up(BT * L + (K1 + K2 + K3 - 3), 8)
    S1 = S0 - (K1 - 1)
    S2 = S1 - (K2 - 1)
    S3 = S2 - (K3 - 1)

    # ---- Conv weights (host-side layout prep) ----
    w1 = jnp.transpose(params["conv1_w"], (2, 1, 0)).reshape(K1, C1).astype(f32)
    b1 = params["conv1_b"].reshape(1, C1).astype(f32)
    w2 = jnp.transpose(params["conv2_w"], (2, 1, 0)).reshape(K2 * C1, C1).astype(f32)
    b2 = params["conv2_b"].reshape(1, C1).astype(f32)

    # Eval-mode BatchNorm folded into conv3.
    bn_scale = (params["bn_gamma"] / jnp.sqrt(params["bn_var"] + bn_eps)).astype(f32)
    bn_shift = (params["bn_beta"] - params["bn_mean"] * bn_scale).astype(f32)
    w3 = (jnp.transpose(params["conv3_w"], (2, 1, 0)).reshape(K3 * C1, C3).astype(f32)
          * bn_scale[None, :])
    b3 = (params["conv3_b"].astype(f32) * bn_scale + bn_shift).reshape(1, C3)

    # ---- GRU weights: fwd|bwd fused along lanes, gate order [r|z|n] ----
    wih = jnp.concatenate([params["gru_wih_f"].T, params["gru_wih_b"].T], axis=1).astype(f32)  # (C3, 6H)
    whh = jnp.concatenate([params["gru_whh_f"].T, params["gru_whh_b"].T], axis=1).astype(f32)  # (H, 6H)
    bih = jnp.concatenate([params["gru_bih_f"], params["gru_bih_b"]]).reshape(1, 6 * H).astype(f32)
    bhh = jnp.concatenate([params["gru_bhh_f"], params["gru_bhh_b"]]).reshape(1, 6 * H).astype(f32)

    # ---- Head linear: single (2H, DOUT) weight (fwd rows 0:H, bwd rows H:2H) ----
    wl = params["lin_w"].T.astype(f32)                    # (2H, DOUT)
    bl = params["lin_b"].reshape(1, DOUT).astype(f32)

    # AvgPool(2,2) fused with slab(batch-major) -> time-major permutation (drops junk rows):
    #   proj[t*BT + b, :] = 0.5 * (slab[b*L + 2t, :] + slab[b*L + 2t + 1, :])
    r = jnp.arange(T * BT)
    rt = (r // BT)[:, None]
    rb = (r % BT)[:, None]
    c = jnp.arange(S3)
    cb = (c // L)[None, :]
    cl = (c % L)[None, :]
    pool = jnp.where((cb == rb) & ((cl == 2 * rt) | (cl == 2 * rt + 1)),
                     0.5, 0.0).astype(f32)                # (T*BT, S3)
    # TODO(synk): pool matrix is O((T*BT)*(BT*L)); for very long sequences replace the
    #             pool matmul with in-kernel pairwise adds to avoid an O(L^2) VMEM constant.

    # Per-batch mean over time of the (time-major) head activations.
    avg = jnp.where((jnp.arange(T * BT)[None, :] % BT) == jnp.arange(BT)[:, None],
                    1.0 / T, 0.0).astype(f32)             # (BT, T*BT)

    # ---- Input slab: (G, S0, 1); samples packed at stride L, zero tail padding ----
    xp = x.astype(f32)
    if Bp != B:
        xp = jnp.concatenate([xp, jnp.zeros((Bp - B, L), f32)], axis=0)
    x_slab = xp.reshape(G, BT * L)
    if S0 > BT * L:
        x_slab = jnp.concatenate([x_slab, jnp.zeros((G, S0 - BT * L), f32)], axis=1)
    x_slab = x_slab.reshape(G, S0, 1)

    kernel = functools.partial(_task2_kernel, S1, S2, S3, T, H, K1, K2, K3, BT)

    def cst(nd):
        return lambda g: (0,) * nd

    in_specs = [
        pl.BlockSpec((1, S0, 1), lambda g: (g, 0, 0)),     # x slab
        pl.BlockSpec((K1, C1), cst(2)),                    # conv1 w (im2col layout)
        pl.BlockSpec((1, C1), cst(2)),                     # conv1 b
        pl.BlockSpec((K2 * C1, C1), cst(2)),               # conv2 w (im2col layout)
        pl.BlockSpec((1, C1), cst(2)),                     # conv2 b
        pl.BlockSpec((K3 * C1, C3), cst(2)),               # conv3 w (BN folded)
        pl.BlockSpec((1, C3), cst(2)),                     # conv3 b (BN folded)
        pl.BlockSpec((C3, 6 * H), cst(2)),                 # gru W_ih fwd|bwd fused
        pl.BlockSpec((T * BT, S3), cst(2)),                # pool + permute matrix
        pl.BlockSpec((1, 6 * H), cst(2)),                  # gru b_ih fwd|bwd
        pl.BlockSpec((H, 6 * H), cst(2)),                  # gru W_hh fwd|bwd fused
        pl.BlockSpec((1, 6 * H), cst(2)),                  # gru b_hh fwd|bwd
        pl.BlockSpec((2 * H, DOUT), cst(2)),               # head weight (fused)
        pl.BlockSpec((1, DOUT), cst(2)),                   # head bias
        pl.BlockSpec((BT, T * BT), cst(2)),                # time-average matrix
    ]

    out = pl.pallas_call(
        kernel,
        out_shape=jax.ShapeDtypeStruct((Bp, DOUT), f32),
        grid=(G,),
        in_specs=in_specs,
        out_specs=pl.BlockSpec((BT, DOUT), lambda g: (g, 0)),
        scratch_shapes=[pltpu.VMEM((T * BT, 3 * H), f32),  # fwd gate inputs
                        pltpu.VMEM((T * BT, 3 * H), f32),  # bwd gate inputs
                        pltpu.VMEM((T * BT, H), f32),      # fwd hidden sequence
                        pltpu.VMEM((T * BT, H), f32)],     # bwd hidden sequence
        compiler_params=pltpu.CompilerParams(dimension_semantics=("parallel",)),
    )(x_slab, w1, b1, w2, b2, w3, b3, wih, pool, bih, whh, bhh, wl, bl, avg)
    return out[:B]


if __name__ == "__main__":
    kernel_size, filter_size = 1, 1
    key = jax.random.PRNGKey(0)
    kx, kp = jax.random.split(key)
    x = jax.random.normal(kx, (2, 32), dtype=jnp.float32)     # (batch, seq_len)
    params = init_params(kp, kernel_size, filter_size)

    out = task2_forward(x, params, kernel_size, filter_size)
    jax.block_until_ready(out)
    assert out.shape == (2, int(128 * kernel_size)), out.shape
    print("KERNEL_OK")
</pallas_src>

<mosaic_0001>
module attributes {stable_mosaic.version = 11 : i64} {
  func.func @_task2_kernel(%arg0: i32, %arg1: memref<1x264x1xf32, #tpu.memory_space<vmem>>, %arg2: memref<3x16xf32, #tpu.memory_space<vmem>>, %arg3: memref<1x16xf32, #tpu.memory_space<vmem>>, %arg4: memref<48x16xf32, #tpu.memory_space<vmem>>, %arg5: memref<1x16xf32, #tpu.memory_space<vmem>>, %arg6: memref<16x8xf32, #tpu.memory_space<vmem>>, %arg7: memref<1x8xf32, #tpu.memory_space<vmem>>, %arg8: memref<8x96xf32, #tpu.memory_space<vmem>>, %arg9: memref<112x260xf32, #tpu.memory_space<vmem>>, %arg10: memref<1x96xf32, #tpu.memory_space<vmem>>, %arg11: memref<16x96xf32, #tpu.memory_space<vmem>>, %arg12: memref<1x96xf32, #tpu.memory_space<vmem>>, %arg13: memref<32x128xf32, #tpu.memory_space<vmem>>, %arg14: memref<1x128xf32, #tpu.memory_space<vmem>>, %arg15: memref<8x112xf32, #tpu.memory_space<vmem>>, %arg16: memref<8x128xf32, #tpu.memory_space<vmem>>, %arg17: memref<112x48xf32, #tpu.memory_space<vmem>>, %arg18: memref<112x48xf32, #tpu.memory_space<vmem>>, %arg19: memref<112x16xf32, #tpu.memory_space<vmem>>, %arg20: memref<112x16xf32, #tpu.memory_space<vmem>>) attributes {dimension_semantics = [#tpu.dimension_semantics<parallel>], iteration_bounds = array<i64: 1>, scalar_prefetch = 0 : i64, scratch_operands = 4 : i64, tpu.core_type = #tpu.core_type<tc>, window_params = [{transform_indices = @transform_0, window_bounds = array<i64: 1, 264, 1>}, {pipeline_mode = #tpu.pipeline_mode<synchronous>, transform_indices = @transform_1, window_bounds = array<i64: 3, 16>}, {pipeline_mode = #tpu.pipeline_mode<synchronous>, transform_indices = @transform_2, window_bounds = array<i64: 1, 16>}, {pipeline_mode = #tpu.pipeline_mode<synchronous>, transform_indices = @transform_3, window_bounds = array<i64: 48, 16>}, {pipeline_mode = #tpu.pipeline_mode<synchronous>, transform_indices = @transform_4, window_bounds = array<i64: 1, 16>}, {pipeline_mode = #tpu.pipeline_mode<synchronous>, transform_indices = @transform_5, window_bounds = array<i64: 16, 8>}, {pipeline_mode = #tpu.pipeline_mode<synchronous>, transform_indices = @transform_6, window_bounds = array<i64: 1, 8>}, {pipeline_mode = #tpu.pipeline_mode<synchronous>, transform_indices = @transform_7, window_bounds = array<i64: 8, 96>}, {pipeline_mode = #tpu.pipeline_mode<synchronous>, transform_indices = @transform_8, window_bounds = array<i64: 112, 260>}, {pipeline_mode = #tpu.pipeline_mode<synchronous>, transform_indices = @transform_9, window_bounds = array<i64: 1, 96>}, {pipeline_mode = #tpu.pipeline_mode<synchronous>, transform_indices = @transform_10, window_bounds = array<i64: 16, 96>}, {pipeline_mode = #tpu.pipeline_mode<synchronous>, transform_indices = @transform_11, window_bounds = array<i64: 1, 96>}, {pipeline_mode = #tpu.pipeline_mode<synchronous>, transform_indices = @transform_12, window_bounds = array<i64: 32, 128>}, {pipeline_mode = #tpu.pipeline_mode<synchronous>, transform_indices = @transform_13, window_bounds = array<i64: 1, 128>}, {pipeline_mode = #tpu.pipeline_mode<synchronous>, transform_indices = @transform_14, window_bounds = array<i64: 8, 112>}, {transform_indices = @transform_15, window_bounds = array<i64: 8, 128>}]} {
    %c0 = arith.constant 0 : index
    %c0_0 = arith.constant 0 : index
    %c0_1 = arith.constant 0 : index
    %0 = vector.load %arg1[%c0, %c0_0, %c0_1] : memref<1x264x1xf32, #tpu.memory_space<vmem>>, vector<1x264x1xf32>
    %1 = vector.shape_cast %0 : vector<1x264x1xf32> to vector<264x1xf32>
    %2 = vector.extract_strided_slice %1 {offsets = [0, 0], sizes = [262, 1], strides = [1, 1]} : vector<264x1xf32> to vector<262x1xf32>
    %3 = vector.extract_strided_slice %1 {offsets = [1, 0], sizes = [262, 1], strides = [1, 1]} : vector<264x1xf32> to vector<262x1xf32>
    %4 = vector.extract_strided_slice %1 {offsets = [2, 0], sizes = [262, 1], strides = [1, 1]} : vector<264x1xf32> to vector<262x1xf32>
    %5 = tpu.concatenate %2, %3, %4 in 1 : vector<262x1xf32>, vector<262x1xf32>, vector<262x1xf32> -> vector<262x3xf32>
    %c0_2 = arith.constant 0 : index
    %c0_3 = arith.constant 0 : index
    %6 = vector.load %arg2[%c0_2, %c0_3] : memref<3x16xf32, #tpu.memory_space<vmem>>, vector<3x16xf32>
    %cst = arith.constant dense<0.000000e+00> : vector<262x16xf32>
    %7 = tpu.matmul %5, %6, %cst {dimension_numbers = #tpu.dot_dimension_numbers<[1], [0], [0], [1], [0, 0, 1, 1], [], []>} : vector<262x3xf32>, vector<3x16xf32>, vector<262x16xf32> -> vector<262x16xf32>
    %c0_4 = arith.constant 0 : index
    %c0_5 = arith.constant 0 : index
    %8 = vector.load %arg3[%c0_4, %c0_5] : memref<1x16xf32, #tpu.memory_space<vmem>>, vector<1x16xf32>
    %9 = vector.broadcast %8 : vector<1x16xf32> to vector<262x16xf32>
    %10 = arith.addf %7, %9 : vector<262x16xf32>
    %11 = vector.extract_strided_slice %10 {offsets = [0, 0], sizes = [260, 16], strides = [1, 1]} : vector<262x16xf32> to vector<260x16xf32>
    %12 = vector.extract_strided_slice %10 {offsets = [1, 0], sizes = [260, 16], strides = [1, 1]} : vector<262x16xf32> to vector<260x16xf32>
    %13 = vector.extract_strided_slice %10 {offsets = [2, 0], sizes = [260, 16], strides = [1, 1]} : vector<262x16xf32> to vector<260x16xf32>
    %14 = tpu.concatenate %11, %12, %13 in 1 : vector<260x16xf32>, vector<260x16xf32>, vector<260x16xf32> -> vector<260x48xf32>
    %c0_6 = arith.constant 0 : index
    %c0_7 = arith.constant 0 : index
    %15 = vector.load %arg4[%c0_6, %c0_7] : memref<48x16xf32, #tpu.memory_space<vmem>>, vector<48x16xf32>
    %cst_8 = arith.constant dense<0.000000e+00> : vector<260x16xf32>
    %16 = tpu.matmul %14, %15, %cst_8 {dimension_numbers = #tpu.dot_dimension_numbers<[1], [0], [0], [1], [0, 0, 1, 1], [], []>} : vector<260x48xf32>, vector<48x16xf32>, vector<260x16xf32> -> vector<260x16xf32>
    %c0_9 = arith.constant 0 : index
    %c0_10 = arith.constant 0 : index
    %17 = vector.load %arg5[%c0_9, %c0_10] : memref<1x16xf32, #tpu.memory_space<vmem>>, vector<1x16xf32>
    %18 = vector.broadcast %17 : vector<1x16xf32> to vector<260x16xf32>
    %19 = arith.addf %16, %18 : vector<260x16xf32>
    %c0_11 = arith.constant 0 : index
    %c0_12 = arith.constant 0 : index
    %20 = vector.load %arg6[%c0_11, %c0_12] : memref<16x8xf32, #tpu.memory_space<vmem>>, vector<16x8xf32>
    %cst_13 = arith.constant dense<0.000000e+00> : vector<260x8xf32>
    %21 = tpu.matmul %19, %20, %cst_13 {dimension_numbers = #tpu.dot_dimension_numbers<[1], [0], [0], [1], [0, 0, 1, 1], [], []>} : vector<260x16xf32>, vector<16x8xf32>, vector<260x8xf32> -> vector<260x8xf32>
    %c0_14 = arith.constant 0 : index
    %c0_15 = arith.constant 0 : index
    %22 = vector.load %arg7[%c0_14, %c0_15] : memref<1x8xf32, #tpu.memory_space<vmem>>, vector<1x8xf32>
    %23 = vector.broadcast %22 : vector<1x8xf32> to vector<260x8xf32>
    %24 = arith.addf %21, %23 : vector<260x8xf32>
    %cst_16 = arith.constant 0.000000e+00 : f32
    %25 = vector.broadcast %cst_16 : f32 to vector<260x8xf32>
    %26 = arith.maximumf %24, %25 : vector<260x8xf32>
    %c0_17 = arith.constant 0 : index
    %c0_18 = arith.constant 0 : index
    %27 = vector.load %arg8[%c0_17, %c0_18] : memref<8x96xf32, #tpu.memory_space<vmem>>, vector<8x96xf32>
    %cst_19 = arith.constant dense<0.000000e+00> : vector<260x96xf32>
    %28 = tpu.matmul %26, %27, %cst_19 {dimension_numbers = #tpu.dot_dimension_numbers<[1], [0], [0], [1], [0, 0, 1, 1], [], []>} : vector<260x8xf32>, vector<8x96xf32>, vector<260x96xf32> -> vector<260x96xf32>
    %c0_20 = arith.constant 0 : index
    %c0_21 = arith.constant 0 : index
    %29 = vector.load %arg9[%c0_20, %c0_21] : memref<112x260xf32, #tpu.memory_space<vmem>>, vector<112x260xf32>
    %cst_22 = arith.constant dense<0.000000e+00> : vector<112x96xf32>
    %30 = tpu.matmul %29, %28, %cst_22 {dimension_numbers = #tpu.dot_dimension_numbers<[1], [0], [0], [1], [0, 0, 1, 1], [], []>} : vector<112x260xf32>, vector<260x96xf32>, vector<112x96xf32> -> vector<112x96xf32>
    %c0_23 = arith.constant 0 : index
    %c0_24 = arith.constant 0 : index
    %31 = vector.load %arg10[%c0_23, %c0_24] : memref<1x96xf32, #tpu.memory_space<vmem>>, vector<1x96xf32>
    %32 = vector.broadcast %31 : vector<1x96xf32> to vector<112x96xf32>
    %33 = arith.addf %30, %32 : vector<112x96xf32>
    %34 = vector.extract_strided_slice %33 {offsets = [0, 0], sizes = [112, 48], strides = [1, 1]} : vector<112x96xf32> to vector<112x48xf32>
    %c0_25 = arith.constant 0 : index
    %c0_26 = arith.constant 0 : index
    %35 = vector.load %arg17[%c0_25, %c0_26] : memref<112x48xf32, #tpu.memory_space<vmem>>, vector<112x48xf32>
    tpu.vector_store %arg17[%c0_25, %c0_26], %34 {strides = array<i32>} : memref<112x48xf32, #tpu.memory_space<vmem>>, vector<112x48xf32>,
    %36 = vector.extract_strided_slice %33 {offsets = [0, 48], sizes = [112, 48], strides = [1, 1]} : vector<112x96xf32> to vector<112x48xf32>
    %c0_27 = arith.constant 0 : index
    %c0_28 = arith.constant 0 : index
    %37 = vector.load %arg18[%c0_27, %c0_28] : memref<112x48xf32, #tpu.memory_space<vmem>>, vector<112x48xf32>
    tpu.vector_store %arg18[%c0_27, %c0_28], %36 {strides = array<i32>} : memref<112x48xf32, #tpu.memory_space<vmem>>, vector<112x48xf32>,
    %c0_29 = arith.constant 0 : index
    %c0_30 = arith.constant 0 : index
    %38 = vector.load %arg11[%c0_29, %c0_30] : memref<16x96xf32, #tpu.memory_space<vmem>>, vector<16x96xf32>
    %c0_31 = arith.constant 0 : index
    %c0_32 = arith.constant 0 : index
    %39 = vector.load %arg12[%c0_31, %c0_32] : memref<1x96xf32, #tpu.memory_space<vmem>>, vector<1x96xf32>
    %cst_33 = arith.constant 0.000000e+00 : f32
    %40 = vector.broadcast %cst_33 : f32 to vector<16x16xf32>
    %c0_34 = arith.constant 0 : index
    %c0_35 = arith.constant 0 : index
    %41 = vector.load %arg17[%c0_34, %c0_35] : memref<112x48xf32, #tpu.memory_space<vmem>>, vector<8x48xf32>
    %c104 = arith.constant 104 : index
    %c0_36 = arith.constant 0 : index
    %42 = vector.load %arg18[%c104, %c0_36] : memref<112x48xf32, #tpu.memory_space<vmem>>, vector<8x48xf32>
    %cst_37 = arith.constant dense<0.000000e+00> : vector<16x96xf32>
    %43 = tpu.matmul %40, %38, %cst_37 {dimension_numbers = #tpu.dot_dimension_numbers<[1], [0], [0], [1], [0, 0, 1, 1], [], []>} : vector<16x16xf32>, vector<16x96xf32>, vector<16x96xf32> -> vector<16x96xf32>
    %44 = vector.broadcast %39 : vector<1x96xf32> to vector<16x96xf32>
    %45 = arith.addf %43, %44 : vector<16x96xf32>
    %46 = vector.extract_strided_slice %45 {offsets = [0, 0], sizes = [8, 48], strides = [1, 1]} : vector<16x96xf32> to vector<8x48xf32>
    %47 = vector.extract_strided_slice %45 {offsets = [8, 48], sizes = [8, 48], strides = [1, 1]} : vector<16x96xf32> to vector<8x48xf32>
    %48 = vector.extract_strided_slice %40 {offsets = [0, 0], sizes = [8, 16], strides = [1, 1]} : vector<16x16xf32> to vector<8x16xf32>
    %49 = vector.extract_strided_slice %40 {offsets = [8, 0], sizes = [8, 16], strides = [1, 1]} : vector<16x16xf32> to vector<8x16xf32>
    %50 = vector.extract_strided_slice %41 {offsets = [0, 0], sizes = [8, 16], strides = [1, 1]} : vector<8x48xf32> to vector<8x16xf32>
    %51 = vector.extract_strided_slice %46 {offsets = [0, 0], sizes = [8, 16], strides = [1, 1]} : vector<8x48xf32> to vector<8x16xf32>
    %52 = arith.addf %50, %51 : vector<8x16xf32>
    %53 = arith.negf %52 : vector<8x16xf32>
    %54 = math.exp %53 : vector<8x16xf32>
    %cst_38 = arith.constant 1.000000e+00 : f32
    %55 = vector.broadcast %cst_38 : f32 to vector<8x16xf32>
    %56 = arith.addf %55, %54 : vector<8x16xf32>
    %57 = arith.divf %55, %56 : vector<8x16xf32>
    %58 = vector.extract_strided_slice %41 {offsets = [0, 16], sizes = [8, 16], strides = [1, 1]} : vector<8x48xf32> to vector<8x16xf32>
    %59 = vector.extract_strided_slice %46 {offsets = [0, 16], sizes = [8, 16], strides = [1, 1]} : vector<8x48xf32> to vector<8x16xf32>
    %60 = arith.addf %58, %59 : vector<8x16xf32>
    %61 = arith.negf %60 : vector<8x16xf32>
    %62 = math.exp %61 : vector<8x16xf32>
    %cst_39 = arith.constant 1.000000e+00 : f32
    %63 = vector.broadcast %cst_39 : f32 to vector<8x16xf32>
    %64 = arith.addf %63, %62 : vector<8x16xf32>
    %65 = arith.divf %63, %64 : vector<8x16xf32>
    %66 = vector.extract_strided_slice %41 {offsets = [0, 32], sizes = [8, 16], strides = [1, 1]} : vector<8x48xf32> to vector<8x16xf32>
    %67 = vector.extract_strided_slice %46 {offsets = [0, 32], sizes = [8, 16], strides = [1, 1]} : vector<8x48xf32> to vector<8x16xf32>
    %68 = arith.mulf %57, %67 : vector<8x16xf32>
    %69 = arith.addf %66, %68 : vector<8x16xf32>
    %70 = math.tanh %69 : vector<8x16xf32>
    %cst_40 = arith.constant 1.000000e+00 : f32
    %71 = vector.broadcast %cst_40 : f32 to vector<8x16xf32>
    %72 = arith.subf %71, %65 : vector<8x16xf32>
    %73 = arith.mulf %72, %70 : vector<8x16xf32>
    %74 = arith.mulf %65, %48 : vector<8x16xf32>
    %75 = arith.addf %73, %74 : vector<8x16xf32>
    %76 = vector.extract_strided_slice %42 {offsets = [0, 0], sizes = [8, 16], strides = [1, 1]} : vector<8x48xf32> to vector<8x16xf32>
    %77 = vector.extract_strided_slice %47 {offsets = [0, 0], sizes = [8, 16], strides = [1, 1]} : vector<8x48xf32> to vector<8x16xf32>
    %78 = arith.addf %76, %77 : vector<8x16xf32>
    %79 = arith.negf %78 : vector<8x16xf32>
    %80 = math.exp %79 : vector<8x16xf32>
    %cst_41 = arith.constant 1.000000e+00 : f32
    %81 = vector.broadcast %cst_41 : f32 to vector<8x16xf32>
    %82 = arith.addf %81, %80 : vector<8x16xf32>
    %83 = arith.divf %81, %82 : vector<8x16xf32>
    %84 = vector.extract_strided_slice %42 {offsets = [0, 16], sizes = [8, 16], strides = [1, 1]} : vector<8x48xf32> to vector<8x16xf32>
    %85 = vector.extract_strided_slice %47 {offsets = [0, 16], sizes = [8, 16], strides = [1, 1]} : vector<8x48xf32> to vector<8x16xf32>
    %86 = arith.addf %84, %85 : vector<8x16xf32>
    %87 = arith.negf %86 : vector<8x16xf32>
    %88 = math.exp %87 : vector<8x16xf32>
    %cst_42 = arith.constant 1.000000e+00 : f32
    %89 = vector.broadcast %cst_42 : f32 to vector<8x16xf32>
    %90 = arith.addf %89, %88 : vector<8x16xf32>
    %91 = arith.divf %89, %90 : vector<8x16xf32>
    %92 = vector.extract_strided_slice %42 {offsets = [0, 32], sizes = [8, 16], strides = [1, 1]} : vector<8x48xf32> to vector<8x16xf32>
    %93 = vector.extract_strided_slice %47 {offsets = [0, 32], sizes = [8, 16], strides = [1, 1]} : vector<8x48xf32> to vector<8x16xf32>
    %94 = arith.mulf %83, %93 : vector<8x16xf32>
    %95 = arith.addf %92, %94 : vector<8x16xf32>
    %96 = math.tanh %95 : vector<8x16xf32>
    %cst_43 = arith.constant 1.000000e+00 : f32
    %97 = vector.broadcast %cst_43 : f32 to vector<8x16xf32>
    %98 = arith.subf %97, %91 : vector<8x16xf32>
    %99 = arith.mulf %98, %96 : vector<8x16xf32>
    %100 = arith.mulf %91, %49 : vector<8x16xf32>
    %101 = arith.addf %99, %100 : vector<8x16xf32>
    %c0_44 = arith.constant 0 : index
    %c0_45 = arith.constant 0 : index
    %102 = vector.load %arg19[%c0_44, %c0_45] : memref<112x16xf32, #tpu.memory_space<vmem>>, vector<8x16xf32>
    tpu.vector_store %arg19[%c0_44, %c0_45], %75 {strides = array<i32>} : memref<112x16xf32, #tpu.memory_space<vmem>>, vector<8x16xf32>,
    %c104_46 = arith.constant 104 : index
    %c0_47 = arith.constant 0 : index
    %103 = vector.load %arg20[%c104_46, %c0_47] : memref<112x16xf32, #tpu.memory_space<vmem>>, vector<8x16xf32>
    tpu.vector_store %arg20[%c104_46, %c0_47], %101 {strides = array<i32>} : memref<112x16xf32, #tpu.memory_space<vmem>>, vector<8x16xf32>,
    %104 = tpu.concatenate %75, %101 in 0 : vector<8x16xf32>, vector<8x16xf32> -> vector<16x16xf32>
    %c8 = arith.constant 8 : index
    %c0_48 = arith.constant 0 : index
    %105 = vector.load %arg17[%c8, %c0_48] : memref<112x48xf32, #tpu.memory_space<vmem>>, vector<8x48xf32>
    %c96 = arith.constant 96 : index
    %c0_49 = arith.constant 0 : index
    %106 = vector.load %arg18[%c96, %c0_49] : memref<112x48xf32, #tpu.memory_space<vmem>>, vector<8x48xf32>
    %cst_50 = arith.constant dense<0.000000e+00> : vector<16x96xf32>
    %107 = tpu.matmul %104, %38, %cst_50 {dimension_numbers = #tpu.dot_dimension_numbers<[1], [0], [0], [1], [0, 0, 1, 1], [], []>} : vector<16x16xf32>, vector<16x96xf32>, vector<16x96xf32> -> vector<16x96xf32>
    %108 = vector.broadcast %39 : vector<1x96xf32> to vector<16x96xf32>
    %109 = arith.addf %107, %108 : vector<16x96xf32>
    %110 = vector.extract_strided_slice %109 {offsets = [0, 0], sizes = [8, 48], strides = [1, 1]} : vector<16x96xf32> to vector<8x48xf32>
    %111 = vector.extract_strided_slice %109 {offsets = [8, 48], sizes = [8, 48], strides = [1, 1]} : vector<16x96xf32> to vector<8x48xf32>
    %112 = vector.extract_strided_slice %104 {offsets = [0, 0], sizes = [8, 16], strides = [1, 1]} : vector<16x16xf32> to vector<8x16xf32>
    %113 = vector.extract_strided_slice %104 {offsets = [8, 0], sizes = [8, 16], strides = [1, 1]} : vector<16x16xf32> to vector<8x16xf32>
    %114 = vector.extract_strided_slice %105 {offsets = [0, 0], sizes = [8, 16], strides = [1, 1]} : vector<8x48xf32> to vector<8x16xf32>
    %115 = vector.extract_strided_slice %110 {offsets = [0, 0], sizes = [8, 16], strides = [1, 1]} : vector<8x48xf32> to vector<8x16xf32>
    %116 = arith.addf %114, %115 : vector<8x16xf32>
    %117 = arith.negf %116 : vector<8x16xf32>
    %118 = math.exp %117 : vector<8x16xf32>
    %cst_51 = arith.constant 1.000000e+00 : f32
    %119 = vector.broadcast %cst_51 : f32 to vector<8x16xf32>
    %120 = arith.addf %119, %118 : vector<8x16xf32>
    %121 = arith.divf %119, %120 : vector<8x16xf32>
    %122 = vector.extract_strided_slice %105 {offsets = [0, 16], sizes = [8, 16], strides = [1, 1]} : vector<8x48xf32> to vector<8x16xf32>
    %123 = vector.extract_strided_slice %110 {offsets = [0, 16], sizes = [8, 16], strides = [1, 1]} : vector<8x48xf32> to vector<8x16xf32>
    %124 = arith.addf %122, %123 : vector<8x16xf32>
    %125 = arith.negf %124 : vector<8x16xf32>
    %126 = math.exp %125 : vector<8x16xf32>
    %cst_52 = arith.constant 1.000000e+00 : f32
    %127 = vector.broadcast %cst_52 : f32 to vector<8x16xf32>
    %128 = arith.addf %127, %126 : vector<8x16xf32>
    %129 = arith.divf %127, %128 : vector<8x16xf32>
    %130 = vector.extract_strided_slice %105 {offsets = [0, 32], sizes = [8, 16], strides = [1, 1]} : vector<8x48xf32> to vector<8x16xf32>
    %131 = vector.extract_strided_slice %110 {offsets = [0, 32], sizes = [8, 16], strides = [1, 1]} : vector<8x48xf32> to vector<8x16xf32>
    %132 = arith.mulf %121, %131 : vector<8x16xf32>
    %133 = arith.addf %130, %132 : vector<8x16xf32>
    %134 = math.tanh %133 : vector<8x16xf32>
    %cst_53 = arith.constant 1.000000e+00 : f32
    %135 = vector.broadcast %cst_53 : f32 to vector<8x16xf32>
    %136 = arith.subf %135, %129 : vector<8x16xf32>
    %137 = arith.mulf %136, %134 : vector<8x16xf32>
    %138 = arith.mulf %129, %112 : vector<8x16xf32>
    %139 = arith.addf %137, %138 : vector<8x16xf32>
    %140 = vector.extract_strided_slice %106 {offsets = [0, 0], sizes = [8, 16], strides = [1, 1]} : vector<8x48xf32> to vector<8x16xf32>
    %141 = vector.extract_strided_slice %111 {offsets = [0, 0], sizes = [8, 16], strides = [1, 1]} : vector<8x48xf32> to vector<8x16xf32>
    %142 = arith.addf %140, %141 : vector<8x16xf32>
    %143 = arith.negf %142 : vector<8x16xf32>
    %144 = math.exp %143 : vector<8x16xf32>
    %cst_54 = arith.constant 1.000000e+00 : f32
    %145 = vector.broadcast %cst_54 : f32 to vector<8x16xf32>
    %146 = arith.addf %145, %144 : vector<8x16xf32>
    %147 = arith.divf %145, %146 : vector<8x16xf32>
    %148 = vector.extract_strided_slice %106 {offsets = [0, 16], sizes = [8, 16], strides = [1, 1]} : vector<8x48xf32> to vector<8x16xf32>
    %149 = vector.extract_strided_slice %111 {offsets = [0, 16], sizes = [8, 16], strides = [1, 1]} : vector<8x48xf32> to vector<8x16xf32>
    %150 = arith.addf %148, %149 : vector<8x16xf32>
    %151 = arith.negf %150 : vector<8x16xf32>
    %152 = math.exp %151 : vector<8x16xf32>
    %cst_55 = arith.constant 1.000000e+00 : f32
    %153 = vector.broadcast %cst_55 : f32 to vector<8x16xf32>
    %154 = arith.addf %153, %152 : vector<8x16xf32>
    %155 = arith.divf %153, %154 : vector<8x16xf32>
    %156 = vector.extract_strided_slice %106 {offsets = [0, 32], sizes = [8, 16], strides = [1, 1]} : vector<8x48xf32> to vector<8x16xf32>
    %157 = vector.extract_strided_slice %111 {offsets = [0, 32], sizes = [8, 16], strides = [1, 1]} : vector<8x48xf32> to vector<8x16xf32>
    %158 = arith.mulf %147, %157 : vector<8x16xf32>
    %159 = arith.addf %156, %158 : vector<8x16xf32>
    %160 = math.tanh %159 : vector<8x16xf32>
    %cst_56 = arith.constant 1.000000e+00 : f32
    %161 = vector.broadcast %cst_56 : f32 to vector<8x16xf32>
    %162 = arith.subf %161, %155 : vector<8x16xf32>
    %163 = arith.mulf %162, %160 : vector<8x16xf32>
    %164 = arith.mulf %155, %113 : vector<8x16xf32>
    %165 = arith.addf %163, %164 : vector<8x16xf32>
    %c8_57 = arith.constant 8 : index
    %c0_58 = arith.constant 0 : index
    %166 = vector.load %arg19[%c8_57, %c0_58] : memref<112x16xf32, #tpu.memory_space<vmem>>, vector<8x16xf32>
    tpu.vector_store %arg19[%c8_57, %c0_58], %139 {strides = array<i32>} : memref<112x16xf32, #tpu.memory_space<vmem>>, vector<8x16xf32>,
    %c96_59 = arith.constant 96 : index
    %c0_60 = arith.constant 0 : index
    %167 = vector.load %arg20[%c96_59, %c0_60] : memref<112x16xf32, #tpu.memory_space<vmem>>, vector<8x16xf32>
    tpu.vector_store %arg20[%c96_59, %c0_60], %165 {strides = array<i32>} : memref<112x16xf32, #tpu.memory_space<vmem>>, vector<8x16xf32>,
    %168 = tpu.concatenate %139, %165 in 0 : vector<8x16xf32>, vector<8x16xf32> -> vector<16x16xf32>
    %c16 = arith.constant 16 : index
    %c0_61 = arith.constant 0 : index
    %169 = vector.load %arg17[%c16, %c0_61] : memref<112x48xf32, #tpu.memory_space<vmem>>, vector<8x48xf32>
    %c88 = arith.constant 88 : index
    %c0_62 = arith.constant 0 : index
    %170 = vector.load %arg18[%c88, %c0_62] : memref<112x48xf32, #tpu.memory_space<vmem>>, vector<8x48xf32>
    %cst_63 = arith.constant dense<0.000000e+00> : vector<16x96xf32>
    %171 = tpu.matmul %168, %38, %cst_63 {dimension_numbers = #tpu.dot_dimension_numbers<[1], [0], [0], [1], [0, 0, 1, 1], [], []>} : vector<16x16xf32>, vector<16x96xf32>, vector<16x96xf32> -> vector<16x96xf32>
    %172 = vector.broadcast %39 : vector<1x96xf32> to vector<16x96xf32>
    %173 = arith.addf %171, %172 : vector<16x96xf32>
    %174 = vector.extract_strided_slice %173 {offsets = [0, 0], sizes = [8, 48], strides = [1, 1]} : vector<16x96xf32> to vector<8x48xf32>
    %175 = vector.extract_strided_slice %173 {offsets = [8, 48], sizes = [8, 48], strides = [1, 1]} : vector<16x96xf32> to vector<8x48xf32>
    %176 = vector.extract_strided_slice %168 {offsets = [0, 0], sizes = [8, 16], strides = [1, 1]} : vector<16x16xf32> to vector<8x16xf32>
    %177 = vector.extract_strided_slice %168 {offsets = [8, 0], sizes = [8, 16], strides = [1, 1]} : vector<16x16xf32> to vector<8x16xf32>
    %178 = vector.extract_strided_slice %169 {offsets = [0, 0], sizes = [8, 16], strides = [1, 1]} : vector<8x48xf32> to vector<8x16xf32>
    %179 = vector.extract_strided_slice %174 {offsets = [0, 0], sizes = [8, 16], strides = [1, 1]} : vector<8x48xf32> to vector<8x16xf32>
    %180 = arith.addf %178, %179 : vector<8x16xf32>
    %181 = arith.negf %180 : vector<8x16xf32>
    %182 = math.exp %181 : vector<8x16xf32>
    %cst_64 = arith.constant 1.000000e+00 : f32
    %183 = vector.broadcast %cst_64 : f32 to vector<8x16xf32>
    %184 = arith.addf %183, %182 : vector<8x16xf32>
    %185 = arith.divf %183, %184 : vector<8x16xf32>
    %186 = vector.extract_strided_slice %169 {offsets = [0, 16], sizes = [8, 16], strides = [1, 1]} : vector<8x48xf32> to vector<8x16xf32>
    %187 = vector.extract_strided_slice %174 {offsets = [0, 16], sizes = [8, 16], strides = [1, 1]} : vector<8x48xf32> to vector<8x16xf32>
    %188 = arith.addf %186, %187 : vector<8x16xf32>
    %189 = arith.negf %188 : vector<8x16xf32>
    %190 = math.exp %189 : vector<8x16xf32>
    %cst_65 = arith.constant 1.000000e+00 : f32
    %191 = vector.broadcast %cst_65 : f32 to vector<8x16xf32>
    %192 = arith.addf %191, %190 : vector<8x16xf32>
    %193 = arith.divf %191, %192 : vector<8x16xf32>
    %194 = vector.extract_strided_slice %169 {offsets = [0, 32], sizes = [8, 16], strides = [1, 1]} : vector<8x48xf32> to vector<8x16xf32>
    %195 = vector.extract_strided_slice %174 {offsets = [0, 32], sizes = [8, 16], strides = [1, 1]} : vector<8x48xf32> to vector<8x16xf32>
    %196 = arith.mulf %185, %195 : vector<8x16xf32>
    %197 = arith.addf %194, %196 : vector<8x16xf32>
    %198 = math.tanh %197 : vector<8x16xf32>
    %cst_66 = arith.constant 1.000000e+00 : f32
    %199 = vector.broadcast %cst_66 : f32 to vector<8x16xf32>
    %200 = arith.subf %199, %193 : vector<8x16xf32>
    %201 = arith.mulf %200, %198 : vector<8x16xf32>
    %202 = arith.mulf %193, %176 : vector<8x16xf32>
    %203 = arith.addf %201, %202 : vector<8x16xf32>
    %204 = vector.extract_strided_slice %170 {offsets = [0, 0], sizes = [8, 16], strides = [1, 1]} : vector<8x48xf32> to vector<8x16xf32>
    %205 = vector.extract_strided_slice %175 {offsets = [0, 0], sizes = [8, 16], strides = [1, 1]} : vector<8x48xf32> to vector<8x16xf32>
    %206 = arith.addf %204, %205 : vector<8x16xf32>
    %207 = arith.negf %206 : vector<8x16xf32>
    %208 = math.exp %207 : vector<8x16xf32>
    %cst_67 = arith.constant 1.000000e+00 : f32
    %209 = vector.broadcast %cst_67 : f32 to vector<8x16xf32>
    %210 = arith.addf %209, %208 : vector<8x16xf32>
    %211 = arith.divf %209, %210 : vector<8x16xf32>
    %212 = vector.extract_strided_slice %170 {offsets = [0, 16], sizes = [8, 16], strides = [1, 1]} : vector<8x48xf32> to vector<8x16xf32>
    %213 = vector.extract_strided_slice %175 {offsets = [0, 16], sizes = [8, 16], strides = [1, 1]} : vector<8x48xf32> to vector<8x16xf32>
    %214 = arith.addf %212, %213 : vector<8x16xf32>
    %215 = arith.negf %214 : vector<8x16xf32>
    %216 = math.exp %215 : vector<8x16xf32>
    %cst_68 = arith.constant 1.000000e+00 : f32
    %217 = vector.broadcast %cst_68 : f32 to vector<8x16xf32>
    %218 = arith.addf %217, %216 : vector<8x16xf32>
    %219 = arith.divf %217, %218 : vector<8x16xf32>
    %220 = vector.extract_strided_slice %170 {offsets = [0, 32], sizes = [8, 16], strides = [1, 1]} : vector<8x48xf32> to vector<8x16xf32>
    %221 = vector.extract_strided_slice %175 {offsets = [0, 32], sizes = [8, 16], strides = [1, 1]} : vector<8x48xf32> to vector<8x16xf32>
    %222 = arith.mulf %211, %221 : vector<8x16xf32>
    %223 = arith.addf %220, %222 : vector<8x16xf32>
    %224 = math.tanh %223 : vector<8x16xf32>
    %cst_69 = arith.constant 1.000000e+00 : f32
    %225 = vector.broadcast %cst_69 : f32 to vector<8x16xf32>
    %226 = arith.subf %225, %219 : vector<8x16xf32>
    %227 = arith.mulf %226, %224 : vector<8x16xf32>
    %228 = arith.mulf %219, %177 : vector<8x16xf32>
    %229 = arith.addf %227, %228 : vector<8x16xf32>
    %c16_70 = arith.constant 16 : index
    %c0_71 = arith.constant 0 : index
    %230 = vector.load %arg19[%c16_70, %c0_71] : memref<112x16xf32, #tpu.memory_space<vmem>>, vector<8x16xf32>
    tpu.vector_store %arg19[%c16_70, %c0_71], %203 {strides = array<i32>} : memref<112x16xf32, #tpu.memory_space<vmem>>, vector<8x16xf32>,
    %c88_72 = arith.constant 88 : index
    %c0_73 = arith.constant 0 : index
    %231 = vector.load %arg20[%c88_72, %c0_73] : memref<112x16xf32, #tpu.memory_space<vmem>>, vector<8x16xf32>
    tpu.vector_store %arg20[%c88_72, %c0_73], %229 {strides = array<i32>} : memref<112x16xf32, #tpu.memory_space<vmem>>, vector<8x16xf32>,
    %232 = tpu.concatenate %203, %229 in 0 : vector<8x16xf32>, vector<8x16xf32> -> vector<16x16xf32>
    %c24 = arith.constant 24 : index
    %c0_74 = arith.constant 0 : index
    %233 = vector.load %arg17[%c24, %c0_74] : memref<112x48xf32, #tpu.memory_space<vmem>>, vector<8x48xf32>
    %c80 = arith.constant 80 : index
    %c0_75 = arith.constant 0 : index
    %234 = vector.load %arg18[%c80, %c0_75] : memref<112x48xf32, #tpu.memory_space<vmem>>, vector<8x48xf32>
    %cst_76 = arith.constant dense<0.000000e+00> : vector<16x96xf32>
    %235 = tpu.matmul %232, %38, %cst_76 {dimension_numbers = #tpu.dot_dimension_numbers<[1], [0], [0], [1], [0, 0, 1, 1], [], []>} : vector<16x16xf32>, vector<16x96xf32>, vector<16x96xf32> -> vector<16x96xf32>
    %236 = vector.broadcast %39 : vector<1x96xf32> to vector<16x96xf32>
    %237 = arith.addf %235, %236 : vector<16x96xf32>
    %238 = vector.extract_strided_slice %237 {offsets = [0, 0], sizes = [8, 48], strides = [1, 1]} : vector<16x96xf32> to vector<8x48xf32>
    %239 = vector.extract_strided_slice %237 {offsets = [8, 48], sizes = [8, 48], strides = [1, 1]} : vector<16x96xf32> to vector<8x48xf32>
    %240 = vector.extract_strided_slice %232 {offsets = [0, 0], sizes = [8, 16], strides = [1, 1]} : vector<16x16xf32> to vector<8x16xf32>
    %241 = vector.extract_strided_slice %232 {offsets = [8, 0], sizes = [8, 16], strides = [1, 1]} : vector<16x16xf32> to vector<8x16xf32>
    %242 = vector.extract_strided_slice %233 {offsets = [0, 0], sizes = [8, 16], strides = [1, 1]} : vector<8x48xf32> to vector<8x16xf32>
    %243 = vector.extract_strided_slice %238 {offsets = [0, 0], sizes = [8, 16], strides = [1, 1]} : vector<8x48xf32> to vector<8x16xf32>
    %244 = arith.addf %242, %243 : vector<8x16xf32>
    %245 = arith.negf %244 : vector<8x16xf32>
    %246 = math.exp %245 : vector<8x16xf32>
    %cst_77 = arith.constant 1.000000e+00 : f32
    %247 = vector.broadcast %cst_77 : f32 to vector<8x16xf32>
    %248 = arith.addf %247, %246 : vector<8x16xf32>
    %249 = arith.divf %247, %248 : vector<8x16xf32>
    %250 = vector.extract_strided_slice %233 {offsets = [0, 16], sizes = [8, 16], strides = [1, 1]} : vector<8x48xf32> to vector<8x16xf32>
    %251 = vector.extract_strided_slice %238 {offsets = [0, 16], sizes = [8, 16], strides = [1, 1]} : vector<8x48xf32> to vector<8x16xf32>
    %252 = arith.addf %250, %251 : vector<8x16xf32>
    %253 = arith.negf %252 : vector<8x16xf32>
    %254 = math.exp %253 : vector<8x16xf32>
    %cst_78 = arith.constant 1.000000e+00 : f32
    %255 = vector.broadcast %cst_78 : f32 to vector<8x16xf32>
    %256 = arith.addf %255, %254 : vector<8x16xf32>
    %257 = arith.divf %255, %256 : vector<8x16xf32>
    %258 = vector.extract_strided_slice %233 {offsets = [0, 32], sizes = [8, 16], strides = [1, 1]} : vector<8x48xf32> to vector<8x16xf32>
    %259 = vector.extract_strided_slice %238 {offsets = [0, 32], sizes = [8, 16], strides = [1, 1]} : vector<8x48xf32> to vector<8x16xf32>
    %260 = arith.mulf %249, %259 : vector<8x16xf32>
    %261 = arith.addf %258, %260 : vector<8x16xf32>
    %262 = math.tanh %261 : vector<8x16xf32>
    %cst_79 = arith.constant 1.000000e+00 : f32
    %263 = vector.broadcast %cst_79 : f32 to vector<8x16xf32>
    %264 = arith.subf %263, %257 : vector<8x16xf32>
    %265 = arith.mulf %264, %262 : vector<8x16xf32>
    %266 = arith.mulf %257, %240 : vector<8x16xf32>
    %267 = arith.addf %265, %266 : vector<8x16xf32>
    %268 = vector.extract_strided_slice %234 {offsets = [0, 0], sizes = [8, 16], strides = [1, 1]} : vector<8x48xf32> to vector<8x16xf32>
    %269 = vector.extract_strided_slice %239 {offsets = [0, 0], sizes = [8, 16], strides = [1, 1]} : vector<8x48xf32> to vector<8x16xf32>
    %270 = arith.addf %268, %269 : vector<8x16xf32>
    %271 = arith.negf %270 : vector<8x16xf32>
    %272 = math.exp %271 : vector<8x16xf32>
    %cst_80 = arith.constant 1.000000e+00 : f32
    %273 = vector.broadcast %cst_80 : f32 to vector<8x16xf32>
    %274 = arith.addf %273, %272 : vector<8x16xf32>
    %275 = arith.divf %273, %274 : vector<8x16xf32>
    %276 = vector.extract_strided_slice %234 {offsets = [0, 16], sizes = [8, 16], strides = [1, 1]} : vector<8x48xf32> to vector<8x16xf32>
    %277 = vector.extract_strided_slice %239 {offsets = [0, 16], sizes = [8, 16], strides = [1, 1]} : vector<8x48xf32> to vector<8x16xf32>
    %278 = arith.addf %276, %277 : vector<8x16xf32>
    %279 = arith.negf %278 : vector<8x16xf32>
    %280 = math.exp %279 : vector<8x16xf32>
    %cst_81 = arith.constant 1.000000e+00 : f32
    %281 = vector.broadcast %cst_81 : f32 to vector<8x16xf32>
    %282 = arith.addf %281, %280 : vector<8x16xf32>
    %283 = arith.divf %281, %282 : vector<8x16xf32>
    %284 = vector.extract_strided_slice %234 {offsets = [0, 32], sizes = [8, 16], strides = [1, 1]} : vector<8x48xf32> to vector<8x16xf32>
    %285 = vector.extract_strided_slice %239 {offsets = [0, 32], sizes = [8, 16], strides = [1, 1]} : vector<8x48xf32> to vector<8x16xf32>
    %286 = arith.mulf %275, %285 : vector<8x16xf32>
    %287 = arith.addf %284, %286 : vector<8x16xf32>
    %288 = math.tanh %287 : vector<8x16xf32>
    %cst_82 = arith.constant 1.000000e+00 : f32
    %289 = vector.broadcast %cst_82 : f32 to vector<8x16xf32>
    %290 = arith.subf %289, %283 : vector<8x16xf32>
    %291 = arith.mulf %290, %288 : vector<8x16xf32>
    %292 = arith.mulf %283, %241 : vector<8x16xf32>
    %293 = arith.addf %291, %292 : vector<8x16xf32>
    %c24_83 = arith.constant 24 : index
    %c0_84 = arith.constant 0 : index
    %294 = vector.load %arg19[%c24_83, %c0_84] : memref<112x16xf32, #tpu.memory_space<vmem>>, vector<8x16xf32>
    tpu.vector_store %arg19[%c24_83, %c0_84], %267 {strides = array<i32>} : memref<112x16xf32, #tpu.memory_space<vmem>>, vector<8x16xf32>,
    %c80_85 = arith.constant 80 : index
    %c0_86 = arith.constant 0 : index
    %295 = vector.load %arg20[%c80_85, %c0_86] : memref<112x16xf32, #tpu.memory_space<vmem>>, vector<8x16xf32>
    tpu.vector_store %arg20[%c80_85, %c0_86], %293 {strides = array<i32>} : memref<112x16xf32, #tpu.memory_space<vmem>>, vector<8x16xf32>,
    %296 = tpu.concatenate %267, %293 in 0 : vector<8x16xf32>, vector<8x16xf32> -> vector<16x16xf32>
    %c32 = arith.constant 32 : index
    %c0_87 = arith.constant 0 : index
    %297 = vector.load %arg17[%c32, %c0_87] : memref<112x48xf32, #tpu.memory_space<vmem>>, vector<8x48xf32>
    %c72 = arith.constant 72 : index
    %c0_88 = arith.constant 0 : index
    %298 = vector.load %arg18[%c72, %c0_88] : memref<112x48xf32, #tpu.memory_space<vmem>>, vector<8x48xf32>
    %cst_89 = arith.constant dense<0.000000e+00> : vector<16x96xf32>
    %299 = tpu.matmul %296, %38, %cst_89 {dimension_numbers = #tpu.dot_dimension_numbers<[1], [0], [0], [1], [0, 0, 1, 1], [], []>} : vector<16x16xf32>, vector<16x96xf32>, vector<16x96xf32> -> vector<16x96xf32>
    %300 = vector.broadcast %39 : vector<1x96xf32> to vector<16x96xf32>
    %301 = arith.addf %299, %300 : vector<16x96xf32>
    %302 = vector.extract_strided_slice %301 {offsets = [0, 0], sizes = [8, 48], strides = [1, 1]} : vector<16x96xf32> to vector<8x48xf32>
    %303 = vector.extract_strided_slice %301 {offsets = [8, 48], sizes = [8, 48], strides = [1, 1]} : vector<16x96xf32> to vector<8x48xf32>
    %304 = vector.extract_strided_slice %296 {offsets = [0, 0], sizes = [8, 16], strides = [1, 1]} : vector<16x16xf32> to vector<8x16xf32>
    %305 = vector.extract_strided_slice %296 {offsets = [8, 0], sizes = [8, 16], strides = [1, 1]} : vector<16x16xf32> to vector<8x16xf32>
    %306 = vector.extract_strided_slice %297 {offsets = [0, 0], sizes = [8, 16], strides = [1, 1]} : vector<8x48xf32> to vector<8x16xf32>
    %307 = vector.extract_strided_slice %302 {offsets = [0, 0], sizes = [8, 16], strides = [1, 1]} : vector<8x48xf32> to vector<8x16xf32>
    %308 = arith.addf %306, %307 : vector<8x16xf32>
    %309 = arith.negf %308 : vector<8x16xf32>
    %310 = math.exp %309 : vector<8x16xf32>
    %cst_90 = arith.constant 1.000000e+00 : f32
    %311 = vector.broadcast %cst_90 : f32 to vector<8x16xf32>
    %312 = arith.addf %311, %310 : vector<8x16xf32>
    %313 = arith.divf %311, %312 : vector<8x16xf32>
    %314 = vector.extract_strided_slice %297 {offsets = [0, 16], sizes = [8, 16], strides = [1, 1]} : vector<8x48xf32> to vector<8x16xf32>
    %315 = vector.extract_strided_slice %302 {offsets = [0, 16], sizes = [8, 16], strides = [1, 1]} : vector<8x48xf32> to vector<8x16xf32>
    %316 = arith.addf %314, %315 : vector<8x16xf32>
    %317 = arith.negf %316 : vector<8x16xf32>
    %318 = math.exp %317 : vector<8x16xf32>
    %cst_91 = arith.constant 1.000000e+00 : f32
    %319 = vector.broadcast %cst_91 : f32 to vector<8x16xf32>
    %320 = arith.addf %319, %318 : vector<8x16xf32>
    %321 = arith.divf %319, %320 : vector<8x16xf32>
    %322 = vector.extract_strided_slice %297 {offsets = [0, 32], sizes = [8, 16], strides = [1, 1]} : vector<8x48xf32> to vector<8x16xf32>
    %323 = vector.extract_strided_slice %302 {offsets = [0, 32], sizes = [8, 16], strides = [1, 1]} : vector<8x48xf32> to vector<8x16xf32>
    %324 = arith.mulf %313, %323 : vector<8x16xf32>
    %325 = arith.addf %322, %324 : vector<8x16xf32>
    %326 = math.tanh %325 : vector<8x16xf32>
    %cst_92 = arith.constant 1.000000e+00 : f32
    %327 = vector.broadcast %cst_92 : f32 to vector<8x16xf32>
    %328 = arith.subf %327, %321 : vector<8x16xf32>
    %329 = arith.mulf %328, %326 : vector<8x16xf32>
    %330 = arith.mulf %321, %304 : vector<8x16xf32>
    %331 = arith.addf %329, %330 : vector<8x16xf32>
    %332 = vector.extract_strided_slice %298 {offsets = [0, 0], sizes = [8, 16], strides = [1, 1]} : vector<8x48xf32> to vector<8x16xf32>
    %333 = vector.extract_strided_slice %303 {offsets = [0, 0], sizes = [8, 16], strides = [1, 1]} : vector<8x48xf32> to vector<8x16xf32>
    %334 = arith.addf %332, %333 : vector<8x16xf32>
    %335 = arith.negf %334 : vector<8x16xf32>
    %336 = math.exp %335 : vector<8x16xf32>
    %cst_93 = arith.constant 1.000000e+00 : f32
    %337 = vector.broadcast %cst_93 : f32 to vector<8x16xf32>
    %338 = arith.addf %337, %336 : vector<8x16xf32>
    %339 = arith.divf %337, %338 : vector<8x16xf32>
    %340 = vector.extract_strided_slice %298 {offsets = [0, 16], sizes = [8, 16], strides = [1, 1]} : vector<8x48xf32> to vector<8x16xf32>
    %341 = vector.extract_strided_slice %303 {offsets = [0, 16], sizes = [8, 16], strides = [1, 1]} : vector<8x48xf32> to vector<8x16xf32>
    %342 = arith.addf %340, %341 : vector<8x16xf32>
    %343 = arith.negf %342 : vector<8x16xf32>
    %344 = math.exp %343 : vector<8x16xf32>
    %cst_94 = arith.constant 1.000000e+00 : f32
    %345 = vector.broadcast %cst_94 : f32 to vector<8x16xf32>
    %346 = arith.addf %345, %344 : vector<8x16xf32>
    %347 = arith.divf %345, %346 : vector<8x16xf32>
    %348 = vector.extract_strided_slice %298 {offsets = [0, 32], sizes = [8, 16], strides = [1, 1]} : vector<8x48xf32> to vector<8x16xf32>
    %349 = vector.extract_strided_slice %303 {offsets = [0, 32], sizes = [8, 16], strides = [1, 1]} : vector<8x48xf32> to vector<8x16xf32>
    %350 = arith.mulf %339, %349 : vector<8x16xf32>
    %351 = arith.addf %348, %350 : vector<8x16xf32>
    %352 = math.tanh %351 : vector<8x16xf32>
    %cst_95 = arith.constant 1.000000e+00 : f32
    %353 = vector.broadcast %cst_95 : f32 to vector<8x16xf32>
    %354 = arith.subf %353, %347 : vector<8x16xf32>
    %355 = arith.mulf %354, %352 : vector<8x16xf32>
    %356 = arith.mulf %347, %305 : vector<8x16xf32>
    %357 = arith.addf %355, %356 : vector<8x16xf32>
    %c32_96 = arith.constant 32 : index
    %c0_97 = arith.constant 0 : index
    %358 = vector.load %arg19[%c32_96, %c0_97] : memref<112x16xf32, #tpu.memory_space<vmem>>, vector<8x16xf32>
    tpu.vector_store %arg19[%c32_96, %c0_97], %331 {strides = array<i32>} : memref<112x16xf32, #tpu.memory_space<vmem>>, vector<8x16xf32>,
    %c72_98 = arith.constant 72 : index
    %c0_99 = arith.constant 0 : index
    %359 = vector.load %arg20[%c72_98, %c0_99] : memref<112x16xf32, #tpu.memory_space<vmem>>, vector<8x16xf32>
    tpu.vector_store %arg20[%c72_98, %c0_99], %357 {strides = array<i32>} : memref<112x16xf32, #tpu.memory_space<vmem>>, vector<8x16xf32>,
    %360 = tpu.concatenate %331, %357 in 0 : vector<8x16xf32>, vector<8x16xf32> -> vector<16x16xf32>
    %c40 = arith.constant 40 : index
    %c0_100 = arith.constant 0 : index
    %361 = vector.load %arg17[%c40, %c0_100] : memref<112x48xf32, #tpu.memory_space<vmem>>, vector<8x48xf32>
    %c64 = arith.constant 64 : index
    %c0_101 = arith.constant 0 : index
    %362 = vector.load %arg18[%c64, %c0_101] : memref<112x48xf32, #tpu.memory_space<vmem>>, vector<8x48xf32>
    %cst_102 = arith.constant dense<0.000000e+00> : vector<16x96xf32>
    %363 = tpu.matmul %360, %38, %cst_102 {dimension_numbers = #tpu.dot_dimension_numbers<[1], [0], [0], [1], [0, 0, 1, 1], [], []>} : vector<16x16xf32>, vector<16x96xf32>, vector<16x96xf32> -> vector<16x96xf32>
    %364 = vector.broadcast %39 : vector<1x96xf32> to vector<16x96xf32>
    %365 = arith.addf %363, %364 : vector<16x96xf32>
    %366 = vector.extract_strided_slice %365 {offsets = [0, 0], sizes = [8, 48], strides = [1, 1]} : vector<16x96xf32> to vector<8x48xf32>
    %367 = vector.extract_strided_slice %365 {offsets = [8, 48], sizes = [8, 48], strides = [1, 1]} : vector<16x96xf32> to vector<8x48xf32>
    %368 = vector.extract_strided_slice %360 {offsets = [0, 0], sizes = [8, 16], strides = [1, 1]} : vector<16x16xf32> to vector<8x16xf32>
    %369 = vector.extract_strided_slice %360 {offsets = [8, 0], sizes = [8, 16], strides = [1, 1]} : vector<16x16xf32> to vector<8x16xf32>
    %370 = vector.extract_strided_slice %361 {offsets = [0, 0], sizes = [8, 16], strides = [1, 1]} : vector<8x48xf32> to vector<8x16xf32>
    %371 = vector.extract_strided_slice %366 {offsets = [0, 0], sizes = [8, 16], strides = [1, 1]} : vector<8x48xf32> to vector<8x16xf32>
    %372 = arith.addf %370, %371 : vector<8x16xf32>
    %373 = arith.negf %372 : vector<8x16xf32>
    %374 = math.exp %373 : vector<8x16xf32>
    %cst_103 = arith.constant 1.000000e+00 : f32
    %375 = vector.broadcast %cst_103 : f32 to vector<8x16xf32>
    %376 = arith.addf %375, %374 : vector<8x16xf32>
    %377 = arith.divf %375, %376 : vector<8x16xf32>
    %378 = vector.extract_strided_slice %361 {offsets = [0, 16], sizes = [8, 16], strides = [1, 1]} : vector<8x48xf32> to vector<8x16xf32>
    %379 = vector.extract_strided_slice %366 {offsets = [0, 16], sizes = [8, 16], strides = [1, 1]} : vector<8x48xf32> to vector<8x16xf32>
    %380 = arith.addf %378, %379 : vector<8x16xf32>
    %381 = arith.negf %380 : vector<8x16xf32>
    %382 = math.exp %381 : vector<8x16xf32>
    %cst_104 = arith.constant 1.000000e+00 : f32
    %383 = vector.broadcast %cst_104 : f32 to vector<8x16xf32>
    %384 = arith.addf %383, %382 : vector<8x16xf32>
    %385 = arith.divf %383, %384 : vector<8x16xf32>
    %386 = vector.extract_strided_slice %361 {offsets = [0, 32], sizes = [8, 16], strides = [1, 1]} : vector<8x48xf32> to vector<8x16xf32>
    %387 = vector.extract_strided_slice %366 {offsets = [0, 32], sizes = [8, 16], strides = [1, 1]} : vector<8x48xf32> to vector<8x16xf32>
    %388 = arith.mulf %377, %387 : vector<8x16xf32>
    %389 = arith.addf %386, %388 : vector<8x16xf32>
    %390 = math.tanh %389 : vector<8x16xf32>
    %cst_105 = arith.constant 1.000000e+00 : f32
    %391 = vector.broadcast %cst_105 : f32 to vector<8x16xf32>
    %392 = arith.subf %391, %385 : vector<8x16xf32>
    %393 = arith.mulf %392, %390 : vector<8x16xf32>
    %394 = arith.mulf %385, %368 : vector<8x16xf32>
    %395 = arith.addf %393, %394 : vector<8x16xf32>
    %396 = vector.extract_strided_slice %362 {offsets = [0, 0], sizes = [8, 16], strides = [1, 1]} : vector<8x48xf32> to vector<8x16xf32>
    %397 = vector.extract_strided_slice %367 {offsets = [0, 0], sizes = [8, 16], strides = [1, 1]} : vector<8x48xf32> to vector<8x16xf32>
    %398 = arith.addf %396, %397 : vector<8x16xf32>
    %399 = arith.negf %398 : vector<8x16xf32>
    %400 = math.exp %399 : vector<8x16xf32>
    %cst_106 = arith.constant 1.000000e+00 : f32
    %401 = vector.broadcast %cst_106 : f32 to vector<8x16xf32>
    %402 = arith.addf %401, %400 : vector<8x16xf32>
    %403 = arith.divf %401, %402 : vector<8x16xf32>
    %404 = vector.extract_strided_slice %362 {offsets = [0, 16], sizes = [8, 16], strides = [1, 1]} : vector<8x48xf32> to vector<8x16xf32>
    %405 = vector.extract_strided_slice %367 {offsets = [0, 16], sizes = [8, 16], strides = [1, 1]} : vector<8x48xf32> to vector<8x16xf32>
    %406 = arith.addf %404, %405 : vector<8x16xf32>
    %407 = arith.negf %406 : vector<8x16xf32>
    %408 = math.exp %407 : vector<8x16xf32>
    %cst_107 = arith.constant 1.000000e+00 : f32
    %409 = vector.broadcast %cst_107 : f32 to vector<8x16xf32>
    %410 = arith.addf %409, %408 : vector<8x16xf32>
    %411 = arith.divf %409, %410 : vector<8x16xf32>
    %412 = vector.extract_strided_slice %362 {offsets = [0, 32], sizes = [8, 16], strides = [1, 1]} : vector<8x48xf32> to vector<8x16xf32>
    %413 = vector.extract_strided_slice %367 {offsets = [0, 32], sizes = [8, 16], strides = [1, 1]} : vector<8x48xf32> to vector<8x16xf32>
    %414 = arith.mulf %403, %413 : vector<8x16xf32>
    %415 = arith.addf %412, %414 : vector<8x16xf32>
    %416 = math.tanh %415 : vector<8x16xf32>
    %cst_108 = arith.constant 1.000000e+00 : f32
    %417 = vector.broadcast %cst_108 : f32 to vector<8x16xf32>
    %418 = arith.subf %417, %411 : vector<8x16xf32>
    %419 = arith.mulf %418, %416 : vector<8x16xf32>
    %420 = arith.mulf %411, %369 : vector<8x16xf32>
    %421 = arith.addf %419, %420 : vector<8x16xf32>
    %c40_109 = arith.constant 40 : index
    %c0_110 = arith.constant 0 : index
    %422 = vector.load %arg19[%c40_109, %c0_110] : memref<112x16xf32, #tpu.memory_space<vmem>>, vector<8x16xf32>
    tpu.vector_store %arg19[%c40_109, %c0_110], %395 {strides = array<i32>} : memref<112x16xf32, #tpu.memory_space<vmem>>, vector<8x16xf32>,
    %c64_111 = arith.constant 64 : index
    %c0_112 = arith.constant 0 : index
    %423 = vector.load %arg20[%c64_111, %c0_112] : memref<112x16xf32, #tpu.memory_space<vmem>>, vector<8x16xf32>
    tpu.vector_store %arg20[%c64_111, %c0_112], %421 {strides = array<i32>} : memref<112x16xf32, #tpu.memory_space<vmem>>, vector<8x16xf32>,
    %424 = tpu.concatenate %395, %421 in 0 : vector<8x16xf32>, vector<8x16xf32> -> vector<16x16xf32>
    %c48 = arith.constant 48 : index
    %c0_113 = arith.constant 0 : index
    %425 = vector.load %arg17[%c48, %c0_113] : memref<112x48xf32, #tpu.memory_space<vmem>>, vector<8x48xf32>
    %c56 = arith.constant 56 : index
    %c0_114 = arith.constant 0 : index
    %426 = vector.load %arg18[%c56, %c0_114] : memref<112x48xf32, #tpu.memory_space<vmem>>, vector<8x48xf32>
    %cst_115 = arith.constant dense<0.000000e+00> : vector<16x96xf32>
    %427 = tpu.matmul %424, %38, %cst_115 {dimension_numbers = #tpu.dot_dimension_numbers<[1], [0], [0], [1], [0, 0, 1, 1], [], []>} : vector<16x16xf32>, vector<16x96xf32>, vector<16x96xf32> -> vector<16x96xf32>
    %428 = vector.broadcast %39 : vector<1x96xf32> to vector<16x96xf32>
    %429 = arith.addf %427, %428 : vector<16x96xf32>
    %430 = vector.extract_strided_slice %429 {offsets = [0, 0], sizes = [8, 48], strides = [1, 1]} : vector<16x96xf32> to vector<8x48xf32>
    %431 = vector.extract_strided_slice %429 {offsets = [8, 48], sizes = [8, 48], strides = [1, 1]} : vector<16x96xf32> to vector<8x48xf32>
    %432 = vector.extract_strided_slice %424 {offsets = [0, 0], sizes = [8, 16], strides = [1, 1]} : vector<16x16xf32> to vector<8x16xf32>
    %433 = vector.extract_strided_slice %424 {offsets = [8, 0], sizes = [8, 16], strides = [1, 1]} : vector<16x16xf32> to vector<8x16xf32>
    %434 = vector.extract_strided_slice %425 {offsets = [0, 0], sizes = [8, 16], strides = [1, 1]} : vector<8x48xf32> to vector<8x16xf32>
    %435 = vector.extract_strided_slice %430 {offsets = [0, 0], sizes = [8, 16], strides = [1, 1]} : vector<8x48xf32> to vector<8x16xf32>
    %436 = arith.addf %434, %435 : vector<8x16xf32>
    %437 = arith.negf %436 : vector<8x16xf32>
    %438 = math.exp %437 : vector<8x16xf32>
    %cst_116 = arith.constant 1.000000e+00 : f32
    %439 = vector.broadcast %cst_116 : f32 to vector<8x16xf32>
    %440 = arith.addf %439, %438 : vector<8x16xf32>
    %441 = arith.divf %439, %440 : vector<8x16xf32>
    %442 = vector.extract_strided_slice %425 {offsets = [0, 16], sizes = [8, 16], strides = [1, 1]} : vector<8x48xf32> to vector<8x16xf32>
    %443 = vector.extract_strided_slice %430 {offsets = [0, 16], sizes = [8, 16], strides = [1, 1]} : vector<8x48xf32> to vector<8x16xf32>
    %444 = arith.addf %442, %443 : vector<8x16xf32>
    %445 = arith.negf %444 : vector<8x16xf32>
    %446 = math.exp %445 : vector<8x16xf32>
    %cst_117 = arith.constant 1.000000e+00 : f32
    %447 = vector.broadcast %cst_117 : f32 to vector<8x16xf32>
    %448 = arith.addf %447, %446 : vector<8x16xf32>
    %449 = arith.divf %447, %448 : vector<8x16xf32>
    %450 = vector.extract_strided_slice %425 {offsets = [0, 32], sizes = [8, 16], strides = [1, 1]} : vector<8x48xf32> to vector<8x16xf32>
    %451 = vector.extract_strided_slice %430 {offsets = [0, 32], sizes = [8, 16], strides = [1, 1]} : vector<8x48xf32> to vector<8x16xf32>
    %452 = arith.mulf %441, %451 : vector<8x16xf32>
    %453 = arith.addf %450, %452 : vector<8x16xf32>
    %454 = math.tanh %453 : vector<8x16xf32>
    %cst_118 = arith.constant 1.000000e+00 : f32
    %455 = vector.broadcast %cst_118 : f32 to vector<8x16xf32>
    %456 = arith.subf %455, %449 : vector<8x16xf32>
    %457 = arith.mulf %456, %454 : vector<8x16xf32>
    %458 = arith.mulf %449, %432 : vector<8x16xf32>
    %459 = arith.addf %457, %458 : vector<8x16xf32>
    %460 = vector.extract_strided_slice %426 {offsets = [0, 0], sizes = [8, 16], strides = [1, 1]} : vector<8x48xf32> to vector<8x16xf32>
    %461 = vector.extract_strided_slice %431 {offsets = [0, 0], sizes = [8, 16], strides = [1, 1]} : vector<8x48xf32> to vector<8x16xf32>
    %462 = arith.addf %460, %461 : vector<8x16xf32>
    %463 = arith.negf %462 : vector<8x16xf32>
    %464 = math.exp %463 : vector<8x16xf32>
    %cst_119 = arith.constant 1.000000e+00 : f32
    %465 = vector.broadcast %cst_119 : f32 to vector<8x16xf32>
    %466 = arith.addf %465, %464 : vector<8x16xf32>
    %467 = arith.divf %465, %466 : vector<8x16xf32>
    %468 = vector.extract_strided_slice %426 {offsets = [0, 16], sizes = [8, 16], strides = [1, 1]} : vector<8x48xf32> to vector<8x16xf32>
    %469 = vector.extract_strided_slice %431 {offsets = [0, 16], sizes = [8, 16], strides = [1, 1]} : vector<8x48xf32> to vector<8x16xf32>
    %470 = arith.addf %468, %469 : vector<8x16xf32>
    %471 = arith.negf %470 : vector<8x16xf32>
    %472 = math.exp %471 : vector<8x16xf32>
    %cst_120 = arith.constant 1.000000e+00 : f32
    %473 = vector.broadcast %cst_120 : f32 to vector<8x16xf32>
    %474 = arith.addf %473, %472 : vector<8x16xf32>
    %475 = arith.divf %473, %474 : vector<8x16xf32>
    %476 = vector.extract_strided_slice %426 {offsets = [0, 32], sizes = [8, 16], strides = [1, 1]} : vector<8x48xf32> to vector<8x16xf32>
    %477 = vector.extract_strided_slice %431 {offsets = [0, 32], sizes = [8, 16], strides = [1, 1]} : vector<8x48xf32> to vector<8x16xf32>
    %478 = arith.mulf %467, %477 : vector<8x16xf32>
    %479 = arith.addf %476, %478 : vector<8x16xf32>
    %480 = math.tanh %479 : vector<8x16xf32>
    %cst_121 = arith.constant 1.000000e+00 : f32
    %481 = vector.broadcast %cst_121 : f32 to vector<8x16xf32>
    %482 = arith.subf %481, %475 : vector<8x16xf32>
    %483 = arith.mulf %482, %480 : vector<8x16xf32>
    %484 = arith.mulf %475, %433 : vector<8x16xf32>
    %485 = arith.addf %483, %484 : vector<8x16xf32>
    %c48_122 = arith.constant 48 : index
    %c0_123 = arith.constant 0 : index
    %486 = vector.load %arg19[%c48_122, %c0_123] : memref<112x16xf32, #tpu.memory_space<vmem>>, vector<8x16xf32>
    tpu.vector_store %arg19[%c48_122, %c0_123], %459 {strides = array<i32>} : memref<112x16xf32, #tpu.memory_space<vmem>>, vector<8x16xf32>,
    %c56_124 = arith.constant 56 : index
    %c0_125 = arith.constant 0 : index
    %487 = vector.load %arg20[%c56_124, %c0_125] : memref<112x16xf32, #tpu.memory_space<vmem>>, vector<8x16xf32>
    tpu.vector_store %arg20[%c56_124, %c0_125], %485 {strides = array<i32>} : memref<112x16xf32, #tpu.memory_space<vmem>>, vector<8x16xf32>,
    %488 = tpu.concatenate %459, %485 in 0 : vector<8x16xf32>, vector<8x16xf32> -> vector<16x16xf32>
    %c56_126 = arith.constant 56 : index
    %c0_127 = arith.constant 0 : index
    %489 = vector.load %arg17[%c56_126, %c0_127] : memref<112x48xf32, #tpu.memory_space<vmem>>, vector<8x48xf32>
    %c48_128 = arith.constant 48 : index
    %c0_129 = arith.constant 0 : index
    %490 = vector.load %arg18[%c48_128, %c0_129] : memref<112x48xf32, #tpu.memory_space<vmem>>, vector<8x48xf32>
    %cst_130 = arith.constant dense<0.000000e+00> : vector<16x96xf32>
    %491 = tpu.matmul %488, %38, %cst_130 {dimension_numbers = #tpu.dot_dimension_numbers<[1], [0], [0], [1], [0, 0, 1, 1], [], []>} : vector<16x16xf32>, vector<16x96xf32>, vector<16x96xf32> -> vector<16x96xf32>
    %492 = vector.broadcast %39 : vector<1x96xf32> to vector<16x96xf32>
    %493 = arith.addf %491, %492 : vector<16x96xf32>
    %494 = vector.extract_strided_slice %493 {offsets = [0, 0], sizes = [8, 48], strides = [1, 1]} : vector<16x96xf32> to vector<8x48xf32>
    %495 = vector.extract_strided_slice %493 {offsets = [8, 48], sizes = [8, 48], strides = [1, 1]} : vector<16x96xf32> to vector<8x48xf32>
    %496 = vector.extract_strided_slice %488 {offsets = [0, 0], sizes = [8, 16], strides = [1, 1]} : vector<16x16xf32> to vector<8x16xf32>
    %497 = vector.extract_strided_slice %488 {offsets = [8, 0], sizes = [8, 16], strides = [1, 1]} : vector<16x16xf32> to vector<8x16xf32>
    %498 = vector.extract_strided_slice %489 {offsets = [0, 0], sizes = [8, 16], strides = [1, 1]} : vector<8x48xf32> to vector<8x16xf32>
    %499 = vector.extract_strided_slice %494 {offsets = [0, 0], sizes = [8, 16], strides = [1, 1]} : vector<8x48xf32> to vector<8x16xf32>
    %500 = arith.addf %498, %499 : vector<8x16xf32>
    %501 = arith.negf %500 : vector<8x16xf32>
    %502 = math.exp %501 : vector<8x16xf32>
    %cst_131 = arith.constant 1.000000e+00 : f32
    %503 = vector.broadcast %cst_131 : f32 to vector<8x16xf32>
    %504 = arith.addf %503, %502 : vector<8x16xf32>
    %505 = arith.divf %503, %504 : vector<8x16xf32>
    %506 = vector.extract_strided_slice %489 {offsets = [0, 16], sizes = [8, 16], strides = [1, 1]} : vector<8x48xf32> to vector<8x16xf32>
    %507 = vector.extract_strided_slice %494 {offsets = [0, 16], sizes = [8, 16], strides = [1, 1]} : vector<8x48xf32> to vector<8x16xf32>
    %508 = arith.addf %506, %507 : vector<8x16xf32>
    %509 = arith.negf %508 : vector<8x16xf32>
    %510 = math.exp %509 : vector<8x16xf32>
    %cst_132 = arith.constant 1.000000e+00 : f32
    %511 = vector.broadcast %cst_132 : f32 to vector<8x16xf32>
    %512 = arith.addf %511, %510 : vector<8x16xf32>
    %513 = arith.divf %511, %512 : vector<8x16xf32>
    %514 = vector.extract_strided_slice %489 {offsets = [0, 32], sizes = [8, 16], strides = [1, 1]} : vector<8x48xf32> to vector<8x16xf32>
    %515 = vector.extract_strided_slice %494 {offsets = [0, 32], sizes = [8, 16], strides = [1, 1]} : vector<8x48xf32> to vector<8x16xf32>
    %516 = arith.mulf %505, %515 : vector<8x16xf32>
    %517 = arith.addf %514, %516 : vector<8x16xf32>
    %518 = math.tanh %517 : vector<8x16xf32>
    %cst_133 = arith.constant 1.000000e+00 : f32
    %519 = vector.broadcast %cst_133 : f32 to vector<8x16xf32>
    %520 = arith.subf %519, %513 : vector<8x16xf32>
    %521 = arith.mulf %520, %518 : vector<8x16xf32>
    %522 = arith.mulf %513, %496 : vector<8x16xf32>
    %523 = arith.addf %521, %522 : vector<8x16xf32>
    %524 = vector.extract_strided_slice %490 {offsets = [0, 0], sizes = [8, 16], strides = [1, 1]} : vector<8x48xf32> to vector<8x16xf32>
    %525 = vector.extract_strided_slice %495 {offsets = [0, 0], sizes = [8, 16], strides = [1, 1]} : vector<8x48xf32> to vector<8x16xf32>
    %526 = arith.addf %524, %525 : vector<8x16xf32>
    %527 = arith.negf %526 : vector<8x16xf32>
    %528 = math.exp %527 : vector<8x16xf32>
    %cst_134 = arith.constant 1.000000e+00 : f32
    %529 = vector.broadcast %cst_134 : f32 to vector<8x16xf32>
    %530 = arith.addf %529, %528 : vector<8x16xf32>
    %531 = arith.divf %529, %530 : vector<8x16xf32>
    %532 = vector.extract_strided_slice %490 {offsets = [0, 16], sizes = [8, 16], strides = [1, 1]} : vector<8x48xf32> to vector<8x16xf32>
    %533 = vector.extract_strided_slice %495 {offsets = [0, 16], sizes = [8, 16], strides = [1, 1]} : vector<8x48xf32> to vector<8x16xf32>
    %534 = arith.addf %532, %533 : vector<8x16xf32>
    %535 = arith.negf %534 : vector<8x16xf32>
    %536 = math.exp %535 : vector<8x16xf32>
    %cst_135 = arith.constant 1.000000e+00 : f32
    %537 = vector.broadcast %cst_135 : f32 to vector<8x16xf32>
    %538 = arith.addf %537, %536 : vector<8x16xf32>
    %539 = arith.divf %537, %538 : vector<8x16xf32>
    %540 = vector.extract_strided_slice %490 {offsets = [0, 32], sizes = [8, 16], strides = [1, 1]} : vector<8x48xf32> to vector<8x16xf32>
    %541 = vector.extract_strided_slice %495 {offsets = [0, 32], sizes = [8, 16], strides = [1, 1]} : vector<8x48xf32> to vector<8x16xf32>
    %542 = arith.mulf %531, %541 : vector<8x16xf32>
    %543 = arith.addf %540, %542 : vector<8x16xf32>
    %544 = math.tanh %543 : vector<8x16xf32>
    %cst_136 = arith.constant 1.000000e+00 : f32
    %545 = vector.broadcast %cst_136 : f32 to vector<8x16xf32>
    %546 = arith.subf %545, %539 : vector<8x16xf32>
    %547 = arith.mulf %546, %544 : vector<8x16xf32>
    %548 = arith.mulf %539, %497 : vector<8x16xf32>
    %549 = arith.addf %547, %548 : vector<8x16xf32>
    %c56_137 = arith.constant 56 : index
    %c0_138 = arith.constant 0 : index
    %550 = vector.load %arg19[%c56_137, %c0_138] : memref<112x16xf32, #tpu.memory_space<vmem>>, vector<8x16xf32>
    tpu.vector_store %arg19[%c56_137, %c0_138], %523 {strides = array<i32>} : memref<112x16xf32, #tpu.memory_space<vmem>>, vector<8x16xf32>,
    %c48_139 = arith.constant 48 : index
    %c0_140 = arith.constant 0 : index
    %551 = vector.load %arg20[%c48_139, %c0_140] : memref<112x16xf32, #tpu.memory_space<vmem>>, vector<8x16xf32>
    tpu.vector_store %arg20[%c48_139, %c0_140], %549 {strides = array<i32>} : memref<112x16xf32, #tpu.memory_space<vmem>>, vector<8x16xf32>,
    %552 = tpu.concatenate %523, %549 in 0 : vector<8x16xf32>, vector<8x16xf32> -> vector<16x16xf32>
    %c64_141 = arith.constant 64 : index
    %c0_142 = arith.constant 0 : index
    %553 = vector.load %arg17[%c64_141, %c0_142] : memref<112x48xf32, #tpu.memory_space<vmem>>, vector<8x48xf32>
    %c40_143 = arith.constant 40 : index
    %c0_144 = arith.constant 0 : index
    %554 = vector.load %arg18[%c40_143, %c0_144] : memref<112x48xf32, #tpu.memory_space<vmem>>, vector<8x48xf32>
    %cst_145 = arith.constant dense<0.000000e+00> : vector<16x96xf32>
    %555 = tpu.matmul %552, %38, %cst_145 {dimension_numbers = #tpu.dot_dimension_numbers<[1], [0], [0], [1], [0, 0, 1, 1], [], []>} : vector<16x16xf32>, vector<16x96xf32>, vector<16x96xf32> -> vector<16x96xf32>
    %556 = vector.broadcast %39 : vector<1x96xf32> to vector<16x96xf32>
    %557 = arith.addf %555, %556 : vector<16x96xf32>
    %558 = vector.extract_strided_slice %557 {offsets = [0, 0], sizes = [8, 48], strides = [1, 1]} : vector<16x96xf32> to vector<8x48xf32>
    %559 = vector.extract_strided_slice %557 {offsets = [8, 48], sizes = [8, 48], strides = [1, 1]} : vector<16x96xf32> to vector<8x48xf32>
    %560 = vector.extract_strided_slice %552 {offsets = [0, 0], sizes = [8, 16], strides = [1, 1]} : vector<16x16xf32> to vector<8x16xf32>
    %561 = vector.extract_strided_slice %552 {offsets = [8, 0], sizes = [8, 16], strides = [1, 1]} : vector<16x16xf32> to vector<8x16xf32>
    %562 = vector.extract_strided_slice %553 {offsets = [0, 0], sizes = [8, 16], strides = [1, 1]} : vector<8x48xf32> to vector<8x16xf32>
    %563 = vector.extract_strided_slice %558 {offsets = [0, 0], sizes = [8, 16], strides = [1, 1]} : vector<8x48xf32> to vector<8x16xf32>
    %564 = arith.addf %562, %563 : vector<8x16xf32>
    %565 = arith.negf %564 : vector<8x16xf32>
    %566 = math.exp %565 : vector<8x16xf32>
    %cst_146 = arith.constant 1.000000e+00 : f32
    %567 = vector.broadcast %cst_146 : f32 to vector<8x16xf32>
    %568 = arith.addf %567, %566 : vector<8x16xf32>
    %569 = arith.divf %567, %568 : vector<8x16xf32>
    %570 = vector.extract_strided_slice %553 {offsets = [0, 16], sizes = [8, 16], strides = [1, 1]} : vector<8x48xf32> to vector<8x16xf32>
    %571 = vector.extract_strided_slice %558 {offsets = [0, 16], sizes = [8, 16], strides = [1, 1]} : vector<8x48xf32> to vector<8x16xf32>
    %572 = arith.addf %570, %571 : vector<8x16xf32>
    %573 = arith.negf %572 : vector<8x16xf32>
    %574 = math.exp %573 : vector<8x16xf32>
    %cst_147 = arith.constant 1.000000e+00 : f32
    %575 = vector.broadcast %cst_147 : f32 to vector<8x16xf32>
    %576 = arith.addf %575, %574 : vector<8x16xf32>
    %577 = arith.divf %575, %576 : vector<8x16xf32>
    %578 = vector.extract_strided_slice %553 {offsets = [0, 32], sizes = [8, 16], strides = [1, 1]} : vector<8x48xf32> to vector<8x16xf32>
    %579 = vector.extract_strided_slice %558 {offsets = [0, 32], sizes = [8, 16], strides = [1, 1]} : vector<8x48xf32> to vector<8x16xf32>
    %580 = arith.mulf %569, %579 : vector<8x16xf32>
    %581 = arith.addf %578, %580 : vector<8x16xf32>
    %582 = math.tanh %581 : vector<8x16xf32>
    %cst_148 = arith.constant 1.000000e+00 : f32
    %583 = vector.broadcast %cst_148 : f32 to vector<8x16xf32>
    %584 = arith.subf %583, %577 : vector<8x16xf32>
    %585 = arith.mulf %584, %582 : vector<8x16xf32>
    %586 = arith.mulf %577, %560 : vector<8x16xf32>
    %587 = arith.addf %585, %586 : vector<8x16xf32>
    %588 = vector.extract_strided_slice %554 {offsets = [0, 0], sizes = [8, 16], strides = [1, 1]} : vector<8x48xf32> to vector<8x16xf32>
    %589 = vector.extract_strided_slice %559 {offsets = [0, 0], sizes = [8, 16], strides = [1, 1]} : vector<8x48xf32> to vector<8x16xf32>
    %590 = arith.addf %588, %589 : vector<8x16xf32>
    %591 = arith.negf %590 : vector<8x16xf32>
    %592 = math.exp %591 : vector<8x16xf32>
    %cst_149 = arith.constant 1.000000e+00 : f32
    %593 = vector.broadcast %cst_149 : f32 to vector<8x16xf32>
    %594 = arith.addf %593, %592 : vector<8x16xf32>
    %595 = arith.divf %593, %594 : vector<8x16xf32>
    %596 = vector.extract_strided_slice %554 {offsets = [0, 16], sizes = [8, 16], strides = [1, 1]} : vector<8x48xf32> to vector<8x16xf32>
    %597 = vector.extract_strided_slice %559 {offsets = [0, 16], sizes = [8, 16], strides = [1, 1]} : vector<8x48xf32> to vector<8x16xf32>
    %598 = arith.addf %596, %597 : vector<8x16xf32>
    %599 = arith.negf %598 : vector<8x16xf32>
    %600 = math.exp %599 : vector<8x16xf32>
    %cst_150 = arith.constant 1.000000e+00 : f32
    %601 = vector.broadcast %cst_150 : f32 to vector<8x16xf32>
    %602 = arith.addf %601, %600 : vector<8x16xf32>
    %603 = arith.divf %601, %602 : vector<8x16xf32>
    %604 = vector.extract_strided_slice %554 {offsets = [0, 32], sizes = [8, 16], strides = [1, 1]} : vector<8x48xf32> to vector<8x16xf32>
    %605 = vector.extract_strided_slice %559 {offsets = [0, 32], sizes = [8, 16], strides = [1, 1]} : vector<8x48xf32> to vector<8x16xf32>
    %606 = arith.mulf %595, %605 : vector<8x16xf32>
    %607 = arith.addf %604, %606 : vector<8x16xf32>
    %608 = math.tanh %607 : vector<8x16xf32>
    %cst_151 = arith.constant 1.000000e+00 : f32
    %609 = vector.broadcast %cst_151 : f32 to vector<8x16xf32>
    %610 = arith.subf %609, %603 : vector<8x16xf32>
    %611 = arith.mulf %610, %608 : vector<8x16xf32>
    %612 = arith.mulf %603, %561 : vector<8x16xf32>
    %613 = arith.addf %611, %612 : vector<8x16xf32>
    %c64_152 = arith.constant 64 : index
    %c0_153 = arith.constant 0 : index
    %614 = vector.load %arg19[%c64_152, %c0_153] : memref<112x16xf32, #tpu.memory_space<vmem>>, vector<8x16xf32>
    tpu.vector_store %arg19[%c64_152, %c0_153], %587 {strides = array<i32>} : memref<112x16xf32, #tpu.memory_space<vmem>>, vector<8x16xf32>,
    %c40_154 = arith.constant 40 : index
    %c0_155 = arith.constant 0 : index
    %615 = vector.load %arg20[%c40_154, %c0_155] : memref<112x16xf32, #tpu.memory_space<vmem>>, vector<8x16xf32>
    tpu.vector_store %arg20[%c40_154, %c0_155], %613 {strides = array<i32>} : memref<112x16xf32, #tpu.memory_space<vmem>>, vector<8x16xf32>,
    %616 = tpu.concatenate %587, %613 in 0 : vector<8x16xf32>, vector<8x16xf32> -> vector<16x16xf32>
    %c72_156 = arith.constant 72 : index
    %c0_157 = arith.constant 0 : index
    %617 = vector.load %arg17[%c72_156, %c0_157] : memref<112x48xf32, #tpu.memory_space<vmem>>, vector<8x48xf32>
    %c32_158 = arith.constant 32 : index
    %c0_159 = arith.constant 0 : index
    %618 = vector.load %arg18[%c32_158, %c0_159] : memref<112x48xf32, #tpu.memory_space<vmem>>, vector<8x48xf32>
    %cst_160 = arith.constant dense<0.000000e+00> : vector<16x96xf32>
    %619 = tpu.matmul %616, %38, %cst_160 {dimension_numbers = #tpu.dot_dimension_numbers<[1], [0], [0], [1], [0, 0, 1, 1], [], []>} : vector<16x16xf32>, vector<16x96xf32>, vector<16x96xf32> -> vector<16x96xf32>
    %620 = vector.broadcast %39 : vector<1x96xf32> to vector<16x96xf32>
    %621 = arith.addf %619, %620 : vector<16x96xf32>
    %622 = vector.extract_strided_slice %621 {offsets = [0, 0], sizes = [8, 48], strides = [1, 1]} : vector<16x96xf32> to vector<8x48xf32>
    %623 = vector.extract_strided_slice %621 {offsets = [8, 48], sizes = [8, 48], strides = [1, 1]} : vector<16x96xf32> to vector<8x48xf32>
    %624 = vector.extract_strided_slice %616 {offsets = [0, 0], sizes = [8, 16], strides = [1, 1]} : vector<16x16xf32> to vector<8x16xf32>
    %625 = vector.extract_strided_slice %616 {offsets = [8, 0], sizes = [8, 16], strides = [1, 1]} : vector<16x16xf32> to vector<8x16xf32>
    %626 = vector.extract_strided_slice %617 {offsets = [0, 0], sizes = [8, 16], strides = [1, 1]} : vector<8x48xf32> to vector<8x16xf32>
    %627 = vector.extract_strided_slice %622 {offsets = [0, 0], sizes = [8, 16], strides = [1, 1]} : vector<8x48xf32> to vector<8x16xf32>
    %628 = arith.addf %626, %627 : vector<8x16xf32>
    %629 = arith.negf %628 : vector<8x16xf32>
    %630 = math.exp %629 : vector<8x16xf32>
    %cst_161 = arith.constant 1.000000e+00 : f32
    %631 = vector.broadcast %cst_161 : f32 to vector<8x16xf32>
    %632 = arith.addf %631, %630 : vector<8x16xf32>
    %633 = arith.divf %631, %632 : vector<8x16xf32>
    %634 = vector.extract_strided_slice %617 {offsets = [0, 16], sizes = [8, 16], strides = [1, 1]} : vector<8x48xf32> to vector<8x16xf32>
    %635 = vector.extract_strided_slice %622 {offsets = [0, 16], sizes = [8, 16], strides = [1, 1]} : vector<8x48xf32> to vector<8x16xf32>
    %636 = arith.addf %634, %635 : vector<8x16xf32>
    %637 = arith.negf %636 : vector<8x16xf32>
    %638 = math.exp %637 : vector<8x16xf32>
    %cst_162 = arith.constant 1.000000e+00 : f32
    %639 = vector.broadcast %cst_162 : f32 to vector<8x16xf32>
    %640 = arith.addf %639, %638 : vector<8x16xf32>
    %641 = arith.divf %639, %640 : vector<8x16xf32>
    %642 = vector.extract_strided_slice %617 {offsets = [0, 32], sizes = [8, 16], strides = [1, 1]} : vector<8x48xf32> to vector<8x16xf32>
    %643 = vector.extract_strided_slice %622 {offsets = [0, 32], sizes = [8, 16], strides = [1, 1]} : vector<8x48xf32> to vector<8x16xf32>
    %644 = arith.mulf %633, %643 : vector<8x16xf32>
    %645 = arith.addf %642, %644 : vector<8x16xf32>
    %646 = math.tanh %645 : vector<8x16xf32>
    %cst_163 = arith.constant 1.000000e+00 : f32
    %647 = vector.broadcast %cst_163 : f32 to vector<8x16xf32>
    %648 = arith.subf %647, %641 : vector<8x16xf32>
    %649 = arith.mulf %648, %646 : vector<8x16xf32>
    %650 = arith.mulf %641, %624 : vector<8x16xf32>
    %651 = arith.addf %649, %650 : vector<8x16xf32>
    %652 = vector.extract_strided_slice %618 {offsets = [0, 0], sizes = [8, 16], strides = [1, 1]} : vector<8x48xf32> to vector<8x16xf32>
    %653 = vector.extract_strided_slice %623 {offsets = [0, 0], sizes = [8, 16], strides = [1, 1]} : vector<8x48xf32> to vector<8x16xf32>
    %654 = arith.addf %652, %653 : vector<8x16xf32>
    %655 = arith.negf %654 : vector<8x16xf32>
    %656 = math.exp %655 : vector<8x16xf32>
    %cst_164 = arith.constant 1.000000e+00 : f32
    %657 = vector.broadcast %cst_164 : f32 to vector<8x16xf32>
    %658 = arith.addf %657, %656 : vector<8x16xf32>
    %659 = arith.divf %657, %658 : vector<8x16xf32>
    %660 = vector.extract_strided_slice %618 {offsets = [0, 16], sizes = [8, 16], strides = [1, 1]} : vector<8x48xf32> to vector<8x16xf32>
    %661 = vector.extract_strided_slice %623 {offsets = [0, 16], sizes = [8, 16], strides = [1, 1]} : vector<8x48xf32> to vector<8x16xf32>
    %662 = arith.addf %660, %661 : vector<8x16xf32>
    %663 = arith.negf %662 : vector<8x16xf32>
    %664 = math.exp %663 : vector<8x16xf32>
    %cst_165 = arith.constant 1.000000e+00 : f32
    %665 = vector.broadcast %cst_165 : f32 to vector<8x16xf32>
    %666 = arith.addf %665, %664 : vector<8x16xf32>
    %667 = arith.divf %665, %666 : vector<8x16xf32>
    %668 = vector.extract_strided_slice %618 {offsets = [0, 32], sizes = [8, 16], strides = [1, 1]} : vector<8x48xf32> to vector<8x16xf32>
    %669 = vector.extract_strided_slice %623 {offsets = [0, 32], sizes = [8, 16], strides = [1, 1]} : vector<8x48xf32> to vector<8x16xf32>
    %670 = arith.mulf %659, %669 : vector<8x16xf32>
    %671 = arith.addf %668, %670 : vector<8x16xf32>
    %672 = math.tanh %671 : vector<8x16xf32>
    %cst_166 = arith.constant 1.000000e+00 : f32
    %673 = vector.broadcast %cst_166 : f32 to vector<8x16xf32>
    %674 = arith.subf %673, %667 : vector<8x16xf32>
    %675 = arith.mulf %674, %672 : vector<8x16xf32>
    %676 = arith.mulf %667, %625 : vector<8x16xf32>
    %677 = arith.addf %675, %676 : vector<8x16xf32>
    %c72_167 = arith.constant 72 : index
    %c0_168 = arith.constant 0 : index
    %678 = vector.load %arg19[%c72_167, %c0_168] : memref<112x16xf32, #tpu.memory_space<vmem>>, vector<8x16xf32>
    tpu.vector_store %arg19[%c72_167, %c0_168], %651 {strides = array<i32>} : memref<112x16xf32, #tpu.memory_space<vmem>>, vector<8x16xf32>,
    %c32_169 = arith.constant 32 : index
    %c0_170 = arith.constant 0 : index
    %679 = vector.load %arg20[%c32_169, %c0_170] : memref<112x16xf32, #tpu.memory_space<vmem>>, vector<8x16xf32>
    tpu.vector_store %arg20[%c32_169, %c0_170], %677 {strides = array<i32>} : memref<112x16xf32, #tpu.memory_space<vmem>>, vector<8x16xf32>,
    %680 = tpu.concatenate %651, %677 in 0 : vector<8x16xf32>, vector<8x16xf32> -> vector<16x16xf32>
    %c80_171 = arith.constant 80 : index
    %c0_172 = arith.constant 0 : index
    %681 = vector.load %arg17[%c80_171, %c0_172] : memref<112x48xf32, #tpu.memory_space<vmem>>, vector<8x48xf32>
    %c24_173 = arith.constant 24 : index
    %c0_174 = arith.constant 0 : index
    %682 = vector.load %arg18[%c24_173, %c0_174] : memref<112x48xf32, #tpu.memory_space<vmem>>, vector<8x48xf32>
    %cst_175 = arith.constant dense<0.000000e+00> : vector<16x96xf32>
    %683 = tpu.matmul %680, %38, %cst_175 {dimension_numbers = #tpu.dot_dimension_numbers<[1], [0], [0], [1], [0, 0, 1, 1], [], []>} : vector<16x16xf32>, vector<16x96xf32>, vector<16x96xf32> -> vector<16x96xf32>
    %684 = vector.broadcast %39 : vector<1x96xf32> to vector<16x96xf32>
    %685 = arith.addf %683, %684 : vector<16x96xf32>
    %686 = vector.extract_strided_slice %685 {offsets = [0, 0], sizes = [8, 48], strides = [1, 1]} : vector<16x96xf32> to vector<8x48xf32>
    %687 = vector.extract_strided_slice %685 {offsets = [8, 48], sizes = [8, 48], strides = [1, 1]} : vector<16x96xf32> to vector<8x48xf32>
    %688 = vector.extract_strided_slice %680 {offsets = [0, 0], sizes = [8, 16], strides = [1, 1]} : vector<16x16xf32> to vector<8x16xf32>
    %689 = vector.extract_strided_slice %680 {offsets = [8, 0], sizes = [8, 16], strides = [1, 1]} : vector<16x16xf32> to vector<8x16xf32>
    %690 = vector.extract_strided_slice %681 {offsets = [0, 0], sizes = [8, 16], strides = [1, 1]} : vector<8x48xf32> to vector<8x16xf32>
    %691 = vector.extract_strided_slice %686 {offsets = [0, 0], sizes = [8, 16], strides = [1, 1]} : vector<8x48xf32> to vector<8x16xf32>
    %692 = arith.addf %690, %691 : vector<8x16xf32>
    %693 = arith.negf %692 : vector<8x16xf32>
    %694 = math.exp %693 : vector<8x16xf32>
    %cst_176 = arith.constant 1.000000e+00 : f32
    %695 = vector.broadcast %cst_176 : f32 to vector<8x16xf32>
    %696 = arith.addf %695, %694 : vector<8x16xf32>
    %697 = arith.divf %695, %696 : vector<8x16xf32>
    %698 = vector.extract_strided_slice %681 {offsets = [0, 16], sizes = [8, 16], strides = [1, 1]} : vector<8x48xf32> to vector<8x16xf32>
    %699 = vector.extract_strided_slice %686 {offsets = [0, 16], sizes = [8, 16], strides = [1, 1]} : vector<8x48xf32> to vector<8x16xf32>
    %700 = arith.addf %698, %699 : vector<8x16xf32>
    %701 = arith.negf %700 : vector<8x16xf32>
    %702 = math.exp %701 : vector<8x16xf32>
    %cst_177 = arith.constant 1.000000e+00 : f32
    %703 = vector.broadcast %cst_177 : f32 to vector<8x16xf32>
    %704 = arith.addf %703, %702 : vector<8x16xf32>
    %705 = arith.divf %703, %704 : vector<8x16xf32>
    %706 = vector.extract_strided_slice %681 {offsets = [0, 32], sizes = [8, 16], strides = [1, 1]} : vector<8x48xf32> to vector<8x16xf32>
    %707 = vector.extract_strided_slice %686 {offsets = [0, 32], sizes = [8, 16], strides = [1, 1]} : vector<8x48xf32> to vector<8x16xf32>
    %708 = arith.mulf %697, %707 : vector<8x16xf32>
    %709 = arith.addf %706, %708 : vector<8x16xf32>
    %710 = math.tanh %709 : vector<8x16xf32>
    %cst_178 = arith.constant 1.000000e+00 : f32
    %711 = vector.broadcast %cst_178 : f32 to vector<8x16xf32>
    %712 = arith.subf %711, %705 : vector<8x16xf32>
    %713 = arith.mulf %712, %710 : vector<8x16xf32>
    %714 = arith.mulf %705, %688 : vector<8x16xf32>
    %715 = arith.addf %713, %714 : vector<8x16xf32>
    %716 = vector.extract_strided_slice %682 {offsets = [0, 0], sizes = [8, 16], strides = [1, 1]} : vector<8x48xf32> to vector<8x16xf32>
    %717 = vector.extract_strided_slice %687 {offsets = [0, 0], sizes = [8, 16], strides = [1, 1]} : vector<8x48xf32> to vector<8x16xf32>
    %718 = arith.addf %716, %717 : vector<8x16xf32>
    %719 = arith.negf %718 : vector<8x16xf32>
    %720 = math.exp %719 : vector<8x16xf32>
    %cst_179 = arith.constant 1.000000e+00 : f32
    %721 = vector.broadcast %cst_179 : f32 to vector<8x16xf32>
    %722 = arith.addf %721, %720 : vector<8x16xf32>
    %723 = arith.divf %721, %722 : vector<8x16xf32>
    %724 = vector.extract_strided_slice %682 {offsets = [0, 16], sizes = [8, 16], strides = [1, 1]} : vector<8x48xf32> to vector<8x16xf32>
    %725 = vector.extract_strided_slice %687 {offsets = [0, 16], sizes = [8, 16], strides = [1, 1]} : vector<8x48xf32> to vector<8x16xf32>
    %726 = arith.addf %724, %725 : vector<8x16xf32>
    %727 = arith.negf %726 : vector<8x16xf32>
    %728 = math.exp %727 : vector<8x16xf32>
    %cst_180 = arith.constant 1.000000e+00 : f32
    %729 = vector.broadcast %cst_180 : f32 to vector<8x16xf32>
    %730 = arith.addf %729, %728 : vector<8x16xf32>
    %731 = arith.divf %729, %730 : vector<8x16xf32>
    %732 = vector.extract_strided_slice %682 {offsets = [0, 32], sizes = [8, 16], strides = [1, 1]} : vector<8x48xf32> to vector<8x16xf32>
    %733 = vector.extract_strided_slice %687 {offsets = [0, 32], sizes = [8, 16], strides = [1, 1]} : vector<8x48xf32> to vector<8x16xf32>
    %734 = arith.mulf %723, %733 : vector<8x16xf32>
    %735 = arith.addf %732, %734 : vector<8x16xf32>
    %736 = math.tanh %735 : vector<8x16xf32>
    %cst_181 = arith.constant 1.000000e+00 : f32
    %737 = vector.broadcast %cst_181 : f32 to vector<8x16xf32>
    %738 = arith.subf %737, %731 : vector<8x16xf32>
    %739 = arith.mulf %738, %736 : vector<8x16xf32>
    %740 = arith.mulf %731, %689 : vector<8x16xf32>
    %741 = arith.addf %739, %740 : vector<8x16xf32>
    %c80_182 = arith.constant 80 : index
    %c0_183 = arith.constant 0 : index
    %742 = vector.load %arg19[%c80_182, %c0_183] : memref<112x16xf32, #tpu.memory_space<vmem>>, vector<8x16xf32>
    tpu.vector_store %arg19[%c80_182, %c0_183], %715 {strides = array<i32>} : memref<112x16xf32, #tpu.memory_space<vmem>>, vector<8x16xf32>,
    %c24_184 = arith.constant 24 : index
    %c0_185 = arith.constant 0 : index
    %743 = vector.load %arg20[%c24_184, %c0_185] : memref<112x16xf32, #tpu.memory_space<vmem>>, vector<8x16xf32>
    tpu.vector_store %arg20[%c24_184, %c0_185], %741 {strides = array<i32>} : memref<112x16xf32, #tpu.memory_space<vmem>>, vector<8x16xf32>,
    %744 = tpu.concatenate %715, %741 in 0 : vector<8x16xf32>, vector<8x16xf32> -> vector<16x16xf32>
    %c88_186 = arith.constant 88 : index
    %c0_187 = arith.constant 0 : index
    %745 = vector.load %arg17[%c88_186, %c0_187] : memref<112x48xf32, #tpu.memory_space<vmem>>, vector<8x48xf32>
    %c16_188 = arith.constant 16 : index
    %c0_189 = arith.constant 0 : index
    %746 = vector.load %arg18[%c16_188, %c0_189] : memref<112x48xf32, #tpu.memory_space<vmem>>, vector<8x48xf32>
    %cst_190 = arith.constant dense<0.000000e+00> : vector<16x96xf32>
    %747 = tpu.matmul %744, %38, %cst_190 {dimension_numbers = #tpu.dot_dimension_numbers<[1], [0], [0], [1], [0, 0, 1, 1], [], []>} : vector<16x16xf32>, vector<16x96xf32>, vector<16x96xf32> -> vector<16x96xf32>
    %748 = vector.broadcast %39 : vector<1x96xf32> to vector<16x96xf32>
    %749 = arith.addf %747, %748 : vector<16x96xf32>
    %750 = vector.extract_strided_slice %749 {offsets = [0, 0], sizes = [8, 48], strides = [1, 1]} : vector<16x96xf32> to vector<8x48xf32>
    %751 = vector.extract_strided_slice %749 {offsets = [8, 48], sizes = [8, 48], strides = [1, 1]} : vector<16x96xf32> to vector<8x48xf32>
    %752 = vector.extract_strided_slice %744 {offsets = [0, 0], sizes = [8, 16], strides = [1, 1]} : vector<16x16xf32> to vector<8x16xf32>
    %753 = vector.extract_strided_slice %744 {offsets = [8, 0], sizes = [8, 16], strides = [1, 1]} : vector<16x16xf32> to vector<8x16xf32>
    %754 = vector.extract_strided_slice %745 {offsets = [0, 0], sizes = [8, 16], strides = [1, 1]} : vector<8x48xf32> to vector<8x16xf32>
    %755 = vector.extract_strided_slice %750 {offsets = [0, 0], sizes = [8, 16], strides = [1, 1]} : vector<8x48xf32> to vector<8x16xf32>
    %756 = arith.addf %754, %755 : vector<8x16xf32>
    %757 = arith.negf %756 : vector<8x16xf32>
    %758 = math.exp %757 : vector<8x16xf32>
    %cst_191 = arith.constant 1.000000e+00 : f32
    %759 = vector.broadcast %cst_191 : f32 to vector<8x16xf32>
    %760 = arith.addf %759, %758 : vector<8x16xf32>
    %761 = arith.divf %759, %760 : vector<8x16xf32>
    %762 = vector.extract_strided_slice %745 {offsets = [0, 16], sizes = [8, 16], strides = [1, 1]} : vector<8x48xf32> to vector<8x16xf32>
    %763 = vector.extract_strided_slice %750 {offsets = [0, 16], sizes = [8, 16], strides = [1, 1]} : vector<8x48xf32> to vector<8x16xf32>
    %764 = arith.addf %762, %763 : vector<8x16xf32>
    %765 = arith.negf %764 : vector<8x16xf32>
    %766 = math.exp %765 : vector<8x16xf32>
    %cst_192 = arith.constant 1.000000e+00 : f32
    %767 = vector.broadcast %cst_192 : f32 to vector<8x16xf32>
    %768 = arith.addf %767, %766 : vector<8x16xf32>
    %769 = arith.divf %767, %768 : vector<8x16xf32>
    %770 = vector.extract_strided_slice %745 {offsets = [0, 32], sizes = [8, 16], strides = [1, 1]} : vector<8x48xf32> to vector<8x16xf32>
    %771 = vector.extract_strided_slice %750 {offsets = [0, 32], sizes = [8, 16], strides = [1, 1]} : vector<8x48xf32> to vector<8x16xf32>
    %772 = arith.mulf %761, %771 : vector<8x16xf32>
    %773 = arith.addf %770, %772 : vector<8x16xf32>
    %774 = math.tanh %773 : vector<8x16xf32>
    %cst_193 = arith.constant 1.000000e+00 : f32
    %775 = vector.broadcast %cst_193 : f32 to vector<8x16xf32>
    %776 = arith.subf %775, %769 : vector<8x16xf32>
    %777 = arith.mulf %776, %774 : vector<8x16xf32>
    %778 = arith.mulf %769, %752 : vector<8x16xf32>
    %779 = arith.addf %777, %778 : vector<8x16xf32>
    %780 = vector.extract_strided_slice %746 {offsets = [0, 0], sizes = [8, 16], strides = [1, 1]} : vector<8x48xf32> to vector<8x16xf32>
    %781 = vector.extract_strided_slice %751 {offsets = [0, 0], sizes = [8, 16], strides = [1, 1]} : vector<8x48xf32> to vector<8x16xf32>
    %782 = arith.addf %780, %781 : vector<8x16xf32>
    %783 = arith.negf %782 : vector<8x16xf32>
    %784 = math.exp %783 : vector<8x16xf32>
    %cst_194 = arith.constant 1.000000e+00 : f32
    %785 = vector.broadcast %cst_194 : f32 to vector<8x16xf32>
    %786 = arith.addf %785, %784 : vector<8x16xf32>
    %787 = arith.divf %785, %786 : vector<8x16xf32>
    %788 = vector.extract_strided_slice %746 {offsets = [0, 16], sizes = [8, 16], strides = [1, 1]} : vector<8x48xf32> to vector<8x16xf32>
    %789 = vector.extract_strided_slice %751 {offsets = [0, 16], sizes = [8, 16], strides = [1, 1]} : vector<8x48xf32> to vector<8x16xf32>
    %790 = arith.addf %788, %789 : vector<8x16xf32>
    %791 = arith.negf %790 : vector<8x16xf32>
    %792 = math.exp %791 : vector<8x16xf32>
    %cst_195 = arith.constant 1.000000e+00 : f32
    %793 = vector.broadcast %cst_195 : f32 to vector<8x16xf32>
    %794 = arith.addf %793, %792 : vector<8x16xf32>
    %795 = arith.divf %793, %794 : vector<8x16xf32>
    %796 = vector.extract_strided_slice %746 {offsets = [0, 32], sizes = [8, 16], strides = [1, 1]} : vector<8x48xf32> to vector<8x16xf32>
    %797 = vector.extract_strided_slice %751 {offsets = [0, 32], sizes = [8, 16], strides = [1, 1]} : vector<8x48xf32> to vector<8x16xf32>
    %798 = arith.mulf %787, %797 : vector<8x16xf32>
    %799 = arith.addf %796, %798 : vector<8x16xf32>
    %800 = math.tanh %799 : vector<8x16xf32>
    %cst_196 = arith.constant 1.000000e+00 : f32
    %801 = vector.broadcast %cst_196 : f32 to vector<8x16xf32>
    %802 = arith.subf %801, %795 : vector<8x16xf32>
    %803 = arith.mulf %802, %800 : vector<8x16xf32>
    %804 = arith.mulf %795, %753 : vector<8x16xf32>
    %805 = arith.addf %803, %804 : vector<8x16xf32>
    %c88_197 = arith.constant 88 : index
    %c0_198 = arith.constant 0 : index
    %806 = vector.load %arg19[%c88_197, %c0_198] : memref<112x16xf32, #tpu.memory_space<vmem>>, vector<8x16xf32>
    tpu.vector_store %arg19[%c88_197, %c0_198], %779 {strides = array<i32>} : memref<112x16xf32, #tpu.memory_space<vmem>>, vector<8x16xf32>,
    %c16_199 = arith.constant 16 : index
    %c0_200 = arith.constant 0 : index
    %807 = vector.load %arg20[%c16_199, %c0_200] : memref<112x16xf32, #tpu.memory_space<vmem>>, vector<8x16xf32>
    tpu.vector_store %arg20[%c16_199, %c0_200], %805 {strides = array<i32>} : memref<112x16xf32, #tpu.memory_space<vmem>>, vector<8x16xf32>,
    %808 = tpu.concatenate %779, %805 in 0 : vector<8x16xf32>, vector<8x16xf32> -> vector<16x16xf32>
    %c96_201 = arith.constant 96 : index
    %c0_202 = arith.constant 0 : index
    %809 = vector.load %arg17[%c96_201, %c0_202] : memref<112x48xf32, #tpu.memory_space<vmem>>, vector<8x48xf32>
    %c8_203 = arith.constant 8 : index
    %c0_204 = arith.constant 0 : index
    %810 = vector.load %arg18[%c8_203, %c0_204] : memref<112x48xf32, #tpu.memory_space<vmem>>, vector<8x48xf32>
    %cst_205 = arith.constant dense<0.000000e+00> : vector<16x96xf32>
    %811 = tpu.matmul %808, %38, %cst_205 {dimension_numbers = #tpu.dot_dimension_numbers<[1], [0], [0], [1], [0, 0, 1, 1], [], []>} : vector<16x16xf32>, vector<16x96xf32>, vector<16x96xf32> -> vector<16x96xf32>
    %812 = vector.broadcast %39 : vector<1x96xf32> to vector<16x96xf32>
    %813 = arith.addf %811, %812 : vector<16x96xf32>
    %814 = vector.extract_strided_slice %813 {offsets = [0, 0], sizes = [8, 48], strides = [1, 1]} : vector<16x96xf32> to vector<8x48xf32>
    %815 = vector.extract_strided_slice %813 {offsets = [8, 48], sizes = [8, 48], strides = [1, 1]} : vector<16x96xf32> to vector<8x48xf32>
    %816 = vector.extract_strided_slice %808 {offsets = [0, 0], sizes = [8, 16], strides = [1, 1]} : vector<16x16xf32> to vector<8x16xf32>
    %817 = vector.extract_strided_slice %808 {offsets = [8, 0], sizes = [8, 16], strides = [1, 1]} : vector<16x16xf32> to vector<8x16xf32>
    %818 = vector.extract_strided_slice %809 {offsets = [0, 0], sizes = [8, 16], strides = [1, 1]} : vector<8x48xf32> to vector<8x16xf32>
    %819 = vector.extract_strided_slice %814 {offsets = [0, 0], sizes = [8, 16], strides = [1, 1]} : vector<8x48xf32> to vector<8x16xf32>
    %820 = arith.addf %818, %819 : vector<8x16xf32>
    %821 = arith.negf %820 : vector<8x16xf32>
    %822 = math.exp %821 : vector<8x16xf32>
    %cst_206 = arith.constant 1.000000e+00 : f32
    %823 = vector.broadcast %cst_206 : f32 to vector<8x16xf32>
    %824 = arith.addf %823, %822 : vector<8x16xf32>
    %825 = arith.divf %823, %824 : vector<8x16xf32>
    %826 = vector.extract_strided_slice %809 {offsets = [0, 16], sizes = [8, 16], strides = [1, 1]} : vector<8x48xf32> to vector<8x16xf32>
    %827 = vector.extract_strided_slice %814 {offsets = [0, 16], sizes = [8, 16], strides = [1, 1]} : vector<8x48xf32> to vector<8x16xf32>
    %828 = arith.addf %826, %827 : vector<8x16xf32>
    %829 = arith.negf %828 : vector<8x16xf32>
    %830 = math.exp %829 : vector<8x16xf32>
    %cst_207 = arith.constant 1.000000e+00 : f32
    %831 = vector.broadcast %cst_207 : f32 to vector<8x16xf32>
    %832 = arith.addf %831, %830 : vector<8x16xf32>
    %833 = arith.divf %831, %832 : vector<8x16xf32>
    %834 = vector.extract_strided_slice %809 {offsets = [0, 32], sizes = [8, 16], strides = [1, 1]} : vector<8x48xf32> to vector<8x16xf32>
    %835 = vector.extract_strided_slice %814 {offsets = [0, 32], sizes = [8, 16], strides = [1, 1]} : vector<8x48xf32> to vector<8x16xf32>
    %836 = arith.mulf %825, %835 : vector<8x16xf32>
    %837 = arith.addf %834, %836 : vector<8x16xf32>
    %838 = math.tanh %837 : vector<8x16xf32>
    %cst_208 = arith.constant 1.000000e+00 : f32
    %839 = vector.broadcast %cst_208 : f32 to vector<8x16xf32>
    %840 = arith.subf %839, %833 : vector<8x16xf32>
    %841 = arith.mulf %840, %838 : vector<8x16xf32>
    %842 = arith.mulf %833, %816 : vector<8x16xf32>
    %843 = arith.addf %841, %842 : vector<8x16xf32>
    %844 = vector.extract_strided_slice %810 {offsets = [0, 0], sizes = [8, 16], strides = [1, 1]} : vector<8x48xf32> to vector<8x16xf32>
    %845 = vector.extract_strided_slice %815 {offsets = [0, 0], sizes = [8, 16], strides = [1, 1]} : vector<8x48xf32> to vector<8x16xf32>
    %846 = arith.addf %844, %845 : vector<8x16xf32>
    %847 = arith.negf %846 : vector<8x16xf32>
    %848 = math.exp %847 : vector<8x16xf32>
    %cst_209 = arith.constant 1.000000e+00 : f32
    %849 = vector.broadcast %cst_209 : f32 to vector<8x16xf32>
    %850 = arith.addf %849, %848 : vector<8x16xf32>
    %851 = arith.divf %849, %850 : vector<8x16xf32>
    %852 = vector.extract_strided_slice %810 {offsets = [0, 16], sizes = [8, 16], strides = [1, 1]} : vector<8x48xf32> to vector<8x16xf32>
    %853 = vector.extract_strided_slice %815 {offsets = [0, 16], sizes = [8, 16], strides = [1, 1]} : vector<8x48xf32> to vector<8x16xf32>
    %854 = arith.addf %852, %853 : vector<8x16xf32>
    %855 = arith.negf %854 : vector<8x16xf32>
    %856 = math.exp %855 : vector<8x16xf32>
    %cst_210 = arith.constant 1.000000e+00 : f32
    %857 = vector.broadcast %cst_210 : f32 to vector<8x16xf32>
    %858 = arith.addf %857, %856 : vector<8x16xf32>
    %859 = arith.divf %857, %858 : vector<8x16xf32>
    %860 = vector.extract_strided_slice %810 {offsets = [0, 32], sizes = [8, 16], strides = [1, 1]} : vector<8x48xf32> to vector<8x16xf32>
    %861 = vector.extract_strided_slice %815 {offsets = [0, 32], sizes = [8, 16], strides = [1, 1]} : vector<8x48xf32> to vector<8x16xf32>
    %862 = arith.mulf %851, %861 : vector<8x16xf32>
    %863 = arith.addf %860, %862 : vector<8x16xf32>
    %864 = math.tanh %863 : vector<8x16xf32>
    %cst_211 = arith.constant 1.000000e+00 : f32
    %865 = vector.broadcast %cst_211 : f32 to vector<8x16xf32>
    %866 = arith.subf %865, %859 : vector<8x16xf32>
    %867 = arith.mulf %866, %864 : vector<8x16xf32>
    %868 = arith.mulf %859, %817 : vector<8x16xf32>
    %869 = arith.addf %867, %868 : vector<8x16xf32>
    %c96_212 = arith.constant 96 : index
    %c0_213 = arith.constant 0 : index
    %870 = vector.load %arg19[%c96_212, %c0_213] : memref<112x16xf32, #tpu.memory_space<vmem>>, vector<8x16xf32>
    tpu.vector_store %arg19[%c96_212, %c0_213], %843 {strides = array<i32>} : memref<112x16xf32, #tpu.memory_space<vmem>>, vector<8x16xf32>,
    %c8_214 = arith.constant 8 : index
    %c0_215 = arith.constant 0 : index
    %871 = vector.load %arg20[%c8_214, %c0_215] : memref<112x16xf32, #tpu.memory_space<vmem>>, vector<8x16xf32>
    tpu.vector_store %arg20[%c8_214, %c0_215], %869 {strides = array<i32>} : memref<112x16xf32, #tpu.memory_space<vmem>>, vector<8x16xf32>,
    %872 = tpu.concatenate %843, %869 in 0 : vector<8x16xf32>, vector<8x16xf32> -> vector<16x16xf32>
    %c104_216 = arith.constant 104 : index
    %c0_217 = arith.constant 0 : index
    %873 = vector.load %arg17[%c104_216, %c0_217] : memref<112x48xf32, #tpu.memory_space<vmem>>, vector<8x48xf32>
    %c0_218 = arith.constant 0 : index
    %c0_219 = arith.constant 0 : index
    %874 = vector.load %arg18[%c0_218, %c0_219] : memref<112x48xf32, #tpu.memory_space<vmem>>, vector<8x48xf32>
    %cst_220 = arith.constant dense<0.000000e+00> : vector<16x96xf32>
    %875 = tpu.matmul %872, %38, %cst_220 {dimension_numbers = #tpu.dot_dimension_numbers<[1], [0], [0], [1], [0, 0, 1, 1], [], []>} : vector<16x16xf32>, vector<16x96xf32>, vector<16x96xf32> -> vector<16x96xf32>
    %876 = vector.broadcast %39 : vector<1x96xf32> to vector<16x96xf32>
    %877 = arith.addf %875, %876 : vector<16x96xf32>
    %878 = vector.extract_strided_slice %877 {offsets = [0, 0], sizes = [8, 48], strides = [1, 1]} : vector<16x96xf32> to vector<8x48xf32>
    %879 = vector.extract_strided_slice %877 {offsets = [8, 48], sizes = [8, 48], strides = [1, 1]} : vector<16x96xf32> to vector<8x48xf32>
    %880 = vector.extract_strided_slice %872 {offsets = [0, 0], sizes = [8, 16], strides = [1, 1]} : vector<16x16xf32> to vector<8x16xf32>
    %881 = vector.extract_strided_slice %872 {offsets = [8, 0], sizes = [8, 16], strides = [1, 1]} : vector<16x16xf32> to vector<8x16xf32>
    %882 = vector.extract_strided_slice %873 {offsets = [0, 0], sizes = [8, 16], strides = [1, 1]} : vector<8x48xf32> to vector<8x16xf32>
    %883 = vector.extract_strided_slice %878 {offsets = [0, 0], sizes = [8, 16], strides = [1, 1]} : vector<8x48xf32> to vector<8x16xf32>
    %884 = arith.addf %882, %883 : vector<8x16xf32>
    %885 = arith.negf %884 : vector<8x16xf32>
    %886 = math.exp %885 : vector<8x16xf32>
    %cst_221 = arith.constant 1.000000e+00 : f32
    %887 = vector.broadcast %cst_221 : f32 to vector<8x16xf32>
    %888 = arith.addf %887, %886 : vector<8x16xf32>
    %889 = arith.divf %887, %888 : vector<8x16xf32>
    %890 = vector.extract_strided_slice %873 {offsets = [0, 16], sizes = [8, 16], strides = [1, 1]} : vector<8x48xf32> to vector<8x16xf32>
    %891 = vector.extract_strided_slice %878 {offsets = [0, 16], sizes = [8, 16], strides = [1, 1]} : vector<8x48xf32> to vector<8x16xf32>
    %892 = arith.addf %890, %891 : vector<8x16xf32>
    %893 = arith.negf %892 : vector<8x16xf32>
    %894 = math.exp %893 : vector<8x16xf32>
    %cst_222 = arith.constant 1.000000e+00 : f32
    %895 = vector.broadcast %cst_222 : f32 to vector<8x16xf32>
    %896 = arith.addf %895, %894 : vector<8x16xf32>
    %897 = arith.divf %895, %896 : vector<8x16xf32>
    %898 = vector.extract_strided_slice %873 {offsets = [0, 32], sizes = [8, 16], strides = [1, 1]} : vector<8x48xf32> to vector<8x16xf32>
    %899 = vector.extract_strided_slice %878 {offsets = [0, 32], sizes = [8, 16], strides = [1, 1]} : vector<8x48xf32> to vector<8x16xf32>
    %900 = arith.mulf %889, %899 : vector<8x16xf32>
    %901 = arith.addf %898, %900 : vector<8x16xf32>
    %902 = math.tanh %901 : vector<8x16xf32>
    %cst_223 = arith.constant 1.000000e+00 : f32
    %903 = vector.broadcast %cst_223 : f32 to vector<8x16xf32>
    %904 = arith.subf %903, %897 : vector<8x16xf32>
    %905 = arith.mulf %904, %902 : vector<8x16xf32>
    %906 = arith.mulf %897, %880 : vector<8x16xf32>
    %907 = arith.addf %905, %906 : vector<8x16xf32>
    %908 = vector.extract_strided_slice %874 {offsets = [0, 0], sizes = [8, 16], strides = [1, 1]} : vector<8x48xf32> to vector<8x16xf32>
    %909 = vector.extract_strided_slice %879 {offsets = [0, 0], sizes = [8, 16], strides = [1, 1]} : vector<8x48xf32> to vector<8x16xf32>
    %910 = arith.addf %908, %909 : vector<8x16xf32>
    %911 = arith.negf %910 : vector<8x16xf32>
    %912 = math.exp %911 : vector<8x16xf32>
    %cst_224 = arith.constant 1.000000e+00 : f32
    %913 = vector.broadcast %cst_224 : f32 to vector<8x16xf32>
    %914 = arith.addf %913, %912 : vector<8x16xf32>
    %915 = arith.divf %913, %914 : vector<8x16xf32>
    %916 = vector.extract_strided_slice %874 {offsets = [0, 16], sizes = [8, 16], strides = [1, 1]} : vector<8x48xf32> to vector<8x16xf32>
    %917 = vector.extract_strided_slice %879 {offsets = [0, 16], sizes = [8, 16], strides = [1, 1]} : vector<8x48xf32> to vector<8x16xf32>
    %918 = arith.addf %916, %917 : vector<8x16xf32>
    %919 = arith.negf %918 : vector<8x16xf32>
    %920 = math.exp %919 : vector<8x16xf32>
    %cst_225 = arith.constant 1.000000e+00 : f32
    %921 = vector.broadcast %cst_225 : f32 to vector<8x16xf32>
    %922 = arith.addf %921, %920 : vector<8x16xf32>
    %923 = arith.divf %921, %922 : vector<8x16xf32>
    %924 = vector.extract_strided_slice %874 {offsets = [0, 32], sizes = [8, 16], strides = [1, 1]} : vector<8x48xf32> to vector<8x16xf32>
    %925 = vector.extract_strided_slice %879 {offsets = [0, 32], sizes = [8, 16], strides = [1, 1]} : vector<8x48xf32> to vector<8x16xf32>
    %926 = arith.mulf %915, %925 : vector<8x16xf32>
    %927 = arith.addf %924, %926 : vector<8x16xf32>
    %928 = math.tanh %927 : vector<8x16xf32>
    %cst_226 = arith.constant 1.000000e+00 : f32
    %929 = vector.broadcast %cst_226 : f32 to vector<8x16xf32>
    %930 = arith.subf %929, %923 : vector<8x16xf32>
    %931 = arith.mulf %930, %928 : vector<8x16xf32>
    %932 = arith.mulf %923, %881 : vector<8x16xf32>
    %933 = arith.addf %931, %932 : vector<8x16xf32>
    %c104_227 = arith.constant 104 : index
    %c0_228 = arith.constant 0 : index
    %934 = vector.load %arg19[%c104_227, %c0_228] : memref<112x16xf32, #tpu.memory_space<vmem>>, vector<8x16xf32>
    tpu.vector_store %arg19[%c104_227, %c0_228], %907 {strides = array<i32>} : memref<112x16xf32, #tpu.memory_space<vmem>>, vector<8x16xf32>,
    %c0_229 = arith.constant 0 : index
    %c0_230 = arith.constant 0 : index
    %935 = vector.load %arg20[%c0_229, %c0_230] : memref<112x16xf32, #tpu.memory_space<vmem>>, vector<8x16xf32>
    tpu.vector_store %arg20[%c0_229, %c0_230], %933 {strides = array<i32>} : memref<112x16xf32, #tpu.memory_space<vmem>>, vector<8x16xf32>,
    %c0_231 = arith.constant 0 : index
    %c0_232 = arith.constant 0 : index
    %936 = vector.load %arg19[%c0_231, %c0_232] : memref<112x16xf32, #tpu.memory_space<vmem>>, vector<112x16xf32>
    %937 = math.tanh %936 : vector<112x16xf32>
    %c0_233 = arith.constant 0 : index
    %c0_234 = arith.constant 0 : index
    %938 = vector.load %arg20[%c0_233, %c0_234] : memref<112x16xf32, #tpu.memory_space<vmem>>, vector<112x16xf32>
    %939 = math.tanh %938 : vector<112x16xf32>
    %940 = tpu.concatenate %937, %939 in 1 : vector<112x16xf32>, vector<112x16xf32> -> vector<112x32xf32>
    %c0_235 = arith.constant 0 : index
    %c0_236 = arith.constant 0 : index
    %941 = vector.load %arg13[%c0_235, %c0_236] : memref<32x128xf32, #tpu.memory_space<vmem>>, vector<32x128xf32>
    %cst_237 = arith.constant dense<0.000000e+00> : vector<112x128xf32>
    %942 = tpu.matmul %940, %941, %cst_237 {dimension_numbers = #tpu.dot_dimension_numbers<[1], [0], [0], [1], [0, 0, 1, 1], [], []>} : vector<112x32xf32>, vector<32x128xf32>, vector<112x128xf32> -> vector<112x128xf32>
    %c0_238 = arith.constant 0 : index
    %c0_239 = arith.constant 0 : index
    %943 = vector.load %arg14[%c0_238, %c0_239] : memref<1x128xf32, #tpu.memory_space<vmem>>, vector<1x128xf32>
    %944 = vector.broadcast %943 : vector<1x128xf32> to vector<112x128xf32>
    %945 = arith.addf %942, %944 : vector<112x128xf32>
    %cst_240 = arith.constant 0.000000e+00 : f32
    %946 = vector.broadcast %cst_240 : f32 to vector<112x128xf32>
    %947 = arith.maximumf %945, %946 : vector<112x128xf32>
    %c0_241 = arith.constant 0 : index
    %c0_242 = arith.constant 0 : index
    %948 = vector.load %arg15[%c0_241, %c0_242] : memref<8x112xf32, #tpu.memory_space<vmem>>, vector<8x112xf32>
    %cst_243 = arith.constant dense<0.000000e+00> : vector<8x128xf32>
    %949 = tpu.matmul %948, %947, %cst_243 {dimension_numbers = #tpu.dot_dimension_numbers<[1], [0], [0], [1], [0, 0, 1, 1], [], []>} : vector<8x112xf32>, vector<112x128xf32>, vector<8x128xf32> -> vector<8x128xf32>
    %c0_244 = arith.constant 0 : index
    %c0_245 = arith.constant 0 : index
    %950 = vector.load %arg16[%c0_244, %c0_245] : memref<8x128xf32, #tpu.memory_space<vmem>>, vector<8x128xf32>
    tpu.vector_store %arg16[%c0_244, %c0_245], %949 {strides = array<i32>} : memref<8x128xf32, #tpu.memory_space<vmem>>, vector<8x128xf32>,
    return
  }
  func.func @transform_0(%arg0: i32) -> (i32, i32, i32) {
    %c0_i32 = arith.constant 0 : i32
    %c0_i32_0 = arith.constant 0 : i32
    %c0_i32_1 = arith.constant 0 : i32
    return %arg0, %c0_i32, %c0_i32_0 : i32, i32, i32
  }
  func.func @transform_1(%arg0: i32) -> (i32, i32) {
    %c0_i32 = arith.constant 0 : i32
    %c0_i32_0 = arith.constant 0 : i32
    %c0_i32_1 = arith.constant 0 : i32
    return %c0_i32, %c0_i32_0 : i32, i32
  }
  func.func @transform_2(%arg0: i32) -> (i32, i32) {
    %c0_i32 = arith.constant 0 : i32
    %c0_i32_0 = arith.constant 0 : i32
    %c0_i32_1 = arith.constant 0 : i32
    return %c0_i32, %c0_i32_0 : i32, i32
  }
  func.func @transform_3(%arg0: i32) -> (i32, i32) {
    %c0_i32 = arith.constant 0 : i32
    %c0_i32_0 = arith.constant 0 : i32
    %c0_i32_1 = arith.constant 0 : i32
    return %c0_i32, %c0_i32_0 : i32, i32
  }
  func.func @transform_4(%arg0: i32) -> (i32, i32) {
    %c0_i32 = arith.constant 0 : i32
    %c0_i32_0 = arith.constant 0 : i32
    %c0_i32_1 = arith.constant 0 : i32
    return %c0_i32, %c0_i32_0 : i32, i32
  }
  func.func @transform_5(%arg0: i32) -> (i32, i32) {
    %c0_i32 = arith.constant 0 : i32
    %c0_i32_0 = arith.constant 0 : i32
    %c0_i32_1 = arith.constant 0 : i32
    return %c0_i32, %c0_i32_0 : i32, i32
  }
  func.func @transform_6(%arg0: i32) -> (i32, i32) {
    %c0_i32 = arith.constant 0 : i32
    %c0_i32_0 = arith.constant 0 : i32
    %c0_i32_1 = arith.constant 0 : i32
    return %c0_i32, %c0_i32_0 : i32, i32
  }
  func.func @transform_7(%arg0: i32) -> (i32, i32) {
    %c0_i32 = arith.constant 0 : i32
    %c0_i32_0 = arith.constant 0 : i32
    %c0_i32_1 = arith.constant 0 : i32
    return %c0_i32, %c0_i32_0 : i32, i32
  }
  func.func @transform_8(%arg0: i32) -> (i32, i32) {
    %c0_i32 = arith.constant 0 : i32
    %c0_i32_0 = arith.constant 0 : i32
    %c0_i32_1 = arith.constant 0 : i32
    return %c0_i32, %c0_i32_0 : i32, i32
  }
  func.func @transform_9(%arg0: i32) -> (i32, i32) {
    %c0_i32 = arith.constant 0 : i32
    %c0_i32_0 = arith.constant 0 : i32
    %c0_i32_1 = arith.constant 0 : i32
    return %c0_i32, %c0_i32_0 : i32, i32
  }
  func.func @transform_10(%arg0: i32) -> (i32, i32) {
    %c0_i32 = arith.constant 0 : i32
    %c0_i32_0 = arith.constant 0 : i32
    %c0_i32_1 = arith.constant 0 : i32
    return %c0_i32, %c0_i32_0 : i32, i32
  }
  func.func @transform_11(%arg0: i32) -> (i32, i32) {
    %c0_i32 = arith.constant 0 : i32
    %c0_i32_0 = arith.constant 0 : i32
    %c0_i32_1 = arith.constant 0 : i32
    return %c0_i32, %c0_i32_0 : i32, i32
  }
  func.func @transform_12(%arg0: i32) -> (i32, i32) {
    %c0_i32 = arith.constant 0 : i32
    %c0_i32_0 = arith.constant 0 : i32
    %c0_i32_1 = arith.constant 0 : i32
    return %c0_i32, %c0_i32_0 : i32, i32
  }
  func.func @transform_13(%arg0: i32) -> (i32, i32) {
    %c0_i32 = arith.constant 0 : i32
    %c0_i32_0 = arith.constant 0 : i32
    %c0_i32_1 = arith.constant 0 : i32
    return %c0_i32, %c0_i32_0 : i32, i32
  }
  func.func @transform_14(%arg0: i32) -> (i32, i32) {
    %c0_i32 = arith.constant 0 : i32
    %c0_i32_0 = arith.constant 0 : i32
    %c0_i32_1 = arith.constant 0 : i32
    return %c0_i32, %c0_i32_0 : i32, i32
  }
  func.func @transform_15(%arg0: i32) -> (i32, i32) {
    %c0_i32 = arith.constant 0 : i32
    %c0_i32_0 = arith.constant 0 : i32
    return %arg0, %c0_i32 : i32, i32
  }
}

</mosaic_0001>

<llo_original>
// kernel: tpu_custom_call.1
$region0: #{tpu_custom_call.1}
  #allocation0 [shape = 'u32[]', space=smem, size = 0x4, offset = 0x4, fixed_abs, tag = 'smem constant byte address 0x4 - core index']
  #allocation1 [shape = 'u32[72,128]{1,0:T(1,128)}', space=vmem, size = 0x9000, scoped, tag = 'internal scratch']
  #allocation2 [shape = 'f32[112,48]{1,0:T(8,128)}', space=vmem, size = 0xe000, scoped, tag = 'scratch operand']
  #allocation3 [shape = 'f32[112,48]{1,0:T(8,128)}', space=vmem, size = 0xe000, scoped, tag = 'scratch operand']
  #allocation4 [shape = 'f32[112,16]{1,0:T(8,128)}', space=vmem, size = 0xe000, scoped, tag = 'scratch operand']
  #allocation5 [shape = 'f32[112,16]{1,0:T(8,128)}', space=vmem, size = 0xe000, scoped, tag = 'scratch operand']
  %s0 = inlined_call_operand.vmem [shape: f32[1,264,1], index: 0, kind: input, shape index: {}]
  %s1 = inlined_call_operand.vmem [shape: f32[3,16], index: 1, kind: input, shape index: {}]
  %s2 = inlined_call_operand.vmem [shape: f32[1,16], index: 2, kind: input, shape index: {}]
  %s3 = inlined_call_operand.vmem [shape: f32[48,16], index: 3, kind: input, shape index: {}]
  %s4 = inlined_call_operand.vmem [shape: f32[1,16], index: 4, kind: input, shape index: {}]
  %s5 = inlined_call_operand.vmem [shape: f32[16,8], index: 5, kind: input, shape index: {}]
  %s6 = inlined_call_operand.vmem [shape: f32[1,8], index: 6, kind: input, shape index: {}]
  %s7 = inlined_call_operand.vmem [shape: f32[8,96], index: 7, kind: input, shape index: {}]
  %s8 = inlined_call_operand.vmem [shape: f32[112,260], index: 8, kind: input, shape index: {}]
  %s9 = inlined_call_operand.vmem [shape: f32[1,96], index: 9, kind: input, shape index: {}]
  %s10 = inlined_call_operand.vmem [shape: f32[16,96], index: 10, kind: input, shape index: {}]
  %s11 = inlined_call_operand.vmem [shape: f32[1,96], index: 11, kind: input, shape index: {}]
  %s12 = inlined_call_operand.vmem [shape: f32[32,128], index: 12, kind: input, shape index: {}]
  %s13 = inlined_call_operand.vmem [shape: f32[1,128], index: 13, kind: input, shape index: {}]
  %s14 = inlined_call_operand.vmem [shape: f32[8,112], index: 14, kind: input, shape index: {}]
  %s15 = inlined_call_operand.hbm [shape: f32[8,128], index: 15, kind: output, shape index: {}]
  %s16 = sld [smem:[#allocation0]]
  $region70: #{tpu_custom_call.1} parent=0
    _
  %s18 = ssub.s32 1, %s16
  %s19 = scalar_select 0, %s18, %s16
  $region1: #{tpu_custom_call.1} parent=0
    #allocation6 [shape = 'u8[4096]{0}', space=vmem, size = 0x1000, scoped, tag = 'output window, operand 0, single buffered']
    #allocation7 [shape = 's32[1]{0}', space=sflag, size = 0x4, scoped, tag = 'scoped memory for tpu_custom_call.1']
    %20 = vsyncpa [#allocation7], 0
    // Predicated region
    $region2: #{tpu_custom_call.1} parent=1 // pred_check
      _
    $region3: #{tpu_custom_call.1} parent=1 // pred_check_branch
      %22 = sbr.rel (0) target = $region5
    $region4: #{tpu_custom_call.1} parent=1 // pred_region
      _
    $region5: #{tpu_custom_call.1} parent=1 // pred_fallthru
      _
    // Predicated region
    $region6: #{tpu_custom_call.1} parent=1 // pred_check
      _
    $region7: #{tpu_custom_call.1} parent=1 // pred_check_branch
      %24 = sbr.rel (0) target = $region9
    $region8: #{tpu_custom_call.1} parent=1 // pred_region
      _
    $region9: #{tpu_custom_call.1} parent=1 // pred_fallthru
      _
    // Predicated region
    $region10: #{tpu_custom_call.1} parent=1 // pred_check
      _
    $region11: #{tpu_custom_call.1} parent=1 // pred_check_branch
      %26 = sbr.rel (0) target = $region13
    $region12: #{tpu_custom_call.1} parent=1 // pred_region
      _
    $region13: #{tpu_custom_call.1} parent=1 // pred_fallthru
      _
    // Predicated region
    $region14: #{tpu_custom_call.1} parent=1 // pred_check
      _
    $region15: #{tpu_custom_call.1} parent=1 // pred_check_branch
      %28 = sbr.rel (0) target = $region17
    $region16: #{tpu_custom_call.1} parent=1 // pred_region
      _
    $region17: #{tpu_custom_call.1} parent=1 // pred_fallthru
      _
    // Predicated region
    $region18: #{tpu_custom_call.1} parent=1 // pred_check
      _
    $region19: #{tpu_custom_call.1} parent=1 // pred_check_branch
      %30 = sbr.rel (0) target = $region21
    $region20: #{tpu_custom_call.1} parent=1 // pred_region
      _
    $region21: #{tpu_custom_call.1} parent=1 // pred_fallthru
      _
    // Predicated region
    $region22: #{tpu_custom_call.1} parent=1 // pred_check
      _
    $region23: #{tpu_custom_call.1} parent=1 // pred_check_branch
      %32 = sbr.rel (0) target = $region25
    $region24: #{tpu_custom_call.1} parent=1 // pred_region
      _
    $region25: #{tpu_custom_call.1} parent=1 // pred_fallthru
      _
    // Predicated region
    $region26: #{tpu_custom_call.1} parent=1 // pred_check
      _
    $region27: #{tpu_custom_call.1} parent=1 // pred_check_branch
      %34 = sbr.rel (0) target = $region29
    $region28: #{tpu_custom_call.1} parent=1 // pred_region
      _
    $region29: #{tpu_custom_call.1} parent=1 // pred_fallthru
      _
    // Predicated region
    $region30: #{tpu_custom_call.1} parent=1 // pred_check
      _
    $region31: #{tpu_custom_call.1} parent=1 // pred_check_branch
      %36 = sbr.rel (0) target = $region33
    $region32: #{tpu_custom_call.1} parent=1 // pred_region
      _
    $region33: #{tpu_custom_call.1} parent=1 // pred_fallthru
      _
    // Predicated region
    $region34: #{tpu_custom_call.1} parent=1 // pred_check
      _
    $region35: #{tpu_custom_call.1} parent=1 // pred_check_branch
      %38 = sbr.rel (0) target = $region37
    $region36: #{tpu_custom_call.1} parent=1 // pred_region
      _
    $region37: #{tpu_custom_call.1} parent=1 // pred_fallthru
      _
    // Predicated region
    $region38: #{tpu_custom_call.1} parent=1 // pred_check
      _
    $region39: #{tpu_custom_call.1} parent=1 // pred_check_branch
      %40 = sbr.rel (0) target = $region41
    $region40: #{tpu_custom_call.1} parent=1 // pred_region
      _
    $region41: #{tpu_custom_call.1} parent=1 // pred_fallthru
      _
    // Predicated region
    $region42: #{tpu_custom_call.1} parent=1 // pred_check
      _
    $region43: #{tpu_custom_call.1} parent=1 // pred_check_branch
      %42 = sbr.rel (0) target = $region45
    $region44: #{tpu_custom_call.1} parent=1 // pred_region
      _
    $region45: #{tpu_custom_call.1} parent=1 // pred_fallthru
      _
    // Predicated region
    $region46: #{tpu_custom_call.1} parent=1 // pred_check
      _
    $region47: #{tpu_custom_call.1} parent=1 // pred_check_branch
      %44 = sbr.rel (0) target = $region49
    $region48: #{tpu_custom_call.1} parent=1 // pred_region
      _
    $region49: #{tpu_custom_call.1} parent=1 // pred_fallthru
      _
    // Predicated region
    $region50: #{tpu_custom_call.1} parent=1 // pred_check
      _
    $region51: #{tpu_custom_call.1} parent=1 // pred_check_branch
      %46 = sbr.rel (0) target = $region53
    $region52: #{tpu_custom_call.1} parent=1 // pred_region
      _
    $region53: #{tpu_custom_call.1} parent=1 // pred_fallthru
      _
    // Predicated region
    $region54: #{tpu_custom_call.1} parent=1 // pred_check
      _
    $region55: #{tpu_custom_call.1} parent=1 // pred_check_branch
      %48 = sbr.rel (0) target = $region57
    $region56: #{tpu_custom_call.1} parent=1 // pred_region
      _
    $region57: #{tpu_custom_call.1} parent=1 // pred_fallthru
      _
    // Predicated region
    $region58: #{tpu_custom_call.1} parent=1 // pred_check
      _
    $region59: #{tpu_custom_call.1} parent=1 // pred_check_branch
      %50 = sbr.rel (0) target = $region61
    $region60: #{tpu_custom_call.1} parent=1 // pred_region
      _
    $region61: #{tpu_custom_call.1} parent=1 // pred_fallthru
      _
    %v51 = vld [vmem:[%s0] sm:$0xff]
    %v52 = vld [vmem:[%s0 + $0x8] sm:$0xff]
    %v53 = vld [vmem:[%s0 + $0x10] sm:$0xff]
    %v54 = vld [vmem:[%s0 + $0x18] sm:$0xff]
    %v55 = vld [vmem:[%s0 + $0x20] sm:$0xff]
    %v56 = vld [vmem:[%s0 + $0x28] sm:$0xff]
    %v57 = vld [vmem:[%s0 + $0x30] sm:$0xff]
    %v58 = vld [vmem:[%s0 + $0x38] sm:$0xff]
    %v59 = vld [vmem:[%s0 + $0x40] sm:$0xff]
    %v60 = vld [vmem:[%s0 + $0x48] sm:$0xff]
    %v61 = vld [vmem:[%s0 + $0x50] sm:$0xff]
    %v62 = vld [vmem:[%s0 + $0x58] sm:$0xff]
    %v63 = vld [vmem:[%s0 + $0x60] sm:$0xff]
    %v64 = vld [vmem:[%s0 + $0x68] sm:$0xff]
    %v65 = vld [vmem:[%s0 + $0x70] sm:$0xff]
    %v66 = vld [vmem:[%s0 + $0x78] sm:$0xff]
    %v67 = vld [vmem:[%s0 + $0x80] sm:$0xff]
    %v68 = vld [vmem:[%s0 + $0x88] sm:$0xff]
    %v69 = vld [vmem:[%s0 + $0x90] sm:$0xff]
    %v70 = vld [vmem:[%s0 + $0x98] sm:$0xff]
    %v71 = vld [vmem:[%s0 + $0xa0] sm:$0xff]
    %v72 = vld [vmem:[%s0 + $0xa8] sm:$0xff]
    %v73 = vld [vmem:[%s0 + $0xb0] sm:$0xff]
    %v74 = vld [vmem:[%s0 + $0xb8] sm:$0xff]
    %v75 = vld [vmem:[%s0 + $0xc0] sm:$0xff]
    %v76 = vld [vmem:[%s0 + $0xc8] sm:$0xff]
    %v77 = vld [vmem:[%s0 + $0xd0] sm:$0xff]
    %v78 = vld [vmem:[%s0 + $0xd8] sm:$0xff]
    %v79 = vld [vmem:[%s0 + $0xe0] sm:$0xff]
    %v80 = vld [vmem:[%s0 + $0xe8] sm:$0xff]
    %v81 = vld [vmem:[%s0 + $0xf0] sm:$0xff]
    %v82 = vld [vmem:[%s0 + $0xf8] sm:$0xff]
    %v83 = vld [vmem:[%s0 + $0x100] sm:$0xff]
    %vm117 = vcmask 1046528
    %v118 = vrot.slane %v51, 1
    %v119 = vrot.slane %v52, 1
    %v120 = vsel %vm117, %v118, %v119
    %v121 = vrot.slane %v53, 1
    %v122 = vsel %vm117, %v119, %v121
    %v123 = vrot.slane %v54, 1
    %v124 = vsel %vm117, %v121, %v123
    %v125 = vrot.slane %v55, 1
    %v126 = vsel %vm117, %v123, %v125
    %v127 = vrot.slane %v56, 1
    %v128 = vsel %vm117, %v125, %v127
    %v129 = vrot.slane %v57, 1
    %v130 = vsel %vm117, %v127, %v129
    %v131 = vrot.slane %v58, 1
    %v132 = vsel %vm117, %v129, %v131
    %v133 = vrot.slane %v59, 1
    %v134 = vsel %vm117, %v131, %v133
    %v135 = vrot.slane %v60, 1
    %v136 = vsel %vm117, %v133, %v135
    %v137 = vrot.slane %v61, 1
    %v138 = vsel %vm117, %v135, %v137
    %v139 = vrot.slane %v62, 1
    %v140 = vsel %vm117, %v137, %v139
    %v141 = vrot.slane %v63, 1
    %v142 = vsel %vm117, %v139, %v141
    %v143 = vrot.slane %v64, 1
    %v144 = vsel %vm117, %v141, %v143
    %v145 = vrot.slane %v65, 1
    %v146 = vsel %vm117, %v143, %v145
    %v147 = vrot.slane %v66, 1
    %v148 = vsel %vm117, %v145, %v147
    %v149 = vrot.slane %v67, 1
    %v150 = vsel %vm117, %v147, %v149
    %v151 = vrot.slane %v68, 1
    %v152 = vsel %vm117, %v149, %v151
    %v153 = vrot.slane %v69, 1
    %v154 = vsel %vm117, %v151, %v153
    %v155 = vrot.slane %v70, 1
    %v156 = vsel %vm117, %v153, %v155
    %v157 = vrot.slane %v71, 1
    %v158 = vsel %vm117, %v155, %v157
    %v159 = vrot.slane %v72, 1
    %v160 = vsel %vm117, %v157, %v159
    %v161 = vrot.slane %v73, 1
    %v162 = vsel %vm117, %v159, %v161
    %v163 = vrot.slane %v74, 1
    %v164 = vsel %vm117, %v161, %v163
    %v165 = vrot.slane %v75, 1
    %v166 = vsel %vm117, %v163, %v165
    %v167 = vrot.slane %v76, 1
    %v168 = vsel %vm117, %v165, %v167
    %v169 = vrot.slane %v77, 1
    %v170 = vsel %vm117, %v167, %v169
    %v171 = vrot.slane %v78, 1
    %v172 = vsel %vm117, %v169, %v171
    %v173 = vrot.slane %v79, 1
    %v174 = vsel %vm117, %v171, %v173
    %v175 = vrot.slane %v80, 1
    %v176 = vsel %vm117, %v173, %v175
    %v177 = vrot.slane %v81, 1
    %v178 = vsel %vm117, %v175, %v177
    %v179 = vrot.slane %v82, 1
    %v180 = vsel %vm117, %v177, %v179
    %v181 = vrot.slane %v83, 1
    %v182 = vsel %vm117, %v179, %v181
    %183 = vrot.lane.b32.xlu0 %v120, 1
    %v184 = vpop.permute.xlu0 %183
    %185 = vrot.lane.b32.xlu0 %v122, 1
    %v186 = vpop.permute.xlu0 %185
    %187 = vrot.lane.b32.xlu0 %v124, 1
    %v188 = vpop.permute.xlu0 %187
    %189 = vrot.lane.b32.xlu0 %v126, 1
    %v190 = vpop.permute.xlu0 %189
    %191 = vrot.lane.b32.xlu0 %v128, 1
    %v192 = vpop.permute.xlu0 %191
    %193 = vrot.lane.b32.xlu0 %v130, 1
    %v194 = vpop.permute.xlu0 %193
    %195 = vrot.lane.b32.xlu0 %v132, 1
    %v196 = vpop.permute.xlu0 %195
    %197 = vrot.lane.b32.xlu0 %v134, 1
    %v198 = vpop.permute.xlu0 %197
    %199 = vrot.lane.b32.xlu0 %v136, 1
    %v200 = vpop.permute.xlu0 %199
    %201 = vrot.lane.b32.xlu0 %v138, 1
    %v202 = vpop.permute.xlu0 %201
    %203 = vrot.lane.b32.xlu0 %v140, 1
    %v204 = vpop.permute.xlu0 %203
    %205 = vrot.lane.b32.xlu0 %v142, 1
    %v206 = vpop.permute.xlu0 %205
    %207 = vrot.lane.b32.xlu0 %v144, 1
    %v208 = vpop.permute.xlu0 %207
    %209 = vrot.lane.b32.xlu0 %v146, 1
    %v210 = vpop.permute.xlu0 %209
    %211 = vrot.lane.b32.xlu0 %v148, 1
    %v212 = vpop.permute.xlu0 %211
    %213 = vrot.lane.b32.xlu0 %v150, 1
    %v214 = vpop.permute.xlu0 %213
    %215 = vrot.lane.b32.xlu0 %v152, 1
    %v216 = vpop.permute.xlu0 %215
    %217 = vrot.lane.b32.xlu0 %v154, 1
    %v218 = vpop.permute.xlu0 %217
    %219 = vrot.lane.b32.xlu0 %v156, 1
    %v220 = vpop.permute.xlu0 %219
    %221 = vrot.lane.b32.xlu0 %v158, 1
    %v222 = vpop.permute.xlu0 %221
    %223 = vrot.lane.b32.xlu0 %v160, 1
    %v224 = vpop.permute.xlu0 %223
    %225 = vrot.lane.b32.xlu0 %v162, 1
    %v226 = vpop.permute.xlu0 %225
    %227 = vrot.lane.b32.xlu0 %v164, 1
    %v228 = vpop.permute.xlu0 %227
    %229 = vrot.lane.b32.xlu0 %v166, 1
    %v230 = vpop.permute.xlu0 %229
    %231 = vrot.lane.b32.xlu0 %v168, 1
    %v232 = vpop.permute.xlu0 %231
    %233 = vrot.lane.b32.xlu0 %v170, 1
    %v234 = vpop.permute.xlu0 %233
    %235 = vrot.lane.b32.xlu0 %v172, 1
    %v236 = vpop.permute.xlu0 %235
    %237 = vrot.lane.b32.xlu0 %v174, 1
    %v238 = vpop.permute.xlu0 %237
    %239 = vrot.lane.b32.xlu0 %v176, 1
    %v240 = vpop.permute.xlu0 %239
    %241 = vrot.lane.b32.xlu0 %v178, 1
    %v242 = vpop.permute.xlu0 %241
    %243 = vrot.lane.b32.xlu0 %v180, 1
    %v244 = vpop.permute.xlu0 %243
    %245 = vrot.lane.b32.xlu0 %v182, 1
    %v246 = vpop.permute.xlu0 %245
    %247 = vrot.lane.b32.xlu0 %v181, 1
    %v248 = vpop.permute.xlu0 %247
    %vm282 = vcmask 1045504
    %v283 = vrot.slane %v51, 2
    %v284 = vrot.slane %v52, 2
    %v285 = vsel %vm282, %v283, %v284
    %v286 = vrot.slane %v53, 2
    %v287 = vsel %vm282, %v284, %v286
    %v288 = vrot.slane %v54, 2
    %v289 = vsel %vm282, %v286, %v288
    %v290 = vrot.slane %v55, 2
    %v291 = vsel %vm282, %v288, %v290
    %v292 = vrot.slane %v56, 2
    %v293 = vsel %vm282, %v290, %v292
    %v294 = vrot.slane %v57, 2
    %v295 = vsel %vm282, %v292, %v294
    %v296 = vrot.slane %v58, 2
    %v297 = vsel %vm282, %v294, %v296
    %v298 = vrot.slane %v59, 2
    %v299 = vsel %vm282, %v296, %v298
    %v300 = vrot.slane %v60, 2
    %v301 = vsel %vm282, %v298, %v300
    %v302 = vrot.slane %v61, 2
    %v303 = vsel %vm282, %v300, %v302
    %v304 = vrot.slane %v62, 2
    %v305 = vsel %vm282, %v302, %v304
    %v306 = vrot.slane %v63, 2
    %v307 = vsel %vm282, %v304, %v306
    %v308 = vrot.slane %v64, 2
    %v309 = vsel %vm282, %v306, %v308
    %v310 = vrot.slane %v65, 2
    %v311 = vsel %vm282, %v308, %v310
    %v312 = vrot.slane %v66, 2
    %v313 = vsel %vm282, %v310, %v312
    %v314 = vrot.slane %v67, 2
    %v315 = vsel %vm282, %v312, %v314
    %v316 = vrot.slane %v68, 2
    %v317 = vsel %vm282, %v314, %v316
    %v318 = vrot.slane %v69, 2
    %v319 = vsel %vm282, %v316, %v318
    %v320 = vrot.slane %v70, 2
    %v321 = vsel %vm282, %v318, %v320
    %v322 = vrot.slane %v71, 2
    %v323 = vsel %vm282, %v320, %v322
    %v324 = vrot.slane %v72, 2
    %v325 = vsel %vm282, %v322, %v324
    %v326 = vrot.slane %v73, 2
    %v327 = vsel %vm282, %v324, %v326
    %v328 = vrot.slane %v74, 2
    %v329 = vsel %vm282, %v326, %v328
    %v330 = vrot.slane %v75, 2
    %v331 = vsel %vm282, %v328, %v330
    %v332 = vrot.slane %v76, 2
    %v333 = vsel %vm282, %v330, %v332
    %v334 = vrot.slane %v77, 2
    %v335 = vsel %vm282, %v332, %v334
    %v336 = vrot.slane %v78, 2
    %v337 = vsel %vm282, %v334, %v336
    %v338 = vrot.slane %v79, 2
    %v339 = vsel %vm282, %v336, %v338
    %v340 = vrot.slane %v80, 2
    %v341 = vsel %vm282, %v338, %v340
    %v342 = vrot.slane %v81, 2
    %v343 = vsel %vm282, %v340, %v342
    %v344 = vrot.slane %v82, 2
    %v345 = vsel %vm282, %v342, %v344
    %v346 = vrot.slane %v83, 2
    %v347 = vsel %vm282, %v344, %v346
    %348 = vrot.lane.b32.xlu0 %v285, 2
    %v349 = vpop.permute.xlu0 %348
    %350 = vrot.lane.b32.xlu0 %v287, 2
    %v351 = vpop.permute.xlu0 %350
    %352 = vrot.lane.b32.xlu0 %v289, 2
    %v353 = vpop.permute.xlu0 %352
    %354 = vrot.lane.b32.xlu0 %v291, 2
    %v355 = vpop.permute.xlu0 %354
    %356 = vrot.lane.b32.xlu0 %v293, 2
    %v357 = vpop.permute.xlu0 %356
    %358 = vrot.lane.b32.xlu0 %v295, 2
    %v359 = vpop.permute.xlu0 %358
    %360 = vrot.lane.b32.xlu0 %v297, 2
    %v361 = vpop.permute.xlu0 %360
    %362 = vrot.lane.b32.xlu0 %v299, 2
    %v363 = vpop.permute.xlu0 %362
    %364 = vrot.lane.b32.xlu0 %v301, 2
    %v365 = vpop.permute.xlu0 %364
    %366 = vrot.lane.b32.xlu0 %v303, 2
    %v367 = vpop.permute.xlu0 %366
    %368 = vrot.lane.b32.xlu0 %v305, 2
    %v369 = vpop.permute.xlu0 %368
    %370 = vrot.lane.b32.xlu0 %v307, 2
    %v371 = vpop.permute.xlu0 %370
    %372 = vrot.lane.b32.xlu0 %v309, 2
    %v373 = vpop.permute.xlu0 %372
    %374 = vrot.lane.b32.xlu0 %v311, 2
    %v375 = vpop.permute.xlu0 %374
    %376 = vrot.lane.b32.xlu0 %v313, 2
    %v377 = vpop.permute.xlu0 %376
    %378 = vrot.lane.b32.xlu0 %v315, 2
    %v379 = vpop.permute.xlu0 %378
    %380 = vrot.lane.b32.xlu0 %v317, 2
    %v381 = vpop.permute.xlu0 %380
    %382 = vrot.lane.b32.xlu0 %v319, 2
    %v383 = vpop.permute.xlu0 %382
    %384 = vrot.lane.b32.xlu0 %v321, 2
    %v385 = vpop.permute.xlu0 %384
    %386 = vrot.lane.b32.xlu0 %v323, 2
    %v387 = vpop.permute.xlu0 %386
    %388 = vrot.lane.b32.xlu0 %v325, 2
    %v389 = vpop.permute.xlu0 %388
    %390 = vrot.lane.b32.xlu0 %v327, 2
    %v391 = vpop.permute.xlu0 %390
    %392 = vrot.lane.b32.xlu0 %v329, 2
    %v393 = vpop.permute.xlu0 %392
    %394 = vrot.lane.b32.xlu0 %v331, 2
    %v395 = vpop.permute.xlu0 %394
    %396 = vrot.lane.b32.xlu0 %v333, 2
    %v397 = vpop.permute.xlu0 %396
    %398 = vrot.lane.b32.xlu0 %v335, 2
    %v399 = vpop.permute.xlu0 %398
    %400 = vrot.lane.b32.xlu0 %v337, 2
    %v401 = vpop.permute.xlu0 %400
    %402 = vrot.lane.b32.xlu0 %v339, 2
    %v403 = vpop.permute.xlu0 %402
    %404 = vrot.lane.b32.xlu0 %v341, 2
    %v405 = vpop.permute.xlu0 %404
    %406 = vrot.lane.b32.xlu0 %v343, 2
    %v407 = vpop.permute.xlu0 %406
    %408 = vrot.lane.b32.xlu0 %v345, 2
    %v409 = vpop.permute.xlu0 %408
    %410 = vrot.lane.b32.xlu0 %v347, 2
    %v411 = vpop.permute.xlu0 %410
    %412 = vrot.lane.b32.xlu0 %v346, 2
    %v413 = vpop.permute.xlu0 %412
    %vm447 = vcmask 7168
    %v448 = vsel %vm447, %v51, %v184
    %v449 = vsel %vm447, %v52, %v186
    %v450 = vsel %vm447, %v53, %v188
    %v451 = vsel %vm447, %v54, %v190
    %v452 = vsel %vm447, %v55, %v192
    %v453 = vsel %vm447, %v56, %v194
    %v454 = vsel %vm447, %v57, %v196
    %v455 = vsel %vm447, %v58, %v198
    %v456 = vsel %vm447, %v59, %v200
    %v457 = vsel %vm447, %v60, %v202
    %v458 = vsel %vm447, %v61, %v204
    %v459 = vsel %vm447, %v62, %v206
    %v460 = vsel %vm447, %v63, %v208
    %v461 = vsel %vm447, %v64, %v210
    %v462 = vsel %vm447, %v65, %v212
    %v463 = vsel %vm447, %v66, %v214
    %v464 = vsel %vm447, %v67, %v216
    %v465 = vsel %vm447, %v68, %v218
    %v466 = vsel %vm447, %v69, %v220
    %v467 = vsel %vm447, %v70, %v222
    %v468 = vsel %vm447, %v71, %v224
    %v469 = vsel %vm447, %v72, %v226
    %v470 = vsel %vm447, %v73, %v228
    %v471 = vsel %vm447, %v74, %v230
    %v472 = vsel %vm447, %v75, %v232
    %v473 = vsel %vm447, %v76, %v234
    %v474 = vsel %vm447, %v77, %v236
    %v475 = vsel %vm447, %v78, %v238
    %v476 = vsel %vm447, %v79, %v240
    %v477 = vsel %vm447, %v80, %v242
    %v478 = vsel %vm447, %v81, %v244
    %v479 = vsel %vm447, %v82, %v246
    %v480 = vsel %vm447, %v83, %v248
    %vm481 = vcmask 15360
    %v482 = vsel %vm481, %v448, %v349
    %v483 = vsel %vm481, %v449, %v351
    %v484 = vsel %vm481, %v450, %v353
    %v485 = vsel %vm481, %v451, %v355
    %v486 = vsel %vm481, %v452, %v357
    %v487 = vsel %vm481, %v453, %v359
    %v488 = vsel %vm481, %v454, %v361
    %v489 = vsel %vm481, %v455, %v363
    %v490 = vsel %vm481, %v456, %v365
    %v491 = vsel %vm481, %v457, %v367
    %v492 = vsel %vm481, %v458, %v369
    %v493 = vsel %vm481, %v459, %v371
    %v494 = vsel %vm481, %v460, %v373
    %v495 = vsel %vm481, %v461, %v375
    %v496 = vsel %vm481, %v462, %v377
    %v497 = vsel %vm481, %v463, %v379
    %v498 = vsel %vm481, %v464, %v381
    %v499 = vsel %vm481, %v465, %v383
    %v500 = vsel %vm481, %v466, %v385
    %v501 = vsel %vm481, %v467, %v387
    %v502 = vsel %vm481, %v468, %v389
    %v503 = vsel %vm481, %v469, %v391
    %v504 = vsel %vm481, %v470, %v393
    %v505 = vsel %vm481, %v471, %v395
    %v506 = vsel %vm481, %v472, %v397
    %v507 = vsel %vm481, %v473, %v399
    %v508 = vsel %vm481, %v474, %v401
    %v509 = vsel %vm481, %v475, %v403
    %v510 = vsel %vm481, %v476, %v405
    %v511 = vsel %vm481, %v477, %v407
    %v512 = vsel %vm481, %v478, %v409
    %v513 = vsel %vm481, %v479, %v411
    %v514 = vsel %vm481, %v480, %v413
    %v515 = vld [vmem:[%s1] sm:$0x7]
    %v516 = vld [vmem:[%s2] sm:$0x1]
    %v518 = vperm.slane %v516, 0
    %vm520 = vcmask 23552
    %v522 = vsel %vm520, %v482, 0
    %v525 = vsel %vm520, %v483, 0
    %v528 = vsel %vm520, %v484, 0
    %v531 = vsel %vm520, %v485, 0
    %v534 = vsel %vm520, %v486, 0
    %v537 = vsel %vm520, %v487, 0
    %v540 = vsel %vm520, %v488, 0
    %v543 = vsel %vm520, %v489, 0
    %v546 = vsel %vm520, %v490, 0
    %v549 = vsel %vm520, %v491, 0
    %v552 = vsel %vm520, %v492, 0
    %v555 = vsel %vm520, %v493, 0
    %v558 = vsel %vm520, %v494, 0
    %v561 = vsel %vm520, %v495, 0
    %v564 = vsel %vm520, %v496, 0
    %v567 = vsel %vm520, %v497, 0
    %v570 = vsel %vm520, %v498, 0
    %v573 = vsel %vm520, %v499, 0
    %v576 = vsel %vm520, %v500, 0
    %v579 = vsel %vm520, %v501, 0
    %v582 = vsel %vm520, %v502, 0
    %v585 = vsel %vm520, %v503, 0
    %v588 = vsel %vm520, %v504, 0
    %v591 = vsel %vm520, %v505, 0
    %v594 = vsel %vm520, %v506, 0
    %v597 = vsel %vm520, %v507, 0
    %v600 = vsel %vm520, %v508, 0
    %v603 = vsel %vm520, %v509, 0
    %v606 = vsel %vm520, %v510, 0
    %v609 = vsel %vm520, %v511, 0
    %v612 = vsel %vm520, %v512, 0
    %v615 = vsel %vm520, %v513, 0
    %v618 = vsel %vm520, %v514, 0
    %vm620 = vcmask 1042432
    %v622 = vsel %vm620, %v515, 0
    %624 = vmatpush.msra.mxu0 0.0
    %625 = vmatpush.msra.mxu0 0.0
    %626 = vmatpush.msra.mxu0 0.0
    %627 = vmatpush.msra.mxu0 0.0
    %628 = vmatpush.msra.mxu0 0.0
    %629 = vmatpush.msra.mxu0 0.0
    %630 = vmatpush.msra.mxu0 0.0
    %631 = vmatpush.msra.mxu0 0.0
    %632 = vmatpush.msra.mxu0 0.0
    %633 = vmatpush.msra.mxu0 0.0
    %634 = vmatpush.msra.mxu0 0.0
    %635 = vmatpush.msra.mxu0 0.0
    %636 = vmatpush.msra.mxu0 0.0
    %637 = vmatpush.msra.mxu0 0.0
    %638 = vmatpush.msra.mxu0 0.0
    %639 = vmatpush.msra.mxu0 %v622
    %640 = vmatmul.f32.gmra.mxu0 %v522
    %v641 = vpop.f32.mrf.mxu0
    %v642 = vadd.f32 %v518, %v641
    %643 = vmatmul.f32.gmra.mxu0 %v525
    %v644 = vpop.f32.mrf.mxu0
    %v645 = vadd.f32 %v518, %v644
    %646 = vmatmul.f32.gmra.mxu0 %v528
    %v647 = vpop.f32.mrf.mxu0
    %v648 = vadd.f32 %v518, %v647
    %649 = vmatmul.f32.gmra.mxu0 %v531
    %v650 = vpop.f32.mrf.mxu0
    %v651 = vadd.f32 %v518, %v650
    %652 = vmatmul.f32.gmra.mxu0 %v534
    %v653 = vpop.f32.mrf.mxu0
    %v654 = vadd.f32 %v518, %v653
    %655 = vmatmul.f32.gmra.mxu0 %v537
    %v656 = vpop.f32.mrf.mxu0
    %v657 = vadd.f32 %v518, %v656
    %658 = vmatmul.f32.gmra.mxu0 %v540
    %v659 = vpop.f32.mrf.mxu0
    %v660 = vadd.f32 %v518, %v659
    %661 = vmatmul.f32.gmra.mxu0 %v543
    %v662 = vpop.f32.mrf.mxu0
    %v663 = vadd.f32 %v518, %v662
    %664 = vmatmul.f32.gmra.mxu0 %v546
    %v665 = vpop.f32.mrf.mxu0
    %v666 = vadd.f32 %v518, %v665
    %667 = vmatmul.f32.gmra.mxu0 %v549
    %v668 = vpop.f32.mrf.mxu0
    %v669 = vadd.f32 %v518, %v668
    %670 = vmatmul.f32.gmra.mxu0 %v552
    %v671 = vpop.f32.mrf.mxu0
    %v672 = vadd.f32 %v518, %v671
    %673 = vmatmul.f32.gmra.mxu0 %v555
    %v674 = vpop.f32.mrf.mxu0
    %v675 = vadd.f32 %v518, %v674
    %676 = vmatmul.f32.gmra.mxu0 %v558
    %v677 = vpop.f32.mrf.mxu0
    %v678 = vadd.f32 %v518, %v677
    %679 = vmatmul.f32.gmra.mxu0 %v561
    %v680 = vpop.f32.mrf.mxu0
    %v681 = vadd.f32 %v518, %v680
    %682 = vmatmul.f32.gmra.mxu0 %v564
    %v683 = vpop.f32.mrf.mxu0
    %v684 = vadd.f32 %v518, %v683
    %685 = vmatmul.f32.gmra.mxu0 %v567
    %v686 = vpop.f32.mrf.mxu0
    %v687 = vadd.f32 %v518, %v686
    %688 = vmatmul.f32.gmra.mxu0 %v570
    %v689 = vpop.f32.mrf.mxu0
    %v690 = vadd.f32 %v518, %v689
    %691 = vmatmul.f32.gmra.mxu0 %v573
    %v692 = vpop.f32.mrf.mxu0
    %v693 = vadd.f32 %v518, %v692
    %694 = vmatmul.f32.gmra.mxu0 %v576
    %v695 = vpop.f32.mrf.mxu0
    %v696 = vadd.f32 %v518, %v695
    %697 = vmatmul.f32.gmra.mxu0 %v579
    %v698 = vpop.f32.mrf.mxu0
    %v699 = vadd.f32 %v518, %v698
    %700 = vmatmul.f32.gmra.mxu0 %v582
    %v701 = vpop.f32.mrf.mxu0
    %v702 = vadd.f32 %v518, %v701
    %703 = vmatmul.f32.gmra.mxu0 %v585
    %v704 = vpop.f32.mrf.mxu0
    %v705 = vadd.f32 %v518, %v704
    %706 = vmatmul.f32.gmra.mxu0 %v588
    %v707 = vpop.f32.mrf.mxu0
    %v708 = vadd.f32 %v518, %v707
    %709 = vmatmul.f32.gmra.mxu0 %v591
    %v710 = vpop.f32.mrf.mxu0
    %v711 = vadd.f32 %v518, %v710
    %712 = vmatmul.f32.gmra.mxu0 %v594
    %v713 = vpop.f32.mrf.mxu0
    %v714 = vadd.f32 %v518, %v713
    %715 = vmatmul.f32.gmra.mxu0 %v597
    %v716 = vpop.f32.mrf.mxu0
    %v717 = vadd.f32 %v518, %v716
    %718 = vmatmul.f32.gmra.mxu0 %v600
    %v719 = vpop.f32.mrf.mxu0
    %v720 = vadd.f32 %v518, %v719
    %721 = vmatmul.f32.gmra.mxu0 %v603
    %v722 = vpop.f32.mrf.mxu0
    %v723 = vadd.f32 %v518, %v722
    %724 = vmatmul.f32.gmra.mxu0 %v606
    %v725 = vpop.f32.mrf.mxu0
    %v726 = vadd.f32 %v518, %v725
    %727 = vmatmul.f32.gmra.mxu0 %v609
    %v728 = vpop.f32.mrf.mxu0
    %v729 = vadd.f32 %v518, %v728
    %730 = vmatmul.f32.gmra.mxu0 %v612
    %v731 = vpop.f32.mrf.mxu0
    %v732 = vadd.f32 %v518, %v731
    %733 = vmatmul.f32.gmra.mxu0 %v615
    %v734 = vpop.f32.mrf.mxu0
    %v735 = vadd.f32 %v518, %v734
    %736 = vmatmul.f32.gmra.mxu0 %v618
    %v737 = vpop.f32.mrf.mxu0
    %v738 = vadd.f32 %v518, %v737
    %739 = vdwg.mxu0
    %v773 = vrot.slane %v642, 1
    %v774 = vrot.slane %v645, 1
    %v775 = vsel %vm117, %v773, %v774
    %v776 = vrot.slane %v648, 1
    %v777 = vsel %vm117, %v774, %v776
    %v778 = vrot.slane %v651, 1
    %v779 = vsel %vm117, %v776, %v778
    %v780 = vrot.slane %v654, 1
    %v781 = vsel %vm117, %v778, %v780
    %v782 = vrot.slane %v657, 1
    %v783 = vsel %vm117, %v780, %v782
    %v784 = vrot.slane %v660, 1
    %v785 = vsel %vm117, %v782, %v784
    %v786 = vrot.slane %v663, 1
    %v787 = vsel %vm117, %v784, %v786
    %v788 = vrot.slane %v666, 1
    %v789 = vsel %vm117, %v786, %v788
    %v790 = vrot.slane %v669, 1
    %v791 = vsel %vm117, %v788, %v790
    %v792 = vrot.slane %v672, 1
    %v793 = vsel %vm117, %v790, %v792
    %v794 = vrot.slane %v675, 1
    %v795 = vsel %vm117, %v792, %v794
    %v796 = vrot.slane %v678, 1
    %v797 = vsel %vm117, %v794, %v796
    %v798 = vrot.slane %v681, 1
    %v799 = vsel %vm117, %v796, %v798
    %v800 = vrot.slane %v684, 1
    %v801 = vsel %vm117, %v798, %v800
    %v802 = vrot.slane %v687, 1
    %v803 = vsel %vm117, %v800, %v802
    %v804 = vrot.slane %v690, 1
    %v805 = vsel %vm117, %v802, %v804
    %v806 = vrot.slane %v693, 1
    %v807 = vsel %vm117, %v804, %v806
    %v808 = vrot.slane %v696, 1
    %v809 = vsel %vm117, %v806, %v808
    %v810 = vrot.slane %v699, 1
    %v811 = vsel %vm117, %v808, %v810
    %v812 = vrot.slane %v702, 1
    %v813 = vsel %vm117, %v810, %v812
    %v814 = vrot.slane %v705, 1
    %v815 = vsel %vm117, %v812, %v814
    %v816 = vrot.slane %v708, 1
    %v817 = vsel %vm117, %v814, %v816
    %v818 = vrot.slane %v711, 1
    %v819 = vsel %vm117, %v816, %v818
    %v820 = vrot.slane %v714, 1
    %v821 = vsel %vm117, %v818, %v820
    %v822 = vrot.slane %v717, 1
    %v823 = vsel %vm117, %v820, %v822
    %v824 = vrot.slane %v720, 1
    %v825 = vsel %vm117, %v822, %v824
    %v826 = vrot.slane %v723, 1
    %v827 = vsel %vm117, %v824, %v826
    %v828 = vrot.slane %v726, 1
    %v829 = vsel %vm117, %v826, %v828
    %v830 = vrot.slane %v729, 1
    %v831 = vsel %vm117, %v828, %v830
    %v832 = vrot.slane %v732, 1
    %v833 = vsel %vm117, %v830, %v832
    %v834 = vrot.slane %v735, 1
    %v835 = vsel %vm117, %v832, %v834
    %v836 = vrot.slane %v738, 1
    %v837 = vsel %vm117, %v834, %v836
    %838 = vrot.lane.b32.xlu0 %v775, 16
    %v839 = vpop.permute.xlu0 %838
    %840 = vrot.lane.b32.xlu0 %v777, 16
    %v841 = vpop.permute.xlu0 %840
    %842 = vrot.lane.b32.xlu0 %v779, 16
    %v843 = vpop.permute.xlu0 %842
    %844 = vrot.lane.b32.xlu0 %v781, 16
    %v845 = vpop.permute.xlu0 %844
    %846 = vrot.lane.b32.xlu0 %v783, 16
    %v847 = vpop.permute.xlu0 %846
    %848 = vrot.lane.b32.xlu0 %v785, 16
    %v849 = vpop.permute.xlu0 %848
    %850 = vrot.lane.b32.xlu0 %v787, 16
    %v851 = vpop.permute.xlu0 %850
    %852 = vrot.lane.b32.xlu0 %v789, 16
    %v853 = vpop.permute.xlu0 %852
    %854 = vrot.lane.b32.xlu0 %v791, 16
    %v855 = vpop.permute.xlu0 %854
    %856 = vrot.lane.b32.xlu0 %v793, 16
    %v857 = vpop.permute.xlu0 %856
    %858 = vrot.lane.b32.xlu0 %v795, 16
    %v859 = vpop.permute.xlu0 %858
    %860 = vrot.lane.b32.xlu0 %v797, 16
    %v861 = vpop.permute.xlu0 %860
    %862 = vrot.lane.b32.xlu0 %v799, 16
    %v863 = vpop.permute.xlu0 %862
    %864 = vrot.lane.b32.xlu0 %v801, 16
    %v865 = vpop.permute.xlu0 %864
    %866 = vrot.lane.b32.xlu0 %v803, 16
    %v867 = vpop.permute.xlu0 %866
    %868 = vrot.lane.b32.xlu0 %v805, 16
    %v869 = vpop.permute.xlu0 %868
    %870 = vrot.lane.b32.xlu0 %v807, 16
    %v871 = vpop.permute.xlu0 %870
    %872 = vrot.lane.b32.xlu0 %v809, 16
    %v873 = vpop.permute.xlu0 %872
    %874 = vrot.lane.b32.xlu0 %v811, 16
    %v875 = vpop.permute.xlu0 %874
    %876 = vrot.lane.b32.xlu0 %v813, 16
    %v877 = vpop.permute.xlu0 %876
    %878 = vrot.lane.b32.xlu0 %v815, 16
    %v879 = vpop.permute.xlu0 %878
    %880 = vrot.lane.b32.xlu0 %v817, 16
    %v881 = vpop.permute.xlu0 %880
    %882 = vrot.lane.b32.xlu0 %v819, 16
    %v883 = vpop.permute.xlu0 %882
    %884 = vrot.lane.b32.xlu0 %v821, 16
    %v885 = vpop.permute.xlu0 %884
    %886 = vrot.lane.b32.xlu0 %v823, 16
    %v887 = vpop.permute.xlu0 %886
    %888 = vrot.lane.b32.xlu0 %v825, 16
    %v889 = vpop.permute.xlu0 %888
    %890 = vrot.lane.b32.xlu0 %v827, 16
    %v891 = vpop.permute.xlu0 %890
    %892 = vrot.lane.b32.xlu0 %v829, 16
    %v893 = vpop.permute.xlu0 %892
    %894 = vrot.lane.b32.xlu0 %v831, 16
    %v895 = vpop.permute.xlu0 %894
    %896 = vrot.lane.b32.xlu0 %v833, 16
    %v897 = vpop.permute.xlu0 %896
    %898 = vrot.lane.b32.xlu0 %v835, 16
    %v899 = vpop.permute.xlu0 %898
    %900 = vrot.lane.b32.xlu0 %v837, 16
    %v901 = vpop.permute.xlu0 %900
    %902 = vrot.lane.b32.xlu0 %v836, 16
    %v903 = vpop.permute.xlu0 %902
    %v937 = vrot.slane %v642, 2
    %v938 = vrot.slane %v645, 2
    %v939 = vsel %vm282, %v937, %v938
    %v940 = vrot.slane %v648, 2
    %v941 = vsel %vm282, %v938, %v940
    %v942 = vrot.slane %v651, 2
    %v943 = vsel %vm282, %v940, %v942
    %v944 = vrot.slane %v654, 2
    %v945 = vsel %vm282, %v942, %v944
    %v946 = vrot.slane %v657, 2
    %v947 = vsel %vm282, %v944, %v946
    %v948 = vrot.slane %v660, 2
    %v949 = vsel %vm282, %v946, %v948
    %v950 = vrot.slane %v663, 2
    %v951 = vsel %vm282, %v948, %v950
    %v952 = vrot.slane %v666, 2
    %v953 = vsel %vm282, %v950, %v952
    %v954 = vrot.slane %v669, 2
    %v955 = vsel %vm282, %v952, %v954
    %v956 = vrot.slane %v672, 2
    %v957 = vsel %vm282, %v954, %v956
    %v958 = vrot.slane %v675, 2
    %v959 = vsel %vm282, %v956, %v958
    %v960 = vrot.slane %v678, 2
    %v961 = vsel %vm282, %v958, %v960
    %v962 = vrot.slane %v681, 2
    %v963 = vsel %vm282, %v960, %v962
    %v964 = vrot.slane %v684, 2
    %v965 = vsel %vm282, %v962, %v964
    %v966 = vrot.slane %v687, 2
    %v967 = vsel %vm282, %v964, %v966
    %v968 = vrot.slane %v690, 2
    %v969 = vsel %vm282, %v966, %v968
    %v970 = vrot.slane %v693, 2
    %v971 = vsel %vm282, %v968, %v970
    %v972 = vrot.slane %v696, 2
    %v973 = vsel %vm282, %v970, %v972
    %v974 = vrot.slane %v699, 2
    %v975 = vsel %vm282, %v972, %v974
    %v976 = vrot.slane %v702, 2
    %v977 = vsel %vm282, %v974, %v976
    %v978 = vrot.slane %v705, 2
    %v979 = vsel %vm282, %v976, %v978
    %v980 = vrot.slane %v708, 2
    %v981 = vsel %vm282, %v978, %v980
    %v982 = vrot.slane %v711, 2
    %v983 = vsel %vm282, %v980, %v982
    %v984 = vrot.slane %v714, 2
    %v985 = vsel %vm282, %v982, %v984
    %v986 = vrot.slane %v717, 2
    %v987 = vsel %vm282, %v984, %v986
    %v988 = vrot.slane %v720, 2
    %v989 = vsel %vm282, %v986, %v988
    %v990 = vrot.slane %v723, 2
    %v991 = vsel %vm282, %v988, %v990
    %v992 = vrot.slane %v726, 2
    %v993 = vsel %vm282, %v990, %v992
    %v994 = vrot.slane %v729, 2
    %v995 = vsel %vm282, %v992, %v994
    %v996 = vrot.slane %v732, 2
    %v997 = vsel %vm282, %v994, %v996
    %v998 = vrot.slane %v735, 2
    %v999 = vsel %vm282, %v996, %v998
    %v1000 = vrot.slane %v738, 2
    %v1001 = vsel %vm282, %v998, %v1000
    %1002 = vrot.lane.b32.xlu0 %v939, 32
    %v1003 = vpop.permute.xlu0 %1002
    %1004 = vrot.lane.b32.xlu0 %v941, 32
    %v1005 = vpop.permute.xlu0 %1004
    %1006 = vrot.lane.b32.xlu0 %v943, 32
    %v1007 = vpop.permute.xlu0 %1006
    %1008 = vrot.lane.b32.xlu0 %v945, 32
    %v1009 = vpop.permute.xlu0 %1008
    %1010 = vrot.lane.b32.xlu0 %v947, 32
    %v1011 = vpop.permute.xlu0 %1010
    %1012 = vrot.lane.b32.xlu0 %v949, 32
    %v1013 = vpop.permute.xlu0 %1012
    %1014 = vrot.lane.b32.xlu0 %v951, 32
    %v1015 = vpop.permute.xlu0 %1014
    %1016 = vrot.lane.b32.xlu0 %v953, 32
    %v1017 = vpop.permute.xlu0 %1016
    %1018 = vrot.lane.b32.xlu0 %v955, 32
    %v1019 = vpop.permute.xlu0 %1018
    %1020 = vrot.lane.b32.xlu0 %v957, 32
    %v1021 = vpop.permute.xlu0 %1020
    %1022 = vrot.lane.b32.xlu0 %v959, 32
    %v1023 = vpop.permute.xlu0 %1022
    %1024 = vrot.lane.b32.xlu0 %v961, 32
    %v1025 = vpop.permute.xlu0 %1024
    %1026 = vrot.lane.b32.xlu0 %v963, 32
    %v1027 = vpop.permute.xlu0 %1026
    %1028 = vrot.lane.b32.xlu0 %v965, 32
    %v1029 = vpop.permute.xlu0 %1028
    %1030 = vrot.lane.b32.xlu0 %v967, 32
    %v1031 = vpop.permute.xlu0 %1030
    %1032 = vrot.lane.b32.xlu0 %v969, 32
    %v1033 = vpop.permute.xlu0 %1032
    %1034 = vrot.lane.b32.xlu0 %v971, 32
    %v1035 = vpop.permute.xlu0 %1034
    %1036 = vrot.lane.b32.xlu0 %v973, 32
    %v1037 = vpop.permute.xlu0 %1036
    %1038 = vrot.lane.b32.xlu0 %v975, 32
    %v1039 = vpop.permute.xlu0 %1038
    %1040 = vrot.lane.b32.xlu0 %v977, 32
    %v1041 = vpop.permute.xlu0 %1040
    %1042 = vrot.lane.b32.xlu0 %v979, 32
    %v1043 = vpop.permute.xlu0 %1042
    %1044 = vrot.lane.b32.xlu0 %v981, 32
    %v1045 = vpop.permute.xlu0 %1044
    %1046 = vrot.lane.b32.xlu0 %v983, 32
    %v1047 = vpop.permute.xlu0 %1046
    %1048 = vrot.lane.b32.xlu0 %v985, 32
    %v1049 = vpop.permute.xlu0 %1048
    %1050 = vrot.lane.b32.xlu0 %v987, 32
    %v1051 = vpop.permute.xlu0 %1050
    %1052 = vrot.lane.b32.xlu0 %v989, 32
    %v1053 = vpop.permute.xlu0 %1052
    %1054 = vrot.lane.b32.xlu0 %v991, 32
    %v1055 = vpop.permute.xlu0 %1054
    %1056 = vrot.lane.b32.xlu0 %v993, 32
    %v1057 = vpop.permute.xlu0 %1056
    %1058 = vrot.lane.b32.xlu0 %v995, 32
    %v1059 = vpop.permute.xlu0 %1058
    %1060 = vrot.lane.b32.xlu0 %v997, 32
    %v1061 = vpop.permute.xlu0 %1060
    %1062 = vrot.lane.b32.xlu0 %v999, 32
    %v1063 = vpop.permute.xlu0 %1062
    %1064 = vrot.lane.b32.xlu0 %v1001, 32
    %v1065 = vpop.permute.xlu0 %1064
    %1066 = vrot.lane.b32.xlu0 %v1000, 32
    %v1067 = vpop.permute.xlu0 %1066
    %vm1101 = vcmask 130048
    %v1102 = vsel %vm1101, %v642, %v839
    %v1103 = vsel %vm1101, %v645, %v841
    %v1104 = vsel %vm1101, %v648, %v843
    %v1105 = vsel %vm1101, %v651, %v845
    %v1106 = vsel %vm1101, %v654, %v847
    %v1107 = vsel %vm1101, %v657, %v849
    %v1108 = vsel %vm1101, %v660, %v851
    %v1109 = vsel %vm1101, %v663, %v853
    %v1110 = vsel %vm1101, %v666, %v855
    %v1111 = vsel %vm1101, %v669, %v857
    %v1112 = vsel %vm1101, %v672, %v859
    %v1113 = vsel %vm1101, %v675, %v861
    %v1114 = vsel %vm1101, %v678, %v863
    %v1115 = vsel %vm1101, %v681, %v865
    %v1116 = vsel %vm1101, %v684, %v867
    %v1117 = vsel %vm1101, %v687, %v869
    %v1118 = vsel %vm1101, %v690, %v871
    %v1119 = vsel %vm1101, %v693, %v873
    %v1120 = vsel %vm1101, %v696, %v875
    %v1121 = vsel %vm1101, %v699, %v877
    %v1122 = vsel %vm1101, %v702, %v879
    %v1123 = vsel %vm1101, %v705, %v881
    %v1124 = vsel %vm1101, %v708, %v883
    %v1125 = vsel %vm1101, %v711, %v885
    %v1126 = vsel %vm1101, %v714, %v887
    %v1127 = vsel %vm1101, %v717, %v889
    %v1128 = vsel %vm1101, %v720, %v891
    %v1129 = vsel %vm1101, %v723, %v893
    %v1130 = vsel %vm1101, %v726, %v895
    %v1131 = vsel %vm1101, %v729, %v897
    %v1132 = vsel %vm1101, %v732, %v899
    %v1133 = vsel %vm1101, %v735, %v901
    %v1134 = vsel %vm1101, %v738, %v903
    %vm1135 = vcmask 261120
    %v1136 = vsel %vm1135, %v1102, %v1003
    %v1137 = vsel %vm1135, %v1103, %v1005
    %v1138 = vsel %vm1135, %v1104, %v1007
    %v1139 = vsel %vm1135, %v1105, %v1009
    %v1140 = vsel %vm1135, %v1106, %v1011
    %v1141 = vsel %vm1135, %v1107, %v1013
    %v1142 = vsel %vm1135, %v1108, %v1015
    %v1143 = vsel %vm1135, %v1109, %v1017
    %v1144 = vsel %vm1135, %v1110, %v1019
    %v1145 = vsel %vm1135, %v1111, %v1021
    %v1146 = vsel %vm1135, %v1112, %v1023
    %v1147 = vsel %vm1135, %v1113, %v1025
    %v1148 = vsel %vm1135, %v1114, %v1027
    %v1149 = vsel %vm1135, %v1115, %v1029
    %v1150 = vsel %vm1135, %v1116, %v1031
    %v1151 = vsel %vm1135, %v1117, %v1033
    %v1152 = vsel %vm1135, %v1118, %v1035
    %v1153 = vsel %vm1135, %v1119, %v1037
    %v1154 = vsel %vm1135, %v1120, %v1039
    %v1155 = vsel %vm1135, %v1121, %v1041
    %v1156 = vsel %vm1135, %v1122, %v1043
    %v1157 = vsel %vm1135, %v1123, %v1045
    %v1158 = vsel %vm1135, %v1124, %v1047
    %v1159 = vsel %vm1135, %v1125, %v1049
    %v1160 = vsel %vm1135, %v1126, %v1051
    %v1161 = vsel %vm1135, %v1127, %v1053
    %v1162 = vsel %vm1135, %v1128, %v1055
    %v1163 = vsel %vm1135, %v1129, %v1057
    %v1164 = vsel %vm1135, %v1130, %v1059
    %v1165 = vsel %vm1135, %v1131, %v1061
    %v1166 = vsel %vm1135, %v1132, %v1063
    %v1167 = vsel %vm1135, %v1133, %v1065
    %v1168 = vsel %vm1135, %v1134, %v1067
    %v1169 = vld [vmem:[%s3] sm:$0xff]
    %v1170 = vld [vmem:[%s3 + $0x8] sm:$0xff]
    %v1171 = vld [vmem:[%s3 + $0x10] sm:$0xff]
    %v1172 = vld [vmem:[%s3 + $0x18] sm:$0xff]
    %v1173 = vld [vmem:[%s3 + $0x20] sm:$0xff]
    %v1174 = vld [vmem:[%s3 + $0x28] sm:$0xff]
    %v1175 = vld [vmem:[%s4] sm:$0x1]
    %v1177 = vperm.slane %v1175, 0
    %vm1179 = vcmask 392192
    %v1181 = vsel %vm1179, %v1136, 0
    %v1184 = vsel %vm1179, %v1137, 0
    %v1187 = vsel %vm1179, %v1138, 0
    %v1190 = vsel %vm1179, %v1139, 0
    %v1193 = vsel %vm1179, %v1140, 0
    %v1196 = vsel %vm1179, %v1141, 0
    %v1199 = vsel %vm1179, %v1142, 0
    %v1202 = vsel %vm1179, %v1143, 0
    %v1205 = vsel %vm1179, %v1144, 0
    %v1208 = vsel %vm1179, %v1145, 0
    %v1211 = vsel %vm1179, %v1146, 0
    %v1214 = vsel %vm1179, %v1147, 0
    %v1217 = vsel %vm1179, %v1148, 0
    %v1220 = vsel %vm1179, %v1149, 0
    %v1223 = vsel %vm1179, %v1150, 0
    %v1226 = vsel %vm1179, %v1151, 0
    %v1229 = vsel %vm1179, %v1152, 0
    %v1232 = vsel %vm1179, %v1153, 0
    %v1235 = vsel %vm1179, %v1154, 0
    %v1238 = vsel %vm1179, %v1155, 0
    %v1241 = vsel %vm1179, %v1156, 0
    %v1244 = vsel %vm1179, %v1157, 0
    %v1247 = vsel %vm1179, %v1158, 0
    %v1250 = vsel %vm1179, %v1159, 0
    %v1253 = vsel %vm1179, %v1160, 0
    %v1256 = vsel %vm1179, %v1161, 0
    %v1259 = vsel %vm1179, %v1162, 0
    %v1262 = vsel %vm1179, %v1163, 0
    %v1265 = vsel %vm1179, %v1164, 0
    %v1268 = vsel %vm1179, %v1165, 0
    %v1271 = vsel %vm1179, %v1166, 0
    %v1274 = vsel %vm1179, %v1167, 0
    %v1277 = vsel %vm1179, %v1168, 0
    %1279 = vmatpush.msra.mxu0 0.0
    %1280 = vmatpush.msra.mxu0 0.0
    %1281 = vmatpush.msra.mxu0 0.0
    %1282 = vmatpush.msra.mxu0 0.0
    %1283 = vmatpush.msra.mxu0 0.0
    %1284 = vmatpush.msra.mxu0 0.0
    %1285 = vmatpush.msra.mxu0 0.0
    %1286 = vmatpush.msra.mxu0 0.0
    %1287 = vmatpush.msra.mxu0 0.0
    %1288 = vmatpush.msra.mxu0 0.0
    %1289 = vmatpush.msra.mxu0 %v1174
    %1290 = vmatpush.msra.mxu0 %v1173
    %1291 = vmatpush.msra.mxu0 %v1172
    %1292 = vmatpush.msra.mxu0 %v1171
    %1293 = vmatpush.msra.mxu0 %v1170
    %1294 = vmatpush.msra.mxu0 %v1169
    %1295 = vmatmul.f32.gmra.mxu0 %v1181
    %v1296 = vpop.f32.mrf.mxu0
    %v1297 = vadd.f32 %v1177, %v1296
    %1298 = vmatmul.f32.gmra.mxu0 %v1184
    %v1299 = vpop.f32.mrf.mxu0
    %v1300 = vadd.f32 %v1177, %v1299
    %1301 = vmatmul.f32.gmra.mxu0 %v1187
    %v1302 = vpop.f32.mrf.mxu0
    %v1303 = vadd.f32 %v1177, %v1302
    %1304 = vmatmul.f32.gmra.mxu0 %v1190
    %v1305 = vpop.f32.mrf.mxu0
    %v1306 = vadd.f32 %v1177, %v1305
    %1307 = vmatmul.f32.gmra.mxu0 %v1193
    %v1308 = vpop.f32.mrf.mxu0
    %v1309 = vadd.f32 %v1177, %v1308
    %1310 = vmatmul.f32.gmra.mxu0 %v1196
    %v1311 = vpop.f32.mrf.mxu0
    %v1312 = vadd.f32 %v1177, %v1311
    %1313 = vmatmul.f32.gmra.mxu0 %v1199
    %v1314 = vpop.f32.mrf.mxu0
    %v1315 = vadd.f32 %v1177, %v1314
    %1316 = vmatmul.f32.gmra.mxu0 %v1202
    %v1317 = vpop.f32.mrf.mxu0
    %v1318 = vadd.f32 %v1177, %v1317
    %1319 = vmatmul.f32.gmra.mxu0 %v1205
    %v1320 = vpop.f32.mrf.mxu0
    %v1321 = vadd.f32 %v1177, %v1320
    %1322 = vmatmul.f32.gmra.mxu0 %v1208
    %v1323 = vpop.f32.mrf.mxu0
    %v1324 = vadd.f32 %v1177, %v1323
    %1325 = vmatmul.f32.gmra.mxu0 %v1211
    %v1326 = vpop.f32.mrf.mxu0
    %v1327 = vadd.f32 %v1177, %v1326
    %1328 = vmatmul.f32.gmra.mxu0 %v1214
    %v1329 = vpop.f32.mrf.mxu0
    %v1330 = vadd.f32 %v1177, %v1329
    %1331 = vmatmul.f32.gmra.mxu0 %v1217
    %v1332 = vpop.f32.mrf.mxu0
    %v1333 = vadd.f32 %v1177, %v1332
    %1334 = vmatmul.f32.gmra.mxu0 %v1220
    %v1335 = vpop.f32.mrf.mxu0
    %v1336 = vadd.f32 %v1177, %v1335
    %1337 = vmatmul.f32.gmra.mxu0 %v1223
    %v1338 = vpop.f32.mrf.mxu0
    %v1339 = vadd.f32 %v1177, %v1338
    %1340 = vmatmul.f32.gmra.mxu0 %v1226
    %v1341 = vpop.f32.mrf.mxu0
    %v1342 = vadd.f32 %v1177, %v1341
    %1343 = vmatmul.f32.gmra.mxu0 %v1229
    %v1344 = vpop.f32.mrf.mxu0
    %v1345 = vadd.f32 %v1177, %v1344
    %1346 = vmatmul.f32.gmra.mxu0 %v1232
    %v1347 = vpop.f32.mrf.mxu0
    %v1348 = vadd.f32 %v1177, %v1347
    %1349 = vmatmul.f32.gmra.mxu0 %v1235
    %v1350 = vpop.f32.mrf.mxu0
    %v1351 = vadd.f32 %v1177, %v1350
    %1352 = vmatmul.f32.gmra.mxu0 %v1238
    %v1353 = vpop.f32.mrf.mxu0
    %v1354 = vadd.f32 %v1177, %v1353
    %1355 = vmatmul.f32.gmra.mxu0 %v1241
    %v1356 = vpop.f32.mrf.mxu0
    %v1357 = vadd.f32 %v1177, %v1356
    %1358 = vmatmul.f32.gmra.mxu0 %v1244
    %v1359 = vpop.f32.mrf.mxu0
    %v1360 = vadd.f32 %v1177, %v1359
    %1361 = vmatmul.f32.gmra.mxu0 %v1247
    %v1362 = vpop.f32.mrf.mxu0
    %v1363 = vadd.f32 %v1177, %v1362
    %1364 = vmatmul.f32.gmra.mxu0 %v1250
    %v1365 = vpop.f32.mrf.mxu0
    %v1366 = vadd.f32 %v1177, %v1365
    %1367 = vmatmul.f32.gmra.mxu0 %v1253
    %v1368 = vpop.f32.mrf.mxu0
    %v1369 = vadd.f32 %v1177, %v1368
    %1370 = vmatmul.f32.gmra.mxu0 %v1256
    %v1371 = vpop.f32.mrf.mxu0
    %v1372 = vadd.f32 %v1177, %v1371
    %1373 = vmatmul.f32.gmra.mxu0 %v1259
    %v1374 = vpop.f32.mrf.mxu0
    %v1375 = vadd.f32 %v1177, %v1374
    %1376 = vmatmul.f32.gmra.mxu0 %v1262
    %v1377 = vpop.f32.mrf.mxu0
    %v1378 = vadd.f32 %v1177, %v1377
    %1379 = vmatmul.f32.gmra.mxu0 %v1265
    %v1380 = vpop.f32.mrf.mxu0
    %v1381 = vadd.f32 %v1177, %v1380
    %1382 = vmatmul.f32.gmra.mxu0 %v1268
    %v1383 = vpop.f32.mrf.mxu0
    %v1384 = vadd.f32 %v1177, %v1383
    %1385 = vmatmul.f32.gmra.mxu0 %v1271
    %v1386 = vpop.f32.mrf.mxu0
    %v1387 = vadd.f32 %v1177, %v1386
    %1388 = vmatmul.f32.gmra.mxu0 %v1274
    %v1389 = vpop.f32.mrf.mxu0
    %v1390 = vadd.f32 %v1177, %v1389
    %1391 = vmatmul.f32.gmra.mxu0 %v1277
    %v1392 = vpop.f32.mrf.mxu0
    %v1393 = vadd.f32 %v1177, %v1392
    %1394 = vdwg.mxu0
    %v1395 = vld [vmem:[%s5] sm:$0xff]
    %v1396 = vld [vmem:[%s5 + $0x8] sm:$0xff]
    %v1397 = vld [vmem:[%s6] sm:$0x1]
    %v1399 = vperm.slane %v1397, 0
    %v1402 = vsel %vm1101, %v1297, 0
    %v1405 = vsel %vm1101, %v1300, 0
    %v1408 = vsel %vm1101, %v1303, 0
    %v1411 = vsel %vm1101, %v1306, 0
    %v1414 = vsel %vm1101, %v1309, 0
    %v1417 = vsel %vm1101, %v1312, 0
    %v1420 = vsel %vm1101, %v1315, 0
    %v1423 = vsel %vm1101, %v1318, 0
    %v1426 = vsel %vm1101, %v1321, 0
    %v1429 = vsel %vm1101, %v1324, 0
    %v1432 = vsel %vm1101, %v1327, 0
    %v1435 = vsel %vm1101, %v1330, 0
    %v1438 = vsel %vm1101, %v1333, 0
    %v1441 = vsel %vm1101, %v1336, 0
    %v1444 = vsel %vm1101, %v1339, 0
    %v1447 = vsel %vm1101, %v1342, 0
    %v1450 = vsel %vm1101, %v1345, 0
    %v1453 = vsel %vm1101, %v1348, 0
    %v1456 = vsel %vm1101, %v1351, 0
    %v1459 = vsel %vm1101, %v1354, 0
    %v1462 = vsel %vm1101, %v1357, 0
    %v1465 = vsel %vm1101, %v1360, 0
    %v1468 = vsel %vm1101, %v1363, 0
    %v1471 = vsel %vm1101, %v1366, 0
    %v1474 = vsel %vm1101, %v1369, 0
    %v1477 = vsel %vm1101, %v1372, 0
    %v1480 = vsel %vm1101, %v1375, 0
    %v1483 = vsel %vm1101, %v1378, 0
    %v1486 = vsel %vm1101, %v1381, 0
    %v1489 = vsel %vm1101, %v1384, 0
    %v1492 = vsel %vm1101, %v1387, 0
    %v1495 = vsel %vm1101, %v1390, 0
    %v1498 = vsel %vm1101, %v1393, 0
    %1500 = vmatpush.msra.mxu0 0.0
    %1501 = vmatpush.msra.mxu0 0.0
    %1502 = vmatpush.msra.mxu0 0.0
    %1503 = vmatpush.msra.mxu0 0.0
    %1504 = vmatpush.msra.mxu0 0.0
    %1505 = vmatpush.msra.mxu0 0.0
    %1506 = vmatpush.msra.mxu0 0.0
    %1507 = vmatpush.msra.mxu0 0.0
    %1508 = vmatpush.msra.mxu0 0.0
    %1509 = vmatpush.msra.mxu0 0.0
    %1510 = vmatpush.msra.mxu0 0.0
    %1511 = vmatpush.msra.mxu0 0.0
    %1512 = vmatpush.msra.mxu0 0.0
    %1513 = vmatpush.msra.mxu0 0.0
    %1514 = vmatpush.msra.mxu0 %v1396
    %1515 = vmatpush.msra.mxu0 %v1395
    %1516 = vmatmul.f32.gmra.mxu0 %v1402
    %v1517 = vpop.f32.mrf.mxu0
    %v1518 = vadd.f32 %v1399, %v1517
    %1519 = vmatmul.f32.gmra.mxu0 %v1405
    %v1520 = vpop.f32.mrf.mxu0
    %v1521 = vadd.f32 %v1399, %v1520
    %1522 = vmatmul.f32.gmra.mxu0 %v1408
    %v1523 = vpop.f32.mrf.mxu0
    %v1524 = vadd.f32 %v1399, %v1523
    %1525 = vmatmul.f32.gmra.mxu0 %v1411
    %v1526 = vpop.f32.mrf.mxu0
    %v1527 = vadd.f32 %v1399, %v1526
    %1528 = vmatmul.f32.gmra.mxu0 %v1414
    %v1529 = vpop.f32.mrf.mxu0
    %v1530 = vadd.f32 %v1399, %v1529
    %1531 = vmatmul.f32.gmra.mxu0 %v1417
    %v1532 = vpop.f32.mrf.mxu0
    %v1533 = vadd.f32 %v1399, %v1532
    %1534 = vmatmul.f32.gmra.mxu0 %v1420
    %v1535 = vpop.f32.mrf.mxu0
    %v1536 = vadd.f32 %v1399, %v1535
    %1537 = vmatmul.f32.gmra.mxu0 %v1423
    %v1538 = vpop.f32.mrf.mxu0
    %v1539 = vadd.f32 %v1399, %v1538
    %1540 = vmatmul.f32.gmra.mxu0 %v1426
    %v1541 = vpop.f32.mrf.mxu0
    %v1542 = vadd.f32 %v1399, %v1541
    %1543 = vmatmul.f32.gmra.mxu0 %v1429
    %v1544 = vpop.f32.mrf.mxu0
    %v1545 = vadd.f32 %v1399, %v1544
    %1546 = vmatmul.f32.gmra.mxu0 %v1432
    %v1547 = vpop.f32.mrf.mxu0
    %v1548 = vadd.f32 %v1399, %v1547
    %1549 = vmatmul.f32.gmra.mxu0 %v1435
    %v1550 = vpop.f32.mrf.mxu0
    %v1551 = vadd.f32 %v1399, %v1550
    %1552 = vmatmul.f32.gmra.mxu0 %v1438
    %v1553 = vpop.f32.mrf.mxu0
    %v1554 = vadd.f32 %v1399, %v1553
    %1555 = vmatmul.f32.gmra.mxu0 %v1441
    %v1556 = vpop.f32.mrf.mxu0
    %v1557 = vadd.f32 %v1399, %v1556
    %1558 = vmatmul.f32.gmra.mxu0 %v1444
    %v1559 = vpop.f32.mrf.mxu0
    %v1560 = vadd.f32 %v1399, %v1559
    %1561 = vmatmul.f32.gmra.mxu0 %v1447
    %v1562 = vpop.f32.mrf.mxu0
    %v1563 = vadd.f32 %v1399, %v1562
    %1564 = vmatmul.f32.gmra.mxu0 %v1450
    %v1565 = vpop.f32.mrf.mxu0
    %v1566 = vadd.f32 %v1399, %v1565
    %1567 = vmatmul.f32.gmra.mxu0 %v1453
    %v1568 = vpop.f32.mrf.mxu0
    %v1569 = vadd.f32 %v1399, %v1568
    %1570 = vmatmul.f32.gmra.mxu0 %v1456
    %v1571 = vpop.f32.mrf.mxu0
    %v1572 = vadd.f32 %v1399, %v1571
    %1573 = vmatmul.f32.gmra.mxu0 %v1459
    %v1574 = vpop.f32.mrf.mxu0
    %v1575 = vadd.f32 %v1399, %v1574
    %1576 = vmatmul.f32.gmra.mxu0 %v1462
    %v1577 = vpop.f32.mrf.mxu0
    %v1578 = vadd.f32 %v1399, %v1577
    %1579 = vmatmul.f32.gmra.mxu0 %v1465
    %v1580 = vpop.f32.mrf.mxu0
    %v1581 = vadd.f32 %v1399, %v1580
    %1582 = vmatmul.f32.gmra.mxu0 %v1468
    %v1583 = vpop.f32.mrf.mxu0
    %v1584 = vadd.f32 %v1399, %v1583
    %1585 = vmatmul.f32.gmra.mxu0 %v1471
    %v1586 = vpop.f32.mrf.mxu0
    %v1587 = vadd.f32 %v1399, %v1586
    %1588 = vmatmul.f32.gmra.mxu0 %v1474
    %v1589 = vpop.f32.mrf.mxu0
    %v1590 = vadd.f32 %v1399, %v1589
    %1591 = vmatmul.f32.gmra.mxu0 %v1477
    %v1592 = vpop.f32.mrf.mxu0
    %v1593 = vadd.f32 %v1399, %v1592
    %1594 = vmatmul.f32.gmra.mxu0 %v1480
    %v1595 = vpop.f32.mrf.mxu0
    %v1596 = vadd.f32 %v1399, %v1595
    %1597 = vmatmul.f32.gmra.mxu0 %v1483
    %v1598 = vpop.f32.mrf.mxu0
    %v1599 = vadd.f32 %v1399, %v1598
    %1600 = vmatmul.f32.gmra.mxu0 %v1486
    %v1601 = vpop.f32.mrf.mxu0
    %v1602 = vadd.f32 %v1399, %v1601
    %1603 = vmatmul.f32.gmra.mxu0 %v1489
    %v1604 = vpop.f32.mrf.mxu0
    %v1605 = vadd.f32 %v1399, %v1604
    %1606 = vmatmul.f32.gmra.mxu0 %v1492
    %v1607 = vpop.f32.mrf.mxu0
    %v1608 = vadd.f32 %v1399, %v1607
    %1609 = vmatmul.f32.gmra.mxu0 %v1495
    %v1610 = vpop.f32.mrf.mxu0
    %v1611 = vadd.f32 %v1399, %v1610
    %1612 = vmatmul.f32.gmra.mxu0 %v1498
    %v1613 = vpop.f32.mrf.mxu0
    %v1614 = vadd.f32 %v1399, %v1613
    %1615 = vdwg.mxu0
    %v1616 = vmax.f32 %v1518, 0.0
    %v1617 = vmax.f32 %v1521, 0.0
    %v1618 = vmax.f32 %v1524, 0.0
    %v1619 = vmax.f32 %v1527, 0.0
    %v1620 = vmax.f32 %v1530, 0.0
    %v1621 = vmax.f32 %v1533, 0.0
    %v1622 = vmax.f32 %v1536, 0.0
    %v1623 = vmax.f32 %v1539, 0.0
    %v1624 = vmax.f32 %v1542, 0.0
    %v1625 = vmax.f32 %v1545, 0.0
    %v1626 = vmax.f32 %v1548, 0.0
    %v1627 = vmax.f32 %v1551, 0.0
    %v1628 = vmax.f32 %v1554, 0.0
    %v1629 = vmax.f32 %v1557, 0.0
    %v1630 = vmax.f32 %v1560, 0.0
    %v1631 = vmax.f32 %v1563, 0.0
    %v1632 = vmax.f32 %v1566, 0.0
    %v1633 = vmax.f32 %v1569, 0.0
    %v1634 = vmax.f32 %v1572, 0.0
    %v1635 = vmax.f32 %v1575, 0.0
    %v1636 = vmax.f32 %v1578, 0.0
    %v1637 = vmax.f32 %v1581, 0.0
    %v1638 = vmax.f32 %v1584, 0.0
    %v1639 = vmax.f32 %v1587, 0.0
    %v1640 = vmax.f32 %v1590, 0.0
    %v1641 = vmax.f32 %v1593, 0.0
    %v1642 = vmax.f32 %v1596, 0.0
    %v1643 = vmax.f32 %v1599, 0.0
    %v1644 = vmax.f32 %v1602, 0.0
    %v1645 = vmax.f32 %v1605, 0.0
    %v1646 = vmax.f32 %v1608, 0.0
    %v1647 = vmax.f32 %v1611, 0.0
    %v1648 = vmax.f32 %v1614, 0.0
    %v1649 = vld [vmem:[%s7] sm:$0xff]
    %vm1650 = vcmask 64512
    %v1652 = vsel %vm1650, %v1616, 0
    %v1655 = vsel %vm1650, %v1617, 0
    %v1658 = vsel %vm1650, %v1618, 0
    %v1661 = vsel %vm1650, %v1619, 0
    %v1664 = vsel %vm1650, %v1620, 0
    %v1667 = vsel %vm1650, %v1621, 0
    %v1670 = vsel %vm1650, %v1622, 0
    %v1673 = vsel %vm1650, %v1623, 0
    %v1676 = vsel %vm1650, %v1624, 0
    %v1679 = vsel %vm1650, %v1625, 0
    %v1682 = vsel %vm1650, %v1626, 0
    %v1685 = vsel %vm1650, %v1627, 0
    %v1688 = vsel %vm1650, %v1628, 0
    %v1691 = vsel %vm1650, %v1629, 0
    %v1694 = vsel %vm1650, %v1630, 0
    %v1697 = vsel %vm1650, %v1631, 0
    %v1700 = vsel %vm1650, %v1632, 0
    %v1703 = vsel %vm1650, %v1633, 0
    %v1706 = vsel %vm1650, %v1634, 0
    %v1709 = vsel %vm1650, %v1635, 0
    %v1712 = vsel %vm1650, %v1636, 0
    %v1715 = vsel %vm1650, %v1637, 0
    %v1718 = vsel %vm1650, %v1638, 0
    %v1721 = vsel %vm1650, %v1639, 0
    %v1724 = vsel %vm1650, %v1640, 0
    %v1727 = vsel %vm1650, %v1641, 0
    %v1730 = vsel %vm1650, %v1642, 0
    %v1733 = vsel %vm1650, %v1643, 0
    %v1736 = vsel %vm1650, %v1644, 0
    %v1739 = vsel %vm1650, %v1645, 0
    %v1742 = vsel %vm1650, %v1646, 0
    %v1745 = vsel %vm1650, %v1647, 0
    %v1748 = vsel %vm1650, %v1648, 0
    %1750 = vmatpush.msra.mxu0 0.0
    %1751 = vmatpush.msra.mxu0 0.0
    %1752 = vmatpush.msra.mxu0 0.0
    %1753 = vmatpush.msra.mxu0 0.0
    %1754 = vmatpush.msra.mxu0 0.0
    %1755 = vmatpush.msra.mxu0 0.0
    %1756 = vmatpush.msra.mxu0 0.0
    %1757 = vmatpush.msra.mxu0 0.0
    %1758 = vmatpush.msra.mxu0 0.0
    %1759 = vmatpush.msra.mxu0 0.0
    %1760 = vmatpush.msra.mxu0 0.0
    %1761 = vmatpush.msra.mxu0 0.0
    %1762 = vmatpush.msra.mxu0 0.0
    %1763 = vmatpush.msra.mxu0 0.0
    %1764 = vmatpush.msra.mxu0 0.0
    %1765 = vmatpush.msra.mxu0 %v1649
    %1766 = vmatmul.f32.gmra.mxu0 %v1652
    %v1767 = vpop.f32.mrf.mxu0
    %v1768 = vadd.f32 0.0, %v1767
    %1769 = vmatmul.f32.gmra.mxu0 %v1655
    %v1770 = vpop.f32.mrf.mxu0
    %v1771 = vadd.f32 0.0, %v1770
    %1772 = vmatmul.f32.gmra.mxu0 %v1658
    %v1773 = vpop.f32.mrf.mxu0
    %v1774 = vadd.f32 0.0, %v1773
    %1775 = vmatmul.f32.gmra.mxu0 %v1661
    %v1776 = vpop.f32.mrf.mxu0
    %v1777 = vadd.f32 0.0, %v1776
    %1778 = vmatmul.f32.gmra.mxu0 %v1664
    %v1779 = vpop.f32.mrf.mxu0
    %v1780 = vadd.f32 0.0, %v1779
    %1781 = vmatmul.f32.gmra.mxu0 %v1667
    %v1782 = vpop.f32.mrf.mxu0
    %v1783 = vadd.f32 0.0, %v1782
    %1784 = vmatmul.f32.gmra.mxu0 %v1670
    %v1785 = vpop.f32.mrf.mxu0
    %v1786 = vadd.f32 0.0, %v1785
    %1787 = vmatmul.f32.gmra.mxu0 %v1673
    %v1788 = vpop.f32.mrf.mxu0
    %v1789 = vadd.f32 0.0, %v1788
    %1790 = vmatmul.f32.gmra.mxu0 %v1676
    %v1791 = vpop.f32.mrf.mxu0
    %v1792 = vadd.f32 0.0, %v1791
    %1793 = vmatmul.f32.gmra.mxu0 %v1679
    %v1794 = vpop.f32.mrf.mxu0
    %v1795 = vadd.f32 0.0, %v1794
    %1796 = vmatmul.f32.gmra.mxu0 %v1682
    %v1797 = vpop.f32.mrf.mxu0
    %v1798 = vadd.f32 0.0, %v1797
    %1799 = vmatmul.f32.gmra.mxu0 %v1685
    %v1800 = vpop.f32.mrf.mxu0
    %v1801 = vadd.f32 0.0, %v1800
    %1802 = vmatmul.f32.gmra.mxu0 %v1688
    %v1803 = vpop.f32.mrf.mxu0
    %v1804 = vadd.f32 0.0, %v1803
    %1805 = vmatmul.f32.gmra.mxu0 %v1691
    %v1806 = vpop.f32.mrf.mxu0
    %v1807 = vadd.f32 0.0, %v1806
    %1808 = vmatmul.f32.gmra.mxu0 %v1694
    %v1809 = vpop.f32.mrf.mxu0
    %v1810 = vadd.f32 0.0, %v1809
    %1811 = vmatmul.f32.gmra.mxu0 %v1697
    %v1812 = vpop.f32.mrf.mxu0
    %v1813 = vadd.f32 0.0, %v1812
    %1814 = vmatmul.f32.gmra.mxu0 %v1700
    %v1815 = vpop.f32.mrf.mxu0
    %v1816 = vadd.f32 0.0, %v1815
    %1817 = vmatmul.f32.gmra.mxu0 %v1703
    %v1818 = vpop.f32.mrf.mxu0
    %v1819 = vadd.f32 0.0, %v1818
    %1820 = vmatmul.f32.gmra.mxu0 %v1706
    %v1821 = vpop.f32.mrf.mxu0
    %v1822 = vadd.f32 0.0, %v1821
    %1823 = vmatmul.f32.gmra.mxu0 %v1709
    %v1824 = vpop.f32.mrf.mxu0
    %v1825 = vadd.f32 0.0, %v1824
    %1826 = vmatmul.f32.gmra.mxu0 %v1712
    %v1827 = vpop.f32.mrf.mxu0
    %v1828 = vadd.f32 0.0, %v1827
    %1829 = vmatmul.f32.gmra.mxu0 %v1715
    %v1830 = vpop.f32.mrf.mxu0
    %v1831 = vadd.f32 0.0, %v1830
    %1832 = vmatmul.f32.gmra.mxu0 %v1718
    %v1833 = vpop.f32.mrf.mxu0
    %v1834 = vadd.f32 0.0, %v1833
    %1835 = vmatmul.f32.gmra.mxu0 %v1721
    %v1836 = vpop.f32.mrf.mxu0
    %v1837 = vadd.f32 0.0, %v1836
    %1838 = vmatmul.f32.gmra.mxu0 %v1724
    %v1839 = vpop.f32.mrf.mxu0
    %v1840 = vadd.f32 0.0, %v1839
    %1841 = vmatmul.f32.gmra.mxu0 %v1727
    %v1842 = vpop.f32.mrf.mxu0
    %v1843 = vadd.f32 0.0, %v1842
    %1844 = vmatmul.f32.gmra.mxu0 %v1730
    %v1845 = vpop.f32.mrf.mxu0
    %v1846 = vadd.f32 0.0, %v1845
    %1847 = vmatmul.f32.gmra.mxu0 %v1733
    %v1848 = vpop.f32.mrf.mxu0
    %v1849 = vadd.f32 0.0, %v1848
    %1850 = vmatmul.f32.gmra.mxu0 %v1736
    %v1851 = vpop.f32.mrf.mxu0
    %v1852 = vadd.f32 0.0, %v1851
    %1853 = vmatmul.f32.gmra.mxu0 %v1739
    %v1854 = vpop.f32.mrf.mxu0
    %v1855 = vadd.f32 0.0, %v1854
    %1856 = vmatmul.f32.gmra.mxu0 %v1742
    %v1857 = vpop.f32.mrf.mxu0
    %v1858 = vadd.f32 0.0, %v1857
    %1859 = vmatmul.f32.gmra.mxu0 %v1745
    %v1860 = vpop.f32.mrf.mxu0
    %v1861 = vadd.f32 0.0, %v1860
    %1862 = vmatmul.f32.gmra.mxu0 %v1748
    %v1863 = vpop.f32.mrf.mxu0
    %v1864 = vadd.f32 0.0, %v1863
    %1865 = vdwg.mxu0
    %v1866 = vld [vmem:[%s8] sm:$0xff]
    %v1867 = vld [vmem:[%s8 + $0x8] sm:$0xff]
    %v1868 = vld [vmem:[%s8 + $0x10] sm:$0xff]
    %v1869 = vld [vmem:[%s8 + $0x18] sm:$0xff]
    %v1870 = vld [vmem:[%s8 + $0x20] sm:$0xff]
    %v1871 = vld [vmem:[%s8 + $0x28] sm:$0xff]
    %v1872 = vld [vmem:[%s8 + $0x30] sm:$0xff]
    %v1873 = vld [vmem:[%s8 + $0x38] sm:$0xff]
    %v1874 = vld [vmem:[%s8 + $0x40] sm:$0xff]
    %v1875 = vld [vmem:[%s8 + $0x48] sm:$0xff]
    %v1876 = vld [vmem:[%s8 + $0x50] sm:$0xff]
    %v1877 = vld [vmem:[%s8 + $0x58] sm:$0xff]
    %v1878 = vld [vmem:[%s8 + $0x60] sm:$0xff]
    %v1879 = vld [vmem:[%s8 + $0x68] sm:$0xff]
    %v1880 = vld [vmem:[%s8 + $0x70] sm:$0xff]
    %v1881 = vld [vmem:[%s8 + $0x78] sm:$0xff]
    %v1882 = vld [vmem:[%s8 + $0x80] sm:$0xff]
    %v1883 = vld [vmem:[%s8 + $0x88] sm:$0xff]
    %v1884 = vld [vmem:[%s8 + $0x90] sm:$0xff]
    %v1885 = vld [vmem:[%s8 + $0x98] sm:$0xff]
    %v1886 = vld [vmem:[%s8 + $0xa0] sm:$0xff]
    %v1887 = vld [vmem:[%s8 + $0xa8] sm:$0xff]
    %v1888 = vld [vmem:[%s8 + $0xb0] sm:$0xff]
    %v1889 = vld [vmem:[%s8 + $0xb8] sm:$0xff]
    %v1890 = vld [vmem:[%s8 + $0xc0] sm:$0xff]
    %v1891 = vld [vmem:[%s8 + $0xc8] sm:$0xff]
    %v1892 = vld [vmem:[%s8 + $0xd0] sm:$0xff]
    %v1893 = vld [vmem:[%s8 + $0xd8] sm:$0xff]
    %v1894 = vld [vmem:[%s8 + $0xe0] sm:$0xff]
    %v1895 = vld [vmem:[%s8 + $0xe8] sm:$0xff]
    %v1896 = vld [vmem:[%s8 + $0xf0] sm:$0xff]
    %v1897 = vld [vmem:[%s8 + $0xf8] sm:$0xff]
    %v1898 = vld [vmem:[%s8 + $0x100] sm:$0xff]
    %v1899 = vld [vmem:[%s8 + $0x108] sm:$0xff]
    %v1900 = vld [vmem:[%s8 + $0x110] sm:$0xff]
    %v1901 = vld [vmem:[%s8 + $0x118] sm:$0xff]
    %v1902 = vld [vmem:[%s8 + $0x120] sm:$0xff]
    %v1903 = vld [vmem:[%s8 + $0x128] sm:$0xff]
    %v1904 = vld [vmem:[%s8 + $0x130] sm:$0xff]
    %v1905 = vld [vmem:[%s8 + $0x138] sm:$0xff]
    %v1906 = vld [vmem:[%s8 + $0x140] sm:$0xff]
    %v1907 = vld [vmem:[%s8 + $0x148] sm:$0xff]
    %v1908 = vld [vmem:[%s9] sm:$0x1]
    %v1910 = vperm.slane %v1908, 0
    %vm1912 = vcmask 31744
    %v1914 = vsel %vm1912, %v1868, 0
    %v1917 = vsel %vm1912, %v1871, 0
    %v1920 = vsel %vm1912, %v1874, 0
    %v1923 = vsel %vm1912, %v1877, 0
    %v1926 = vsel %vm1912, %v1880, 0
    %v1929 = vsel %vm1912, %v1883, 0
    %v1932 = vsel %vm1912, %v1886, 0
    %v1935 = vsel %vm1912, %v1889, 0
    %v1938 = vsel %vm1912, %v1892, 0
    %v1941 = vsel %vm1912, %v1895, 0
    %v1944 = vsel %vm1912, %v1898, 0
    %v1947 = vsel %vm1912, %v1901, 0
    %v1950 = vsel %vm1912, %v1904, 0
    %v1953 = vsel %vm1912, %v1907, 0
    %vm1955 = vcmask 1043456
    %v1957 = vsel %vm1955, %v1864, 0
    %1959 = vmatpush.msra.mxu0 %v1813
    %1960 = vmatpush.msra.mxu0 %v1810
    %1961 = vmatpush.msra.mxu0 %v1807
    %1962 = vmatpush.msra.mxu0 %v1804
    %1963 = vmatpush.msra.mxu0 %v1801
    %1964 = vmatpush.msra.mxu0 %v1798
    %1965 = vmatpush.msra.mxu0 %v1795
    %1966 = vmatpush.msra.mxu0 %v1792
    %1967 = vmatpush.msra.mxu0 %v1789
    %1968 = vmatpush.msra.mxu0 %v1786
    %1969 = vmatpush.msra.mxu0 %v1783
    %1970 = vmatpush.msra.mxu0 %v1780
    %1971 = vmatpush.msra.mxu0 %v1777
    %1972 = vmatpush.msra.mxu0 %v1774
    %1973 = vmatpush.msra.mxu0 %v1771
    %1974 = vmatpush.msra.mxu0 %v1768
    %1975 = vmatmul.f32.gmra.mxu0 %v1866
    %v1976 = vpop.f32.mrf.mxu0
    %v1977 = vadd.f32 %v1910, %v1976
    %1978 = vmatmul.f32.gmra.mxu0 %v1869
    %v1979 = vpop.f32.mrf.mxu0
    %v1980 = vadd.f32 %v1910, %v1979
    %1981 = vmatmul.f32.gmra.mxu0 %v1872
    %v1982 = vpop.f32.mrf.mxu0
    %v1983 = vadd.f32 %v1910, %v1982
    %1984 = vmatmul.f32.gmra.mxu0 %v1875
    %v1985 = vpop.f32.mrf.mxu0
    %v1986 = vadd.f32 %v1910, %v1985
    %1987 = vmatmul.f32.gmra.mxu0 %v1878
    %v1988 = vpop.f32.mrf.mxu0
    %v1989 = vadd.f32 %v1910, %v1988
    %1990 = vmatmul.f32.gmra.mxu0 %v1881
    %v1991 = vpop.f32.mrf.mxu0
    %v1992 = vadd.f32 %v1910, %v1991
    %1993 = vmatmul.f32.gmra.mxu0 %v1884
    %v1994 = vpop.f32.mrf.mxu0
    %v1995 = vadd.f32 %v1910, %v1994
    %1996 = vmatmul.f32.gmra.mxu0 %v1887
    %v1997 = vpop.f32.mrf.mxu0
    %v1998 = vadd.f32 %v1910, %v1997
    %1999 = vmatmul.f32.gmra.mxu0 %v1890
    %v2000 = vpop.f32.mrf.mxu0
    %v2001 = vadd.f32 %v1910, %v2000
    %2002 = vmatmul.f32.gmra.mxu0 %v1893
    %v2003 = vpop.f32.mrf.mxu0
    %v2004 = vadd.f32 %v1910, %v2003
    %2005 = vmatmul.f32.gmra.mxu0 %v1896
    %v2006 = vpop.f32.mrf.mxu0
    %v2007 = vadd.f32 %v1910, %v2006
    %2008 = vmatmul.f32.gmra.mxu0 %v1899
    %v2009 = vpop.f32.mrf.mxu0
    %v2010 = vadd.f32 %v1910, %v2009
    %2011 = vmatmul.f32.gmra.mxu0 %v1902
    %v2012 = vpop.f32.mrf.mxu0
    %v2013 = vadd.f32 %v1910, %v2012
    %2014 = vmatmul.f32.gmra.mxu0 %v1905
    %v2015 = vpop.f32.mrf.mxu0
    %v2016 = vadd.f32 %v1910, %v2015
    %2017 = vdwg.mxu0
    %2018 = vmatpush.msra.mxu0 %v1861
    %2019 = vmatpush.msra.mxu0 %v1858
    %2020 = vmatpush.msra.mxu0 %v1855
    %2021 = vmatpush.msra.mxu0 %v1852
    %2022 = vmatpush.msra.mxu0 %v1849
    %2023 = vmatpush.msra.mxu0 %v1846
    %2024 = vmatpush.msra.mxu0 %v1843
    %2025 = vmatpush.msra.mxu0 %v1840
    %2026 = vmatpush.msra.mxu0 %v1837
    %2027 = vmatpush.msra.mxu0 %v1834
    %2028 = vmatpush.msra.mxu0 %v1831
    %2029 = vmatpush.msra.mxu0 %v1828
    %2030 = vmatpush.msra.mxu0 %v1825
    %2031 = vmatpush.msra.mxu0 %v1822
    %2032 = vmatpush.msra.mxu0 %v1819
    %2033 = vmatpush.msra.mxu0 %v1816
    %2034 = vmatmul.f32.gmra.mxu0 %v1867
    %v2035 = vpop.f32.mrf.mxu0
    %v2036 = vadd.f32 %v1977, %v2035
    %2037 = vmatmul.f32.gmra.mxu0 %v1870
    %v2038 = vpop.f32.mrf.mxu0
    %v2039 = vadd.f32 %v1980, %v2038
    %2040 = vmatmul.f32.gmra.mxu0 %v1873
    %v2041 = vpop.f32.mrf.mxu0
    %v2042 = vadd.f32 %v1983, %v2041
    %2043 = vmatmul.f32.gmra.mxu0 %v1876
    %v2044 = vpop.f32.mrf.mxu0
    %v2045 = vadd.f32 %v1986, %v2044
    %2046 = vmatmul.f32.gmra.mxu0 %v1879
    %v2047 = vpop.f32.mrf.mxu0
    %v2048 = vadd.f32 %v1989, %v2047
    %2049 = vmatmul.f32.gmra.mxu0 %v1882
    %v2050 = vpop.f32.mrf.mxu0
    %v2051 = vadd.f32 %v1992, %v2050
    %2052 = vmatmul.f32.gmra.mxu0 %v1885
    %v2053 = vpop.f32.mrf.mxu0
    %v2054 = vadd.f32 %v1995, %v2053
    %2055 = vmatmul.f32.gmra.mxu0 %v1888
    %v2056 = vpop.f32.mrf.mxu0
    %v2057 = vadd.f32 %v1998, %v2056
    %2058 = vmatmul.f32.gmra.mxu0 %v1891
    %v2059 = vpop.f32.mrf.mxu0
    %v2060 = vadd.f32 %v2001, %v2059
    %2061 = vmatmul.f32.gmra.mxu0 %v1894
    %v2062 = vpop.f32.mrf.mxu0
    %v2063 = vadd.f32 %v2004, %v2062
    %2064 = vmatmul.f32.gmra.mxu0 %v1897
    %v2065 = vpop.f32.mrf.mxu0
    %v2066 = vadd.f32 %v2007, %v2065
    %2067 = vmatmul.f32.gmra.mxu0 %v1900
    %v2068 = vpop.f32.mrf.mxu0
    %v2069 = vadd.f32 %v2010, %v2068
    %2070 = vmatmul.f32.gmra.mxu0 %v1903
    %v2071 = vpop.f32.mrf.mxu0
    %v2072 = vadd.f32 %v2013, %v2071
    %2073 = vmatmul.f32.gmra.mxu0 %v1906
    %v2074 = vpop.f32.mrf.mxu0
    %v2075 = vadd.f32 %v2016, %v2074
    %2076 = vdwg.mxu0
    %2077 = vmatpush.msra.mxu0 0.0
    %2078 = vmatpush.msra.mxu0 0.0
    %2079 = vmatpush.msra.mxu0 0.0
    %2080 = vmatpush.msra.mxu0 0.0
    %2081 = vmatpush.msra.mxu0 0.0
    %2082 = vmatpush.msra.mxu0 0.0
    %2083 = vmatpush.msra.mxu0 0.0
    %2084 = vmatpush.msra.mxu0 0.0
    %2085 = vmatpush.msra.mxu0 0.0
    %2086 = vmatpush.msra.mxu0 0.0
    %2087 = vmatpush.msra.mxu0 0.0
    %2088 = vmatpush.msra.mxu0 0.0
    %2089 = vmatpush.msra.mxu0 0.0
    %2090 = vmatpush.msra.mxu0 0.0
    %2091 = vmatpush.msra.mxu0 0.0
    %2092 = vmatpush.msra.mxu0 %v1957
    %2093 = vmatmul.f32.gmra.mxu0 %v1914
    %v2094 = vpop.f32.mrf.mxu0
    %v2095 = vadd.f32 %v2036, %v2094
    %2096 = vmatmul.f32.gmra.mxu0 %v1917
    %v2097 = vpop.f32.mrf.mxu0
    %v2098 = vadd.f32 %v2039, %v2097
    %2099 = vmatmul.f32.gmra.mxu0 %v1920
    %v2100 = vpop.f32.mrf.mxu0
    %v2101 = vadd.f32 %v2042, %v2100
    %2102 = vmatmul.f32.gmra.mxu0 %v1923
    %v2103 = vpop.f32.mrf.mxu0
    %v2104 = vadd.f32 %v2045, %v2103
    %2105 = vmatmul.f32.gmra.mxu0 %v1926
    %v2106 = vpop.f32.mrf.mxu0
    %v2107 = vadd.f32 %v2048, %v2106
    %2108 = vmatmul.f32.gmra.mxu0 %v1929
    %v2109 = vpop.f32.mrf.mxu0
    %v2110 = vadd.f32 %v2051, %v2109
    %2111 = vmatmul.f32.gmra.mxu0 %v1932
    %v2112 = vpop.f32.mrf.mxu0
    %v2113 = vadd.f32 %v2054, %v2112
    %2114 = vmatmul.f32.gmra.mxu0 %v1935
    %v2115 = vpop.f32.mrf.mxu0
    %v2116 = vadd.f32 %v2057, %v2115
    %2117 = vmatmul.f32.gmra.mxu0 %v1938
    %v2118 = vpop.f32.mrf.mxu0
    %v2119 = vadd.f32 %v2060, %v2118
    %2120 = vmatmul.f32.gmra.mxu0 %v1941
    %v2121 = vpop.f32.mrf.mxu0
    %v2122 = vadd.f32 %v2063, %v2121
    %2123 = vmatmul.f32.gmra.mxu0 %v1944
    %v2124 = vpop.f32.mrf.mxu0
    %v2125 = vadd.f32 %v2066, %v2124
    %2126 = vmatmul.f32.gmra.mxu0 %v1947
    %v2127 = vpop.f32.mrf.mxu0
    %v2128 = vadd.f32 %v2069, %v2127
    %2129 = vmatmul.f32.gmra.mxu0 %v1950
    %v2130 = vpop.f32.mrf.mxu0
    %v2131 = vadd.f32 %v2072, %v2130
    %2132 = vmatmul.f32.gmra.mxu0 %v1953
    %v2133 = vpop.f32.mrf.mxu0
    %v2134 = vadd.f32 %v2075, %v2133
    %2135 = vdwg.mxu0
    %2136 = vst.msk [vmem:[#allocation2] sm:$0xff] %vm1179, %v2095
    %2137 = vst.msk [vmem:[#allocation2 + $0x8] sm:$0xff] %vm1179, %v2098
    %2138 = vst.msk [vmem:[#allocation2 + $0x10] sm:$0xff] %vm1179, %v2101
    %2139 = vst.msk [vmem:[#allocation2 + $0x18] sm:$0xff] %vm1179, %v2104
    %2140 = vst.msk [vmem:[#allocation2 + $0x20] sm:$0xff] %vm1179, %v2107
    %2141 = vst.msk [vmem:[#allocation2 + $0x28] sm:$0xff] %vm1179, %v2110
    %2142 = vst.msk [vmem:[#allocation2 + $0x30] sm:$0xff] %vm1179, %v2113
    %2143 = vst.msk [vmem:[#allocation2 + $0x38] sm:$0xff] %vm1179, %v2116
    %2144 = vst.msk [vmem:[#allocation2 + $0x40] sm:$0xff] %vm1179, %v2119
    %2145 = vst.msk [vmem:[#allocation2 + $0x48] sm:$0xff] %vm1179, %v2122
    %2146 = vst.msk [vmem:[#allocation2 + $0x50] sm:$0xff] %vm1179, %v2125
    %2147 = vst.msk [vmem:[#allocation2 + $0x58] sm:$0xff] %vm1179, %v2128
    %2148 = vst.msk [vmem:[#allocation2 + $0x60] sm:$0xff] %vm1179, %v2131
    %2149 = vst.msk [vmem:[#allocation2 + $0x68] sm:$0xff] %vm1179, %v2134
    %2164 = vrot.lane.b32.xlu0 %v2095, 80
    %v2165 = vpop.permute.xlu0 %2164
    %2166 = vrot.lane.b32.xlu0 %v2098, 80
    %v2167 = vpop.permute.xlu0 %2166
    %2168 = vrot.lane.b32.xlu0 %v2101, 80
    %v2169 = vpop.permute.xlu0 %2168
    %2170 = vrot.lane.b32.xlu0 %v2104, 80
    %v2171 = vpop.permute.xlu0 %2170
    %2172 = vrot.lane.b32.xlu0 %v2107, 80
    %v2173 = vpop.permute.xlu0 %2172
    %2174 = vrot.lane.b32.xlu0 %v2110, 80
    %v2175 = vpop.permute.xlu0 %2174
    %2176 = vrot.lane.b32.xlu0 %v2113, 80
    %v2177 = vpop.permute.xlu0 %2176
    %2178 = vrot.lane.b32.xlu0 %v2116, 80
    %v2179 = vpop.permute.xlu0 %2178
    %2180 = vrot.lane.b32.xlu0 %v2119, 80
    %v2181 = vpop.permute.xlu0 %2180
    %2182 = vrot.lane.b32.xlu0 %v2122, 80
    %v2183 = vpop.permute.xlu0 %2182
    %2184 = vrot.lane.b32.xlu0 %v2125, 80
    %v2185 = vpop.permute.xlu0 %2184
    %2186 = vrot.lane.b32.xlu0 %v2128, 80
    %v2187 = vpop.permute.xlu0 %2186
    %2188 = vrot.lane.b32.xlu0 %v2131, 80
    %v2189 = vpop.permute.xlu0 %2188
    %2190 = vrot.lane.b32.xlu0 %v2134, 80
    %v2191 = vpop.permute.xlu0 %2190
    %2206 = vst.msk [vmem:[#allocation3] sm:$0xff] %vm1179, %v2165
    %2207 = vst.msk [vmem:[#allocation3 + $0x8] sm:$0xff] %vm1179, %v2167
    %2208 = vst.msk [vmem:[#allocation3 + $0x10] sm:$0xff] %vm1179, %v2169
    %2209 = vst.msk [vmem:[#allocation3 + $0x18] sm:$0xff] %vm1179, %v2171
    %2210 = vst.msk [vmem:[#allocation3 + $0x20] sm:$0xff] %vm1179, %v2173
    %2211 = vst.msk [vmem:[#allocation3 + $0x28] sm:$0xff] %vm1179, %v2175
    %2212 = vst.msk [vmem:[#allocation3 + $0x30] sm:$0xff] %vm1179, %v2177
    %2213 = vst.msk [vmem:[#allocation3 + $0x38] sm:$0xff] %vm1179, %v2179
    %2214 = vst.msk [vmem:[#allocation3 + $0x40] sm:$0xff] %vm1179, %v2181
    %2215 = vst.msk [vmem:[#allocation3 + $0x48] sm:$0xff] %vm1179, %v2183
    %2216 = vst.msk [vmem:[#allocation3 + $0x50] sm:$0xff] %vm1179, %v2185
    %2217 = vst.msk [vmem:[#allocation3 + $0x58] sm:$0xff] %vm1179, %v2187
    %2218 = vst.msk [vmem:[#allocation3 + $0x60] sm:$0xff] %vm1179, %v2189
    %2219 = vst.msk [vmem:[#allocation3 + $0x68] sm:$0xff] %vm1179, %v2191
    %v2220 = vld [vmem:[%s10] sm:$0xff]
    %v2221 = vld [vmem:[%s10 + $0x8] sm:$0xff]
    %v2222 = vld [vmem:[%s11] sm:$0x1]
    %v2223 = vld [vmem:[#allocation2] sm:$0xff]
    %v2224 = vld [vmem:[#allocation3 + $0x68] sm:$0xff]
    %v2226 = vperm.slane %v2222, 0
    %v2229 = vsel %vm1101, 0.0, 0
    %2231 = vmatpush.msra.mxu0 0.0
    %2232 = vmatpush.msra.mxu0 0.0
    %2233 = vmatpush.msra.mxu0 0.0
    %2234 = vmatpush.msra.mxu0 0.0
    %2235 = vmatpush.msra.mxu0 0.0
    %2236 = vmatpush.msra.mxu0 0.0
    %2237 = vmatpush.msra.mxu0 0.0
    %2238 = vmatpush.msra.mxu0 0.0
    %2239 = vmatpush.msra.mxu0 0.0
    %2240 = vmatpush.msra.mxu0 0.0
    %2241 = vmatpush.msra.mxu0 0.0
    %2242 = vmatpush.msra.mxu0 0.0
    %2243 = vmatpush.msra.mxu0 0.0
    %2244 = vmatpush.msra.mxu0 0.0
    %2245 = vmatpush.msra.mxu0 %v2221
    %2246 = vmatpush.msra.mxu0 %v2220
    %2247 = vmatmul.f32.gmra.mxu0 %v2229
    %v2248 = vpop.f32.mrf.mxu0
    %v2249 = vadd.f32 %v2226, %v2248
    %2250 = vmatmul.f32.gmra.mxu0 %v2229
    %v2251 = vpop.f32.mrf.mxu0
    %v2252 = vadd.f32 %v2226, %v2251
    %2253 = vdwg.mxu0
    %v2254 = vadd.f32 %v2223, %v2249
    %v2255 = vxor.u32 %v2254, 2147483648
    %v2256 = vmul.f32 %v2255, 1.442695
    %v2257 = vpow.pop %v2256
    %v2258 = vadd.f32 %v2257, 1.0
    %v2259 = vrcp.pop %v2258
    %v2260 = vmul.f32 %v2258, %v2259
    %v2261 = vsub.f32 1.0, %v2260
    %v2262 = vmul.f32 %v2259, %v2261
    %v2263 = vadd.f32 %v2259, %v2262
    %vm2264 = vweird.f32 %v2258
    %vm2265 = vweird.f32 %v2259
    %vm2266 = vmor %vm2264, %vm2265
    %v2267 = vsel %vm2266, %v2259, %v2263
    %v2268 = vand.u32 2147483647, %v2258
    %vm2269 = vcmp.eq.f32.partialorder %v2268, 8.507059e+37
    %v2270 = vand.u32 %v2258, 2147483648
    %v2271 = vor.u32 1.1754944e-38, %v2270
    %v2272 = vsel %vm2269, %v2271, %v2267
    %v2273 = vmul.f32 1.0, %v2272
    %2275 = vrot.lane.b32.xlu0 %v2249, 96
    %v2276 = vpop.permute.xlu0 %2275
    %v2278 = vmul.f32 %v2273, %v2276
    %2280 = vrot.lane.b32.xlu0 %v2278, 32
    %v2281 = vpop.permute.xlu0 %2280
    %v2283 = vadd.f32 %v2223, %v2281
    %v2284 = vtanh.pop %v2283
    %v2285 = vsub.f32 1.0, %v2273
    %2287 = vrot.lane.b32.xlu0 %v2284, 112
    %v2288 = vpop.permute.xlu0 %2287
    %v2290 = vmul.f32 %v2285, %v2288
    %v2291 = vmul.f32 %v2273, 0.0
    %v2292 = vadd.f32 %v2290, %v2291
    %2294 = vrot.lane.b32.xlu0 %v2252, 80
    %v2295 = vpop.permute.xlu0 %2294
    %v2297 = vadd.f32 %v2224, %v2295
    %v2298 = vxor.u32 %v2297, 2147483648
    %v2299 = vmul.f32 %v2298, 1.442695
    %v2300 = vpow.pop %v2299
    %v2301 = vadd.f32 %v2300, 1.0
    %v2302 = vrcp.pop %v2301
    %v2303 = vmul.f32 %v2301, %v2302
    %v2304 = vsub.f32 1.0, %v2303
    %v2305 = vmul.f32 %v2302, %v2304
    %v2306 = vadd.f32 %v2302, %v2305
    %vm2307 = vweird.f32 %v2301
    %vm2308 = vweird.f32 %v2302
    %vm2309 = vmor %vm2307, %vm2308
    %v2310 = vsel %vm2309, %v2302, %v2306
    %v2311 = vand.u32 2147483647, %v2301
    %vm2312 = vcmp.eq.f32.partialorder %v2311, 8.507059e+37
    %v2313 = vand.u32 %v2301, 2147483648
    %v2314 = vor.u32 1.1754944e-38, %v2313
    %v2315 = vsel %vm2312, %v2314, %v2310
    %v2316 = vmul.f32 1.0, %v2315
    %2317 = vrot.lane.b32.xlu0 %v2252, 48
    %v2318 = vpop.permute.xlu0 %2317
    %v2320 = vmul.f32 %v2316, %v2318
    %2322 = vrot.lane.b32.xlu0 %v2320, 32
    %v2323 = vpop.permute.xlu0 %2322
    %v2325 = vadd.f32 %v2224, %v2323
    %v2326 = vtanh.pop %v2325
    %v2327 = vsub.f32 1.0, %v2316
    %2329 = vrot.lane.b32.xlu0 %v2326, 112
    %v2330 = vpop.permute.xlu0 %2329
    %v2332 = vmul.f32 %v2327, %v2330
    %v2333 = vmul.f32 %v2316, 0.0
    %v2334 = vadd.f32 %v2332, %v2333
    %2336 = vrot.lane.b32.xlu0 %v2292, 112
    %v2337 = vpop.permute.xlu0 %2336
    %2339 = vst.msk [vmem:[#allocation4] sm:$0xff] %vm1101, %v2337
    %2341 = vrot.lane.b32.xlu0 %v2334, 112
    %v2342 = vpop.permute.xlu0 %2341
    %2344 = vst.msk [vmem:[#allocation5 + $0x68] sm:$0xff] %vm1101, %v2342
    %v2345 = vld [vmem:[#allocation2 + $0x8] sm:$0xff]
    %v2346 = vld [vmem:[#allocation3 + $0x60] sm:$0xff]
    %v2347 = vsel %vm1101, %v2337, 0
    %v2349 = vsel %vm1101, %v2342, 0
    %2351 = vmatpush.msra.mxu0 0.0
    %2352 = vmatpush.msra.mxu0 0.0
    %2353 = vmatpush.msra.mxu0 0.0
    %2354 = vmatpush.msra.mxu0 0.0
    %2355 = vmatpush.msra.mxu0 0.0
    %2356 = vmatpush.msra.mxu0 0.0
    %2357 = vmatpush.msra.mxu0 0.0
    %2358 = vmatpush.msra.mxu0 0.0
    %2359 = vmatpush.msra.mxu0 0.0
    %2360 = vmatpush.msra.mxu0 0.0
    %2361 = vmatpush.msra.mxu0 0.0
    %2362 = vmatpush.msra.mxu0 0.0
    %2363 = vmatpush.msra.mxu0 0.0
    %2364 = vmatpush.msra.mxu0 0.0
    %2365 = vmatpush.msra.mxu0 %v2221
    %2366 = vmatpush.msra.mxu0 %v2220
    %2367 = vmatmul.f32.gmra.mxu0 %v2347
    %v2368 = vpop.f32.mrf.mxu0
    %v2369 = vadd.f32 %v2226, %v2368
    %2370 = vmatmul.f32.gmra.mxu0 %v2349
    %v2371 = vpop.f32.mrf.mxu0
    %v2372 = vadd.f32 %v2226, %v2371
    %2373 = vdwg.mxu0
    %v2374 = vadd.f32 %v2345, %v2369
    %v2375 = vxor.u32 %v2374, 2147483648
    %v2376 = vmul.f32 %v2375, 1.442695
    %v2377 = vpow.pop %v2376
    %v2378 = vadd.f32 %v2377, 1.0
    %v2379 = vrcp.pop %v2378
    %v2380 = vmul.f32 %v2378, %v2379
    %v2381 = vsub.f32 1.0, %v2380
    %v2382 = vmul.f32 %v2379, %v2381
    %v2383 = vadd.f32 %v2379, %v2382
    %vm2384 = vweird.f32 %v2378
    %vm2385 = vweird.f32 %v2379
    %vm2386 = vmor %vm2384, %vm2385
    %v2387 = vsel %vm2386, %v2379, %v2383
    %v2388 = vand.u32 2147483647, %v2378
    %vm2389 = vcmp.eq.f32.partialorder %v2388, 8.507059e+37
    %v2390 = vand.u32 %v2378, 2147483648
    %v2391 = vor.u32 1.1754944e-38, %v2390
    %v2392 = vsel %vm2389, %v2391, %v2387
    %v2393 = vmul.f32 1.0, %v2392
    %2395 = vrot.lane.b32.xlu0 %v2369, 96
    %v2396 = vpop.permute.xlu0 %2395
    %v2398 = vmul.f32 %v2393, %v2396
    %2400 = vrot.lane.b32.xlu0 %v2398, 32
    %v2401 = vpop.permute.xlu0 %2400
    %v2403 = vadd.f32 %v2345, %v2401
    %v2404 = vtanh.pop %v2403
    %v2405 = vsub.f32 1.0, %v2393
    %2407 = vrot.lane.b32.xlu0 %v2404, 112
    %v2408 = vpop.permute.xlu0 %2407
    %v2410 = vmul.f32 %v2405, %v2408
    %v2411 = vmul.f32 %v2393, %v2292
    %v2412 = vadd.f32 %v2410, %v2411
    %2414 = vrot.lane.b32.xlu0 %v2372, 80
    %v2415 = vpop.permute.xlu0 %2414
    %v2417 = vadd.f32 %v2346, %v2415
    %v2418 = vxor.u32 %v2417, 2147483648
    %v2419 = vmul.f32 %v2418, 1.442695
    %v2420 = vpow.pop %v2419
    %v2421 = vadd.f32 %v2420, 1.0
    %v2422 = vrcp.pop %v2421
    %v2423 = vmul.f32 %v2421, %v2422
    %v2424 = vsub.f32 1.0, %v2423
    %v2425 = vmul.f32 %v2422, %v2424
    %v2426 = vadd.f32 %v2422, %v2425
    %vm2427 = vweird.f32 %v2421
    %vm2428 = vweird.f32 %v2422
    %vm2429 = vmor %vm2427, %vm2428
    %v2430 = vsel %vm2429, %v2422, %v2426
    %v2431 = vand.u32 2147483647, %v2421
    %vm2432 = vcmp.eq.f32.partialorder %v2431, 8.507059e+37
    %v2433 = vand.u32 %v2421, 2147483648
    %v2434 = vor.u32 1.1754944e-38, %v2433
    %v2435 = vsel %vm2432, %v2434, %v2430
    %v2436 = vmul.f32 1.0, %v2435
    %2437 = vrot.lane.b32.xlu0 %v2372, 48
    %v2438 = vpop.permute.xlu0 %2437
    %v2440 = vmul.f32 %v2436, %v2438
    %2442 = vrot.lane.b32.xlu0 %v2440, 32
    %v2443 = vpop.permute.xlu0 %2442
    %v2445 = vadd.f32 %v2346, %v2443
    %v2446 = vtanh.pop %v2445
    %v2447 = vsub.f32 1.0, %v2436
    %2449 = vrot.lane.b32.xlu0 %v2446, 112
    %v2450 = vpop.permute.xlu0 %2449
    %v2452 = vmul.f32 %v2447, %v2450
    %v2453 = vmul.f32 %v2436, %v2334
    %v2454 = vadd.f32 %v2452, %v2453
    %2456 = vrot.lane.b32.xlu0 %v2412, 112
    %v2457 = vpop.permute.xlu0 %2456
    %2459 = vst.msk [vmem:[#allocation4 + $0x8] sm:$0xff] %vm1101, %v2457
    %2461 = vrot.lane.b32.xlu0 %v2454, 112
    %v2462 = vpop.permute.xlu0 %2461
    %2464 = vst.msk [vmem:[#allocation5 + $0x60] sm:$0xff] %vm1101, %v2462
    %v2465 = vld [vmem:[#allocation2 + $0x10] sm:$0xff]
    %v2466 = vld [vmem:[#allocation3 + $0x58] sm:$0xff]
    %v2467 = vsel %vm1101, %v2457, 0
    %v2469 = vsel %vm1101, %v2462, 0
    %2471 = vmatpush.msra.mxu0 0.0
    %2472 = vmatpush.msra.mxu0 0.0
    %2473 = vmatpush.msra.mxu0 0.0
    %2474 = vmatpush.msra.mxu0 0.0
    %2475 = vmatpush.msra.mxu0 0.0
    %2476 = vmatpush.msra.mxu0 0.0
    %2477 = vmatpush.msra.mxu0 0.0
    %2478 = vmatpush.msra.mxu0 0.0
    %2479 = vmatpush.msra.mxu0 0.0
    %2480 = vmatpush.msra.mxu0 0.0
    %2481 = vmatpush.msra.mxu0 0.0
    %2482 = vmatpush.msra.mxu0 0.0
    %2483 = vmatpush.msra.mxu0 0.0
    %2484 = vmatpush.msra.mxu0 0.0
    %2485 = vmatpush.msra.mxu0 %v2221
    %2486 = vmatpush.msra.mxu0 %v2220
    %2487 = vmatmul.f32.gmra.mxu0 %v2467
    %v2488 = vpop.f32.mrf.mxu0
    %v2489 = vadd.f32 %v2226, %v2488
    %2490 = vmatmul.f32.gmra.mxu0 %v2469
    %v2491 = vpop.f32.mrf.mxu0
    %v2492 = vadd.f32 %v2226, %v2491
    %2493 = vdwg.mxu0
    %v2494 = vadd.f32 %v2465, %v2489
    %v2495 = vxor.u32 %v2494, 2147483648
    %v2496 = vmul.f32 %v2495, 1.442695
    %v2497 = vpow.pop %v2496
    %v2498 = vadd.f32 %v2497, 1.0
    %v2499 = vrcp.pop %v2498
    %v2500 = vmul.f32 %v2498, %v2499
    %v2501 = vsub.f32 1.0, %v2500
    %v2502 = vmul.f32 %v2499, %v2501
    %v2503 = vadd.f32 %v2499, %v2502
    %vm2504 = vweird.f32 %v2498
    %vm2505 = vweird.f32 %v2499
    %vm2506 = vmor %vm2504, %vm2505
    %v2507 = vsel %vm2506, %v2499, %v2503
    %v2508 = vand.u32 2147483647, %v2498
    %vm2509 = vcmp.eq.f32.partialorder %v2508, 8.507059e+37
    %v2510 = vand.u32 %v2498, 2147483648
    %v2511 = vor.u32 1.1754944e-38, %v2510
    %v2512 = vsel %vm2509, %v2511, %v2507
    %v2513 = vmul.f32 1.0, %v2512
    %2515 = vrot.lane.b32.xlu0 %v2489, 96
    %v2516 = vpop.permute.xlu0 %2515
    %v2518 = vmul.f32 %v2513, %v2516
    %2520 = vrot.lane.b32.xlu0 %v2518, 32
    %v2521 = vpop.permute.xlu0 %2520
    %v2523 = vadd.f32 %v2465, %v2521
    %v2524 = vtanh.pop %v2523
    %v2525 = vsub.f32 1.0, %v2513
    %2527 = vrot.lane.b32.xlu0 %v2524, 112
    %v2528 = vpop.permute.xlu0 %2527
    %v2530 = vmul.f32 %v2525, %v2528
    %v2531 = vmul.f32 %v2513, %v2412
    %v2532 = vadd.f32 %v2530, %v2531
    %2534 = vrot.lane.b32.xlu0 %v2492, 80
    %v2535 = vpop.permute.xlu0 %2534
    %v2537 = vadd.f32 %v2466, %v2535
    %v2538 = vxor.u32 %v2537, 2147483648
    %v2539 = vmul.f32 %v2538, 1.442695
    %v2540 = vpow.pop %v2539
    %v2541 = vadd.f32 %v2540, 1.0
    %v2542 = vrcp.pop %v2541
    %v2543 = vmul.f32 %v2541, %v2542
    %v2544 = vsub.f32 1.0, %v2543
    %v2545 = vmul.f32 %v2542, %v2544
    %v2546 = vadd.f32 %v2542, %v2545
    %vm2547 = vweird.f32 %v2541
    %vm2548 = vweird.f32 %v2542
    %vm2549 = vmor %vm2547, %vm2548
    %v2550 = vsel %vm2549, %v2542, %v2546
    %v2551 = vand.u32 2147483647, %v2541
    %vm2552 = vcmp.eq.f32.partialorder %v2551, 8.507059e+37
    %v2553 = vand.u32 %v2541, 2147483648
    %v2554 = vor.u32 1.1754944e-38, %v2553
    %v2555 = vsel %vm2552, %v2554, %v2550
    %v2556 = vmul.f32 1.0, %v2555
    %2557 = vrot.lane.b32.xlu0 %v2492, 48
    %v2558 = vpop.permute.xlu0 %2557
    %v2560 = vmul.f32 %v2556, %v2558
    %2562 = vrot.lane.b32.xlu0 %v2560, 32
    %v2563 = vpop.permute.xlu0 %2562
    %v2565 = vadd.f32 %v2466, %v2563
    %v2566 = vtanh.pop %v2565
    %v2567 = vsub.f32 1.0, %v2556
    %2569 = vrot.lane.b32.xlu0 %v2566, 112
    %v2570 = vpop.permute.xlu0 %2569
    %v2572 = vmul.f32 %v2567, %v2570
    %v2573 = vmul.f32 %v2556, %v2454
    %v2574 = vadd.f32 %v2572, %v2573
    %2576 = vrot.lane.b32.xlu0 %v2532, 112
    %v2577 = vpop.permute.xlu0 %2576
    %2579 = vst.msk [vmem:[#allocation4 + $0x10] sm:$0xff] %vm1101, %v2577
    %2581 = vrot.lane.b32.xlu0 %v2574, 112
    %v2582 = vpop.permute.xlu0 %2581
    %2584 = vst.msk [vmem:[#allocation5 + $0x58] sm:$0xff] %vm1101, %v2582
    %v2585 = vld [vmem:[#allocation2 + $0x18] sm:$0xff]
    %v2586 = vld [vmem:[#allocation3 + $0x50] sm:$0xff]
    %v2587 = vsel %vm1101, %v2577, 0
    %v2589 = vsel %vm1101, %v2582, 0
    %2591 = vmatpush.msra.mxu0 0.0
    %2592 = vmatpush.msra.mxu0 0.0
    %2593 = vmatpush.msra.mxu0 0.0
    %2594 = vmatpush.msra.mxu0 0.0
    %2595 = vmatpush.msra.mxu0 0.0
    %2596 = vmatpush.msra.mxu0 0.0
    %2597 = vmatpush.msra.mxu0 0.0
    %2598 = vmatpush.msra.mxu0 0.0
    %2599 = vmatpush.msra.mxu0 0.0
    %2600 = vmatpush.msra.mxu0 0.0
    %2601 = vmatpush.msra.mxu0 0.0
    %2602 = vmatpush.msra.mxu0 0.0
    %2603 = vmatpush.msra.mxu0 0.0
    %2604 = vmatpush.msra.mxu0 0.0
    %2605 = vmatpush.msra.mxu0 %v2221
    %2606 = vmatpush.msra.mxu0 %v2220
    %2607 = vmatmul.f32.gmra.mxu0 %v2587
    %v2608 = vpop.f32.mrf.mxu0
    %v2609 = vadd.f32 %v2226, %v2608
    %2610 = vmatmul.f32.gmra.mxu0 %v2589
    %v2611 = vpop.f32.mrf.mxu0
    %v2612 = vadd.f32 %v2226, %v2611
    %2613 = vdwg.mxu0
    %v2614 = vadd.f32 %v2585, %v2609
    %v2615 = vxor.u32 %v2614, 2147483648
    %v2616 = vmul.f32 %v2615, 1.442695
    %v2617 = vpow.pop %v2616
    %v2618 = vadd.f32 %v2617, 1.0
    %v2619 = vrcp.pop %v2618
    %v2620 = vmul.f32 %v2618, %v2619
    %v2621 = vsub.f32 1.0, %v2620
    %v2622 = vmul.f32 %v2619, %v2621
    %v2623 = vadd.f32 %v2619, %v2622
    %vm2624 = vweird.f32 %v2618
    %vm2625 = vweird.f32 %v2619
    %vm2626 = vmor %vm2624, %vm2625
    %v2627 = vsel %vm2626, %v2619, %v2623
    %v2628 = vand.u32 2147483647, %v2618
    %vm2629 = vcmp.eq.f32.partialorder %v2628, 8.507059e+37
    %v2630 = vand.u32 %v2618, 2147483648
    %v2631 = vor.u32 1.1754944e-38, %v2630
    %v2632 = vsel %vm2629, %v2631, %v2627
    %v2633 = vmul.f32 1.0, %v2632
    %2635 = vrot.lane.b32.xlu0 %v2609, 96
    %v2636 = vpop.permute.xlu0 %2635
    %v2638 = vmul.f32 %v2633, %v2636
    %2640 = vrot.lane.b32.xlu0 %v2638, 32
    %v2641 = vpop.permute.xlu0 %2640
    %v2643 = vadd.f32 %v2585, %v2641
    %v2644 = vtanh.pop %v2643
    %v2645 = vsub.f32 1.0, %v2633
    %2647 = vrot.lane.b32.xlu0 %v2644, 112
    %v2648 = vpop.permute.xlu0 %2647
    %v2650 = vmul.f32 %v2645, %v2648
    %v2651 = vmul.f32 %v2633, %v2532
    %v2652 = vadd.f32 %v2650, %v2651
    %2654 = vrot.lane.b32.xlu0 %v2612, 80
    %v2655 = vpop.permute.xlu0 %2654
    %v2657 = vadd.f32 %v2586, %v2655
    %v2658 = vxor.u32 %v2657, 2147483648
    %v2659 = vmul.f32 %v2658, 1.442695
    %v2660 = vpow.pop %v2659
    %v2661 = vadd.f32 %v2660, 1.0
    %v2662 = vrcp.pop %v2661
    %v2663 = vmul.f32 %v2661, %v2662
    %v2664 = vsub.f32 1.0, %v2663
    %v2665 = vmul.f32 %v2662, %v2664
    %v2666 = vadd.f32 %v2662, %v2665
    %vm2667 = vweird.f32 %v2661
    %vm2668 = vweird.f32 %v2662
    %vm2669 = vmor %vm2667, %vm2668
    %v2670 = vsel %vm2669, %v2662, %v2666
    %v2671 = vand.u32 2147483647, %v2661
    %vm2672 = vcmp.eq.f32.partialorder %v2671, 8.507059e+37
    %v2673 = vand.u32 %v2661, 2147483648
    %v2674 = vor.u32 1.1754944e-38, %v2673
    %v2675 = vsel %vm2672, %v2674, %v2670
    %v2676 = vmul.f32 1.0, %v2675
    %2677 = vrot.lane.b32.xlu0 %v2612, 48
    %v2678 = vpop.permute.xlu0 %2677
    %v2680 = vmul.f32 %v2676, %v2678
    %2682 = vrot.lane.b32.xlu0 %v2680, 32
    %v2683 = vpop.permute.xlu0 %2682
    %v2685 = vadd.f32 %v2586, %v2683
    %v2686 = vtanh.pop %v2685
    %v2687 = vsub.f32 1.0, %v2676
    %2689 = vrot.lane.b32.xlu0 %v2686, 112
    %v2690 = vpop.permute.xlu0 %2689
    %v2692 = vmul.f32 %v2687, %v2690
    %v2693 = vmul.f32 %v2676, %v2574
    %v2694 = vadd.f32 %v2692, %v2693
    %2696 = vrot.lane.b32.xlu0 %v2652, 112
    %v2697 = vpop.permute.xlu0 %2696
    %2699 = vst.msk [vmem:[#allocation4 + $0x18] sm:$0xff] %vm1101, %v2697
    %2701 = vrot.lane.b32.xlu0 %v2694, 112
    %v2702 = vpop.permute.xlu0 %2701
    %2704 = vst.msk [vmem:[#allocation5 + $0x50] sm:$0xff] %vm1101, %v2702
    %v2705 = vld [vmem:[#allocation2 + $0x20] sm:$0xff]
    %v2706 = vld [vmem:[#allocation3 + $0x48] sm:$0xff]
    %v2707 = vsel %vm1101, %v2697, 0
    %v2709 = vsel %vm1101, %v2702, 0
    %2711 = vmatpush.msra.mxu0 0.0
    %2712 = vmatpush.msra.mxu0 0.0
    %2713 = vmatpush.msra.mxu0 0.0
    %2714 = vmatpush.msra.mxu0 0.0
    %2715 = vmatpush.msra.mxu0 0.0
    %2716 = vmatpush.msra.mxu0 0.0
    %2717 = vmatpush.msra.mxu0 0.0
    %2718 = vmatpush.msra.mxu0 0.0
    %2719 = vmatpush.msra.mxu0 0.0
    %2720 = vmatpush.msra.mxu0 0.0
    %2721 = vmatpush.msra.mxu0 0.0
    %2722 = vmatpush.msra.mxu0 0.0
    %2723 = vmatpush.msra.mxu0 0.0
    %2724 = vmatpush.msra.mxu0 0.0
    %2725 = vmatpush.msra.mxu0 %v2221
    %2726 = vmatpush.msra.mxu0 %v2220
    %2727 = vmatmul.f32.gmra.mxu0 %v2707
    %v2728 = vpop.f32.mrf.mxu0
    %v2729 = vadd.f32 %v2226, %v2728
    %2730 = vmatmul.f32.gmra.mxu0 %v2709
    %v2731 = vpop.f32.mrf.mxu0
    %v2732 = vadd.f32 %v2226, %v2731
    %2733 = vdwg.mxu0
    %v2734 = vadd.f32 %v2705, %v2729
    %v2735 = vxor.u32 %v2734, 2147483648
    %v2736 = vmul.f32 %v2735, 1.442695
    %v2737 = vpow.pop %v2736
    %v2738 = vadd.f32 %v2737, 1.0
    %v2739 = vrcp.pop %v2738
    %v2740 = vmul.f32 %v2738, %v2739
    %v2741 = vsub.f32 1.0, %v2740
    %v2742 = vmul.f32 %v2739, %v2741
    %v2743 = vadd.f32 %v2739, %v2742
    %vm2744 = vweird.f32 %v2738
    %vm2745 = vweird.f32 %v2739
    %vm2746 = vmor %vm2744, %vm2745
    %v2747 = vsel %vm2746, %v2739, %v2743
    %v2748 = vand.u32 2147483647, %v2738
    %vm2749 = vcmp.eq.f32.partialorder %v2748, 8.507059e+37
    %v2750 = vand.u32 %v2738, 2147483648
    %v2751 = vor.u32 1.1754944e-38, %v2750
    %v2752 = vsel %vm2749, %v2751, %v2747
    %v2753 = vmul.f32 1.0, %v2752
    %2755 = vrot.lane.b32.xlu0 %v2729, 96
    %v2756 = vpop.permute.xlu0 %2755
    %v2758 = vmul.f32 %v2753, %v2756
    %2760 = vrot.lane.b32.xlu0 %v2758, 32
    %v2761 = vpop.permute.xlu0 %2760
    %v2763 = vadd.f32 %v2705, %v2761
    %v2764 = vtanh.pop %v2763
    %v2765 = vsub.f32 1.0, %v2753
    %2767 = vrot.lane.b32.xlu0 %v2764, 112
    %v2768 = vpop.permute.xlu0 %2767
    %v2770 = vmul.f32 %v2765, %v2768
    %v2771 = vmul.f32 %v2753, %v2652
    %v2772 = vadd.f32 %v2770, %v2771
    %2774 = vrot.lane.b32.xlu0 %v2732, 80
    %v2775 = vpop.permute.xlu0 %2774
    %v2777 = vadd.f32 %v2706, %v2775
    %v2778 = vxor.u32 %v2777, 2147483648
    %v2779 = vmul.f32 %v2778, 1.442695
    %v2780 = vpow.pop %v2779
    %v2781 = vadd.f32 %v2780, 1.0
    %v2782 = vrcp.pop %v2781
    %v2783 = vmul.f32 %v2781, %v2782
    %v2784 = vsub.f32 1.0, %v2783
    %v2785 = vmul.f32 %v2782, %v2784
    %v2786 = vadd.f32 %v2782, %v2785
    %vm2787 = vweird.f32 %v2781
    %vm2788 = vweird.f32 %v2782
    %vm2789 = vmor %vm2787, %vm2788
    %v2790 = vsel %vm2789, %v2782, %v2786
    %v2791 = vand.u32 2147483647, %v2781
    %vm2792 = vcmp.eq.f32.partialorder %v2791, 8.507059e+37
    %v2793 = vand.u32 %v2781, 2147483648
    %v2794 = vor.u32 1.1754944e-38, %v2793
    %v2795 = vsel %vm2792, %v2794, %v2790
    %v2796 = vmul.f32 1.0, %v2795
    %2797 = vrot.lane.b32.xlu0 %v2732, 48
    %v2798 = vpop.permute.xlu0 %2797
    %v2800 = vmul.f32 %v2796, %v2798
    %2802 = vrot.lane.b32.xlu0 %v2800, 32
    %v2803 = vpop.permute.xlu0 %2802
    %v2805 = vadd.f32 %v2706, %v2803
    %v2806 = vtanh.pop %v2805
    %v2807 = vsub.f32 1.0, %v2796
    %2809 = vrot.lane.b32.xlu0 %v2806, 112
    %v2810 = vpop.permute.xlu0 %2809
    %v2812 = vmul.f32 %v2807, %v2810
    %v2813 = vmul.f32 %v2796, %v2694
    %v2814 = vadd.f32 %v2812, %v2813
    %2816 = vrot.lane.b32.xlu0 %v2772, 112
    %v2817 = vpop.permute.xlu0 %2816
    %2819 = vst.msk [vmem:[#allocation4 + $0x20] sm:$0xff] %vm1101, %v2817
    %2821 = vrot.lane.b32.xlu0 %v2814, 112
    %v2822 = vpop.permute.xlu0 %2821
    %2824 = vst.msk [vmem:[#allocation5 + $0x48] sm:$0xff] %vm1101, %v2822
    %v2825 = vld [vmem:[#allocation2 + $0x28] sm:$0xff]
    %v2826 = vld [vmem:[#allocation3 + $0x40] sm:$0xff]
    %v2827 = vsel %vm1101, %v2817, 0
    %v2829 = vsel %vm1101, %v2822, 0
    %2831 = vmatpush.msra.mxu0 0.0
    %2832 = vmatpush.msra.mxu0 0.0
    %2833 = vmatpush.msra.mxu0 0.0
    %2834 = vmatpush.msra.mxu0 0.0
    %2835 = vmatpush.msra.mxu0 0.0
    %2836 = vmatpush.msra.mxu0 0.0
    %2837 = vmatpush.msra.mxu0 0.0
    %2838 = vmatpush.msra.mxu0 0.0
    %2839 = vmatpush.msra.mxu0 0.0
    %2840 = vmatpush.msra.mxu0 0.0
    %2841 = vmatpush.msra.mxu0 0.0
    %2842 = vmatpush.msra.mxu0 0.0
    %2843 = vmatpush.msra.mxu0 0.0
    %2844 = vmatpush.msra.mxu0 0.0
    %2845 = vmatpush.msra.mxu0 %v2221
    %2846 = vmatpush.msra.mxu0 %v2220
    %2847 = vmatmul.f32.gmra.mxu0 %v2827
    %v2848 = vpop.f32.mrf.mxu0
    %v2849 = vadd.f32 %v2226, %v2848
    %2850 = vmatmul.f32.gmra.mxu0 %v2829
    %v2851 = vpop.f32.mrf.mxu0
    %v2852 = vadd.f32 %v2226, %v2851
    %2853 = vdwg.mxu0
    %v2854 = vadd.f32 %v2825, %v2849
    %v2855 = vxor.u32 %v2854, 2147483648
    %v2856 = vmul.f32 %v2855, 1.442695
    %v2857 = vpow.pop %v2856
    %v2858 = vadd.f32 %v2857, 1.0
    %v2859 = vrcp.pop %v2858
    %v2860 = vmul.f32 %v2858, %v2859
    %v2861 = vsub.f32 1.0, %v2860
    %v2862 = vmul.f32 %v2859, %v2861
    %v2863 = vadd.f32 %v2859, %v2862
    %vm2864 = vweird.f32 %v2858
    %vm2865 = vweird.f32 %v2859
    %vm2866 = vmor %vm2864, %vm2865
    %v2867 = vsel %vm2866, %v2859, %v2863
    %v2868 = vand.u32 2147483647, %v2858
    %vm2869 = vcmp.eq.f32.partialorder %v2868, 8.507059e+37
    %v2870 = vand.u32 %v2858, 2147483648
    %v2871 = vor.u32 1.1754944e-38, %v2870
    %v2872 = vsel %vm2869, %v2871, %v2867
    %v2873 = vmul.f32 1.0, %v2872
    %2875 = vrot.lane.b32.xlu0 %v2849, 96
    %v2876 = vpop.permute.xlu0 %2875
    %v2878 = vmul.f32 %v2873, %v2876
    %2880 = vrot.lane.b32.xlu0 %v2878, 32
    %v2881 = vpop.permute.xlu0 %2880
    %v2883 = vadd.f32 %v2825, %v2881
    %v2884 = vtanh.pop %v2883
    %v2885 = vsub.f32 1.0, %v2873
    %2887 = vrot.lane.b32.xlu0 %v2884, 112
    %v2888 = vpop.permute.xlu0 %2887
    %v2890 = vmul.f32 %v2885, %v2888
    %v2891 = vmul.f32 %v2873, %v2772
    %v2892 = vadd.f32 %v2890, %v2891
    %2894 = vrot.lane.b32.xlu0 %v2852, 80
    %v2895 = vpop.permute.xlu0 %2894
    %v2897 = vadd.f32 %v2826, %v2895
    %v2898 = vxor.u32 %v2897, 2147483648
    %v2899 = vmul.f32 %v2898, 1.442695
    %v2900 = vpow.pop %v2899
    %v2901 = vadd.f32 %v2900, 1.0
    %v2902 = vrcp.pop %v2901
    %v2903 = vmul.f32 %v2901, %v2902
    %v2904 = vsub.f32 1.0, %v2903
    %v2905 = vmul.f32 %v2902, %v2904
    %v2906 = vadd.f32 %v2902, %v2905
    %vm2907 = vweird.f32 %v2901
    %vm2908 = vweird.f32 %v2902
    %vm2909 = vmor %vm2907, %vm2908
    %v2910 = vsel %vm2909, %v2902, %v2906
    %v2911 = vand.u32 2147483647, %v2901
    %vm2912 = vcmp.eq.f32.partialorder %v2911, 8.507059e+37
    %v2913 = vand.u32 %v2901, 2147483648
    %v2914 = vor.u32 1.1754944e-38, %v2913
    %v2915 = vsel %vm2912, %v2914, %v2910
    %v2916 = vmul.f32 1.0, %v2915
    %2917 = vrot.lane.b32.xlu0 %v2852, 48
    %v2918 = vpop.permute.xlu0 %2917
    %v2920 = vmul.f32 %v2916, %v2918
    %2922 = vrot.lane.b32.xlu0 %v2920, 32
    %v2923 = vpop.permute.xlu0 %2922
    %v2925 = vadd.f32 %v2826, %v2923
    %v2926 = vtanh.pop %v2925
    %v2927 = vsub.f32 1.0, %v2916
    %2929 = vrot.lane.b32.xlu0 %v2926, 112
    %v2930 = vpop.permute.xlu0 %2929
    %v2932 = vmul.f32 %v2927, %v2930
    %v2933 = vmul.f32 %v2916, %v2814
    %v2934 = vadd.f32 %v2932, %v2933
    %2936 = vrot.lane.b32.xlu0 %v2892, 112
    %v2937 = vpop.permute.xlu0 %2936
    %2939 = vst.msk [vmem:[#allocation4 + $0x28] sm:$0xff] %vm1101, %v2937
    %2941 = vrot.lane.b32.xlu0 %v2934, 112
    %v2942 = vpop.permute.xlu0 %2941
    %2944 = vst.msk [vmem:[#allocation5 + $0x40] sm:$0xff] %vm1101, %v2942
    %v2945 = vld [vmem:[#allocation2 + $0x30] sm:$0xff]
    %v2946 = vld [vmem:[#allocation3 + $0x38] sm:$0xff]
    %v2947 = vsel %vm1101, %v2937, 0
    %v2949 = vsel %vm1101, %v2942, 0
    %2951 = vmatpush.msra.mxu0 0.0
    %2952 = vmatpush.msra.mxu0 0.0
    %2953 = vmatpush.msra.mxu0 0.0
    %2954 = vmatpush.msra.mxu0 0.0
    %2955 = vmatpush.msra.mxu0 0.0
    %2956 = vmatpush.msra.mxu0 0.0
    %2957 = vmatpush.msra.mxu0 0.0
    %2958 = vmatpush.msra.mxu0 0.0
    %2959 = vmatpush.msra.mxu0 0.0
    %2960 = vmatpush.msra.mxu0 0.0
    %2961 = vmatpush.msra.mxu0 0.0
    %2962 = vmatpush.msra.mxu0 0.0
    %2963 = vmatpush.msra.mxu0 0.0
    %2964 = vmatpush.msra.mxu0 0.0
    %2965 = vmatpush.msra.mxu0 %v2221
    %2966 = vmatpush.msra.mxu0 %v2220
    %2967 = vmatmul.f32.gmra.mxu0 %v2947
    %v2968 = vpop.f32.mrf.mxu0
    %v2969 = vadd.f32 %v2226, %v2968
    %2970 = vmatmul.f32.gmra.mxu0 %v2949
    %v2971 = vpop.f32.mrf.mxu0
    %v2972 = vadd.f32 %v2226, %v2971
    %2973 = vdwg.mxu0
    %v2974 = vadd.f32 %v2945, %v2969
    %v2975 = vxor.u32 %v2974, 2147483648
    %v2976 = vmul.f32 %v2975, 1.442695
    %v2977 = vpow.pop %v2976
    %v2978 = vadd.f32 %v2977, 1.0
    %v2979 = vrcp.pop %v2978
    %v2980 = vmul.f32 %v2978, %v2979
    %v2981 = vsub.f32 1.0, %v2980
    %v2982 = vmul.f32 %v2979, %v2981
    %v2983 = vadd.f32 %v2979, %v2982
    %vm2984 = vweird.f32 %v2978
    %vm2985 = vweird.f32 %v2979
    %vm2986 = vmor %vm2984, %vm2985
    %v2987 = vsel %vm2986, %v2979, %v2983
    %v2988 = vand.u32 2147483647, %v2978
    %vm2989 = vcmp.eq.f32.partialorder %v2988, 8.507059e+37
    %v2990 = vand.u32 %v2978, 2147483648
    %v2991 = vor.u32 1.1754944e-38, %v2990
    %v2992 = vsel %vm2989, %v2991, %v2987
    %v2993 = vmul.f32 1.0, %v2992
    %2995 = vrot.lane.b32.xlu0 %v2969, 96
    %v2996 = vpop.permute.xlu0 %2995
    %v2998 = vmul.f32 %v2993, %v2996
    %3000 = vrot.lane.b32.xlu0 %v2998, 32
    %v3001 = vpop.permute.xlu0 %3000
    %v3003 = vadd.f32 %v2945, %v3001
    %v3004 = vtanh.pop %v3003
    %v3005 = vsub.f32 1.0, %v2993
    %3007 = vrot.lane.b32.xlu0 %v3004, 112
    %v3008 = vpop.permute.xlu0 %3007
    %v3010 = vmul.f32 %v3005, %v3008
    %v3011 = vmul.f32 %v2993, %v2892
    %v3012 = vadd.f32 %v3010, %v3011
    %3014 = vrot.lane.b32.xlu0 %v2972, 80
    %v3015 = vpop.permute.xlu0 %3014
    %v3017 = vadd.f32 %v2946, %v3015
    %v3018 = vxor.u32 %v3017, 2147483648
    %v3019 = vmul.f32 %v3018, 1.442695
    %v3020 = vpow.pop %v3019
    %v3021 = vadd.f32 %v3020, 1.0
    %v3022 = vrcp.pop %v3021
    %v3023 = vmul.f32 %v3021, %v3022
    %v3024 = vsub.f32 1.0, %v3023
    %v3025 = vmul.f32 %v3022, %v3024
    %v3026 = vadd.f32 %v3022, %v3025
    %vm3027 = vweird.f32 %v3021
    %vm3028 = vweird.f32 %v3022
    %vm3029 = vmor %vm3027, %vm3028
    %v3030 = vsel %vm3029, %v3022, %v3026
    %v3031 = vand.u32 2147483647, %v3021
    %vm3032 = vcmp.eq.f32.partialorder %v3031, 8.507059e+37
    %v3033 = vand.u32 %v3021, 2147483648
    %v3034 = vor.u32 1.1754944e-38, %v3033
    %v3035 = vsel %vm3032, %v3034, %v3030
    %v3036 = vmul.f32 1.0, %v3035
    %3037 = vrot.lane.b32.xlu0 %v2972, 48
    %v3038 = vpop.permute.xlu0 %3037
    %v3040 = vmul.f32 %v3036, %v3038
    %3042 = vrot.lane.b32.xlu0 %v3040, 32
    %v3043 = vpop.permute.xlu0 %3042
    %v3045 = vadd.f32 %v2946, %v3043
    %v3046 = vtanh.pop %v3045
    %v3047 = vsub.f32 1.0, %v3036
    %3049 = vrot.lane.b32.xlu0 %v3046, 112
    %v3050 = vpop.permute.xlu0 %3049
    %v3052 = vmul.f32 %v3047, %v3050
    %v3053 = vmul.f32 %v3036, %v2934
    %v3054 = vadd.f32 %v3052, %v3053
    %3056 = vrot.lane.b32.xlu0 %v3012, 112
    %v3057 = vpop.permute.xlu0 %3056
    %3059 = vst.msk [vmem:[#allocation4 + $0x30] sm:$0xff] %vm1101, %v3057
    %3061 = vrot.lane.b32.xlu0 %v3054, 112
    %v3062 = vpop.permute.xlu0 %3061
    %3064 = vst.msk [vmem:[#allocation5 + $0x38] sm:$0xff] %vm1101, %v3062
    %v3065 = vld [vmem:[#allocation2 + $0x38] sm:$0xff]
    %v3066 = vld [vmem:[#allocation3 + $0x30] sm:$0xff]
    %v3067 = vsel %vm1101, %v3057, 0
    %v3069 = vsel %vm1101, %v3062, 0
    %3071 = vmatpush.msra.mxu0 0.0
    %3072 = vmatpush.msra.mxu0 0.0
    %3073 = vmatpush.msra.mxu0 0.0
    %3074 = vmatpush.msra.mxu0 0.0
    %3075 = vmatpush.msra.mxu0 0.0
    %3076 = vmatpush.msra.mxu0 0.0
    %3077 = vmatpush.msra.mxu0 0.0
    %3078 = vmatpush.msra.mxu0 0.0
    %3079 = vmatpush.msra.mxu0 0.0
    %3080 = vmatpush.msra.mxu0 0.0
    %3081 = vmatpush.msra.mxu0 0.0
    %3082 = vmatpush.msra.mxu0 0.0
    %3083 = vmatpush.msra.mxu0 0.0
    %3084 = vmatpush.msra.mxu0 0.0
    %3085 = vmatpush.msra.mxu0 %v2221
    %3086 = vmatpush.msra.mxu0 %v2220
    %3087 = vmatmul.f32.gmra.mxu0 %v3067
    %v3088 = vpop.f32.mrf.mxu0
    %v3089 = vadd.f32 %v2226, %v3088
    %3090 = vmatmul.f32.gmra.mxu0 %v3069
    %v3091 = vpop.f32.mrf.mxu0
    %v3092 = vadd.f32 %v2226, %v3091
    %3093 = vdwg.mxu0
    %v3094 = vadd.f32 %v3065, %v3089
    %v3095 = vxor.u32 %v3094, 2147483648
    %v3096 = vmul.f32 %v3095, 1.442695
    %v3097 = vpow.pop %v3096
    %v3098 = vadd.f32 %v3097, 1.0
    %v3099 = vrcp.pop %v3098
    %v3100 = vmul.f32 %v3098, %v3099
    %v3101 = vsub.f32 1.0, %v3100
    %v3102 = vmul.f32 %v3099, %v3101
    %v3103 = vadd.f32 %v3099, %v3102
    %vm3104 = vweird.f32 %v3098
    %vm3105 = vweird.f32 %v3099
    %vm3106 = vmor %vm3104, %vm3105
    %v3107 = vsel %vm3106, %v3099, %v3103
    %v3108 = vand.u32 2147483647, %v3098
    %vm3109 = vcmp.eq.f32.partialorder %v3108, 8.507059e+37
    %v3110 = vand.u32 %v3098, 2147483648
    %v3111 = vor.u32 1.1754944e-38, %v3110
    %v3112 = vsel %vm3109, %v3111, %v3107
    %v3113 = vmul.f32 1.0, %v3112
    %3115 = vrot.lane.b32.xlu0 %v3089, 96
    %v3116 = vpop.permute.xlu0 %3115
    %v3118 = vmul.f32 %v3113, %v3116
    %3120 = vrot.lane.b32.xlu0 %v3118, 32
    %v3121 = vpop.permute.xlu0 %3120
    %v3123 = vadd.f32 %v3065, %v3121
    %v3124 = vtanh.pop %v3123
    %v3125 = vsub.f32 1.0, %v3113
    %3127 = vrot.lane.b32.xlu0 %v3124, 112
    %v3128 = vpop.permute.xlu0 %3127
    %v3130 = vmul.f32 %v3125, %v3128
    %v3131 = vmul.f32 %v3113, %v3012
    %v3132 = vadd.f32 %v3130, %v3131
    %3134 = vrot.lane.b32.xlu0 %v3092, 80
    %v3135 = vpop.permute.xlu0 %3134
    %v3137 = vadd.f32 %v3066, %v3135
    %v3138 = vxor.u32 %v3137, 2147483648
    %v3139 = vmul.f32 %v3138, 1.442695
    %v3140 = vpow.pop %v3139
    %v3141 = vadd.f32 %v3140, 1.0
    %v3142 = vrcp.pop %v3141
    %v3143 = vmul.f32 %v3141, %v3142
    %v3144 = vsub.f32 1.0, %v3143
    %v3145 = vmul.f32 %v3142, %v3144
    %v3146 = vadd.f32 %v3142, %v3145
    %vm3147 = vweird.f32 %v3141
    %vm3148 = vweird.f32 %v3142
    %vm3149 = vmor %vm3147, %vm3148
    %v3150 = vsel %vm3149, %v3142, %v3146
    %v3151 = vand.u32 2147483647, %v3141
    %vm3152 = vcmp.eq.f32.partialorder %v3151, 8.507059e+37
    %v3153 = vand.u32 %v3141, 2147483648
    %v3154 = vor.u32 1.1754944e-38, %v3153
    %v3155 = vsel %vm3152, %v3154, %v3150
    %v3156 = vmul.f32 1.0, %v3155
    %3157 = vrot.lane.b32.xlu0 %v3092, 48
    %v3158 = vpop.permute.xlu0 %3157
    %v3160 = vmul.f32 %v3156, %v3158
    %3162 = vrot.lane.b32.xlu0 %v3160, 32
    %v3163 = vpop.permute.xlu0 %3162
    %v3165 = vadd.f32 %v3066, %v3163
    %v3166 = vtanh.pop %v3165
    %v3167 = vsub.f32 1.0, %v3156
    %3169 = vrot.lane.b32.xlu0 %v3166, 112
    %v3170 = vpop.permute.xlu0 %3169
    %v3172 = vmul.f32 %v3167, %v3170
    %v3173 = vmul.f32 %v3156, %v3054
    %v3174 = vadd.f32 %v3172, %v3173
    %3176 = vrot.lane.b32.xlu0 %v3132, 112
    %v3177 = vpop.permute.xlu0 %3176
    %3179 = vst.msk [vmem:[#allocation4 + $0x38] sm:$0xff] %vm1101, %v3177
    %3181 = vrot.lane.b32.xlu0 %v3174, 112
    %v3182 = vpop.permute.xlu0 %3181
    %3184 = vst.msk [vmem:[#allocation5 + $0x30] sm:$0xff] %vm1101, %v3182
    %v3185 = vld [vmem:[#allocation2 + $0x40] sm:$0xff]
    %v3186 = vld [vmem:[#allocation3 + $0x28] sm:$0xff]
    %v3187 = vsel %vm1101, %v3177, 0
    %v3189 = vsel %vm1101, %v3182, 0
    %3191 = vmatpush.msra.mxu0 0.0
    %3192 = vmatpush.msra.mxu0 0.0
    %3193 = vmatpush.msra.mxu0 0.0
    %3194 = vmatpush.msra.mxu0 0.0
    %3195 = vmatpush.msra.mxu0 0.0
    %3196 = vmatpush.msra.mxu0 0.0
    %3197 = vmatpush.msra.mxu0 0.0
    %3198 = vmatpush.msra.mxu0 0.0
    %3199 = vmatpush.msra.mxu0 0.0
    %3200 = vmatpush.msra.mxu0 0.0
    %3201 = vmatpush.msra.mxu0 0.0
    %3202 = vmatpush.msra.mxu0 0.0
    %3203 = vmatpush.msra.mxu0 0.0
    %3204 = vmatpush.msra.mxu0 0.0
    %3205 = vmatpush.msra.mxu0 %v2221
    %3206 = vmatpush.msra.mxu0 %v2220
    %3207 = vmatmul.f32.gmra.mxu0 %v3187
    %v3208 = vpop.f32.mrf.mxu0
    %v3209 = vadd.f32 %v2226, %v3208
    %3210 = vmatmul.f32.gmra.mxu0 %v3189
    %v3211 = vpop.f32.mrf.mxu0
    %v3212 = vadd.f32 %v2226, %v3211
    %3213 = vdwg.mxu0
    %v3214 = vadd.f32 %v3185, %v3209
    %v3215 = vxor.u32 %v3214, 2147483648
    %v3216 = vmul.f32 %v3215, 1.442695
    %v3217 = vpow.pop %v3216
    %v3218 = vadd.f32 %v3217, 1.0
    %v3219 = vrcp.pop %v3218
    %v3220 = vmul.f32 %v3218, %v3219
    %v3221 = vsub.f32 1.0, %v3220
    %v3222 = vmul.f32 %v3219, %v3221
    %v3223 = vadd.f32 %v3219, %v3222
    %vm3224 = vweird.f32 %v3218
    %vm3225 = vweird.f32 %v3219
    %vm3226 = vmor %vm3224, %vm3225
    %v3227 = vsel %vm3226, %v3219, %v3223
    %v3228 = vand.u32 2147483647, %v3218
    %vm3229 = vcmp.eq.f32.partialorder %v3228, 8.507059e+37
    %v3230 = vand.u32 %v3218, 2147483648
    %v3231 = vor.u32 1.1754944e-38, %v3230
    %v3232 = vsel %vm3229, %v3231, %v3227
    %v3233 = vmul.f32 1.0, %v3232
    %3235 = vrot.lane.b32.xlu0 %v3209, 96
    %v3236 = vpop.permute.xlu0 %3235
    %v3238 = vmul.f32 %v3233, %v3236
    %3240 = vrot.lane.b32.xlu0 %v3238, 32
    %v3241 = vpop.permute.xlu0 %3240
    %v3243 = vadd.f32 %v3185, %v3241
    %v3244 = vtanh.pop %v3243
    %v3245 = vsub.f32 1.0, %v3233
    %3247 = vrot.lane.b32.xlu0 %v3244, 112
    %v3248 = vpop.permute.xlu0 %3247
    %v3250 = vmul.f32 %v3245, %v3248
    %v3251 = vmul.f32 %v3233, %v3132
    %v3252 = vadd.f32 %v3250, %v3251
    %3254 = vrot.lane.b32.xlu0 %v3212, 80
    %v3255 = vpop.permute.xlu0 %3254
    %v3257 = vadd.f32 %v3186, %v3255
    %v3258 = vxor.u32 %v3257, 2147483648
    %v3259 = vmul.f32 %v3258, 1.442695
    %v3260 = vpow.pop %v3259
    %v3261 = vadd.f32 %v3260, 1.0
    %v3262 = vrcp.pop %v3261
    %v3263 = vmul.f32 %v3261, %v3262
    %v3264 = vsub.f32 1.0, %v3263
    %v3265 = vmul.f32 %v3262, %v3264
    %v3266 = vadd.f32 %v3262, %v3265
    %vm3267 = vweird.f32 %v3261
    %vm3268 = vweird.f32 %v3262
    %vm3269 = vmor %vm3267, %vm3268
    %v3270 = vsel %vm3269, %v3262, %v3266
    %v3271 = vand.u32 2147483647, %v3261
    %vm3272 = vcmp.eq.f32.partialorder %v3271, 8.507059e+37
    %v3273 = vand.u32 %v3261, 2147483648
    %v3274 = vor.u32 1.1754944e-38, %v3273
    %v3275 = vsel %vm3272, %v3274, %v3270
    %v3276 = vmul.f32 1.0, %v3275
    %3277 = vrot.lane.b32.xlu0 %v3212, 48
    %v3278 = vpop.permute.xlu0 %3277
    %v3280 = vmul.f32 %v3276, %v3278
    %3282 = vrot.lane.b32.xlu0 %v3280, 32
    %v3283 = vpop.permute.xlu0 %3282
    %v3285 = vadd.f32 %v3186, %v3283
    %v3286 = vtanh.pop %v3285
    %v3287 = vsub.f32 1.0, %v3276
    %3289 = vrot.lane.b32.xlu0 %v3286, 112
    %v3290 = vpop.permute.xlu0 %3289
    %v3292 = vmul.f32 %v3287, %v3290
    %v3293 = vmul.f32 %v3276, %v3174
    %v3294 = vadd.f32 %v3292, %v3293
    %3296 = vrot.lane.b32.xlu0 %v3252, 112
    %v3297 = vpop.permute.xlu0 %3296
    %3299 = vst.msk [vmem:[#allocation4 + $0x40] sm:$0xff] %vm1101, %v3297
    %3301 = vrot.lane.b32.xlu0 %v3294, 112
    %v3302 = vpop.permute.xlu0 %3301
    %3304 = vst.msk [vmem:[#allocation5 + $0x28] sm:$0xff] %vm1101, %v3302
    %v3305 = vld [vmem:[#allocation2 + $0x48] sm:$0xff]
    %v3306 = vld [vmem:[#allocation3 + $0x20] sm:$0xff]
    %v3307 = vsel %vm1101, %v3297, 0
    %v3309 = vsel %vm1101, %v3302, 0
    %3311 = vmatpush.msra.mxu0 0.0
    %3312 = vmatpush.msra.mxu0 0.0
    %3313 = vmatpush.msra.mxu0 0.0
    %3314 = vmatpush.msra.mxu0 0.0
    %3315 = vmatpush.msra.mxu0 0.0
    %3316 = vmatpush.msra.mxu0 0.0
    %3317 = vmatpush.msra.mxu0 0.0
    %3318 = vmatpush.msra.mxu0 0.0
    %3319 = vmatpush.msra.mxu0 0.0
    %3320 = vmatpush.msra.mxu0 0.0
    %3321 = vmatpush.msra.mxu0 0.0
    %3322 = vmatpush.msra.mxu0 0.0
    %3323 = vmatpush.msra.mxu0 0.0
    %3324 = vmatpush.msra.mxu0 0.0
    %3325 = vmatpush.msra.mxu0 %v2221
    %3326 = vmatpush.msra.mxu0 %v2220
    %3327 = vmatmul.f32.gmra.mxu0 %v3307
    %v3328 = vpop.f32.mrf.mxu0
    %v3329 = vadd.f32 %v2226, %v3328
    %3330 = vmatmul.f32.gmra.mxu0 %v3309
    %v3331 = vpop.f32.mrf.mxu0
    %v3332 = vadd.f32 %v2226, %v3331
    %3333 = vdwg.mxu0
    %v3334 = vadd.f32 %v3305, %v3329
    %v3335 = vxor.u32 %v3334, 2147483648
    %v3336 = vmul.f32 %v3335, 1.442695
    %v3337 = vpow.pop %v3336
    %v3338 = vadd.f32 %v3337, 1.0
    %v3339 = vrcp.pop %v3338
    %v3340 = vmul.f32 %v3338, %v3339
    %v3341 = vsub.f32 1.0, %v3340
    %v3342 = vmul.f32 %v3339, %v3341
    %v3343 = vadd.f32 %v3339, %v3342
    %vm3344 = vweird.f32 %v3338
    %vm3345 = vweird.f32 %v3339
    %vm3346 = vmor %vm3344, %vm3345
    %v3347 = vsel %vm3346, %v3339, %v3343
    %v3348 = vand.u32 2147483647, %v3338
    %vm3349 = vcmp.eq.f32.partialorder %v3348, 8.507059e+37
    %v3350 = vand.u32 %v3338, 2147483648
    %v3351 = vor.u32 1.1754944e-38, %v3350
    %v3352 = vsel %vm3349, %v3351, %v3347
    %v3353 = vmul.f32 1.0, %v3352
    %3355 = vrot.lane.b32.xlu0 %v3329, 96
    %v3356 = vpop.permute.xlu0 %3355
    %v3358 = vmul.f32 %v3353, %v3356
    %3360 = vrot.lane.b32.xlu0 %v3358, 32
    %v3361 = vpop.permute.xlu0 %3360
    %v3363 = vadd.f32 %v3305, %v3361
    %v3364 = vtanh.pop %v3363
    %v3365 = vsub.f32 1.0, %v3353
    %3367 = vrot.lane.b32.xlu0 %v3364, 112
    %v3368 = vpop.permute.xlu0 %3367
    %v3370 = vmul.f32 %v3365, %v3368
    %v3371 = vmul.f32 %v3353, %v3252
    %v3372 = vadd.f32 %v3370, %v3371
    %3374 = vrot.lane.b32.xlu0 %v3332, 80
    %v3375 = vpop.permute.xlu0 %3374
    %v3377 = vadd.f32 %v3306, %v3375
    %v3378 = vxor.u32 %v3377, 2147483648
    %v3379 = vmul.f32 %v3378, 1.442695
    %v3380 = vpow.pop %v3379
    %v3381 = vadd.f32 %v3380, 1.0
    %v3382 = vrcp.pop %v3381
    %v3383 = vmul.f32 %v3381, %v3382
    %v3384 = vsub.f32 1.0, %v3383
    %v3385 = vmul.f32 %v3382, %v3384
    %v3386 = vadd.f32 %v3382, %v3385
    %vm3387 = vweird.f32 %v3381
    %vm3388 = vweird.f32 %v3382
    %vm3389 = vmor %vm3387, %vm3388
    %v3390 = vsel %vm3389, %v3382, %v3386
    %v3391 = vand.u32 2147483647, %v3381
    %vm3392 = vcmp.eq.f32.partialorder %v3391, 8.507059e+37
    %v3393 = vand.u32 %v3381, 2147483648
    %v3394 = vor.u32 1.1754944e-38, %v3393
    %v3395 = vsel %vm3392, %v3394, %v3390
    %v3396 = vmul.f32 1.0, %v3395
    %3397 = vrot.lane.b32.xlu0 %v3332, 48
    %v3398 = vpop.permute.xlu0 %3397
    %v3400 = vmul.f32 %v3396, %v3398
    %3402 = vrot.lane.b32.xlu0 %v3400, 32
    %v3403 = vpop.permute.xlu0 %3402
    %v3405 = vadd.f32 %v3306, %v3403
    %v3406 = vtanh.pop %v3405
    %v3407 = vsub.f32 1.0, %v3396
    %3409 = vrot.lane.b32.xlu0 %v3406, 112
    %v3410 = vpop.permute.xlu0 %3409
    %v3412 = vmul.f32 %v3407, %v3410
    %v3413 = vmul.f32 %v3396, %v3294
    %v3414 = vadd.f32 %v3412, %v3413
    %3416 = vrot.lane.b32.xlu0 %v3372, 112
    %v3417 = vpop.permute.xlu0 %3416
    %3419 = vst.msk [vmem:[#allocation4 + $0x48] sm:$0xff] %vm1101, %v3417
    %3421 = vrot.lane.b32.xlu0 %v3414, 112
    %v3422 = vpop.permute.xlu0 %3421
    %3424 = vst.msk [vmem:[#allocation5 + $0x20] sm:$0xff] %vm1101, %v3422
    %v3425 = vld [vmem:[#allocation2 + $0x50] sm:$0xff]
    %v3426 = vld [vmem:[#allocation3 + $0x18] sm:$0xff]
    %v3427 = vsel %vm1101, %v3417, 0
    %v3429 = vsel %vm1101, %v3422, 0
    %3431 = vmatpush.msra.mxu0 0.0
    %3432 = vmatpush.msra.mxu0 0.0
    %3433 = vmatpush.msra.mxu0 0.0
    %3434 = vmatpush.msra.mxu0 0.0
    %3435 = vmatpush.msra.mxu0 0.0
    %3436 = vmatpush.msra.mxu0 0.0
    %3437 = vmatpush.msra.mxu0 0.0
    %3438 = vmatpush.msra.mxu0 0.0
    %3439 = vmatpush.msra.mxu0 0.0
    %3440 = vmatpush.msra.mxu0 0.0
    %3441 = vmatpush.msra.mxu0 0.0
    %3442 = vmatpush.msra.mxu0 0.0
    %3443 = vmatpush.msra.mxu0 0.0
    %3444 = vmatpush.msra.mxu0 0.0
    %3445 = vmatpush.msra.mxu0 %v2221
    %3446 = vmatpush.msra.mxu0 %v2220
    %3447 = vmatmul.f32.gmra.mxu0 %v3427
    %v3448 = vpop.f32.mrf.mxu0
    %v3449 = vadd.f32 %v2226, %v3448
    %3450 = vmatmul.f32.gmra.mxu0 %v3429
    %v3451 = vpop.f32.mrf.mxu0
    %v3452 = vadd.f32 %v2226, %v3451
    %3453 = vdwg.mxu0
    %v3454 = vadd.f32 %v3425, %v3449
    %v3455 = vxor.u32 %v3454, 2147483648
    %v3456 = vmul.f32 %v3455, 1.442695
    %v3457 = vpow.pop %v3456
    %v3458 = vadd.f32 %v3457, 1.0
    %v3459 = vrcp.pop %v3458
    %v3460 = vmul.f32 %v3458, %v3459
    %v3461 = vsub.f32 1.0, %v3460
    %v3462 = vmul.f32 %v3459, %v3461
    %v3463 = vadd.f32 %v3459, %v3462
    %vm3464 = vweird.f32 %v3458
    %vm3465 = vweird.f32 %v3459
    %vm3466 = vmor %vm3464, %vm3465
    %v3467 = vsel %vm3466, %v3459, %v3463
    %v3468 = vand.u32 2147483647, %v3458
    %vm3469 = vcmp.eq.f32.partialorder %v3468, 8.507059e+37
    %v3470 = vand.u32 %v3458, 2147483648
    %v3471 = vor.u32 1.1754944e-38, %v3470
    %v3472 = vsel %vm3469, %v3471, %v3467
    %v3473 = vmul.f32 1.0, %v3472
    %3475 = vrot.lane.b32.xlu0 %v3449, 96
    %v3476 = vpop.permute.xlu0 %3475
    %v3478 = vmul.f32 %v3473, %v3476
    %3480 = vrot.lane.b32.xlu0 %v3478, 32
    %v3481 = vpop.permute.xlu0 %3480
    %v3483 = vadd.f32 %v3425, %v3481
    %v3484 = vtanh.pop %v3483
    %v3485 = vsub.f32 1.0, %v3473
    %3487 = vrot.lane.b32.xlu0 %v3484, 112
    %v3488 = vpop.permute.xlu0 %3487
    %v3490 = vmul.f32 %v3485, %v3488
    %v3491 = vmul.f32 %v3473, %v3372
    %v3492 = vadd.f32 %v3490, %v3491
    %3494 = vrot.lane.b32.xlu0 %v3452, 80
    %v3495 = vpop.permute.xlu0 %3494
    %v3497 = vadd.f32 %v3426, %v3495
    %v3498 = vxor.u32 %v3497, 2147483648
    %v3499 = vmul.f32 %v3498, 1.442695
    %v3500 = vpow.pop %v3499
    %v3501 = vadd.f32 %v3500, 1.0
    %v3502 = vrcp.pop %v3501
    %v3503 = vmul.f32 %v3501, %v3502
    %v3504 = vsub.f32 1.0, %v3503
    %v3505 = vmul.f32 %v3502, %v3504
    %v3506 = vadd.f32 %v3502, %v3505
    %vm3507 = vweird.f32 %v3501
    %vm3508 = vweird.f32 %v3502
    %vm3509 = vmor %vm3507, %vm3508
    %v3510 = vsel %vm3509, %v3502, %v3506
    %v3511 = vand.u32 2147483647, %v3501
    %vm3512 = vcmp.eq.f32.partialorder %v3511, 8.507059e+37
    %v3513 = vand.u32 %v3501, 2147483648
    %v3514 = vor.u32 1.1754944e-38, %v3513
    %v3515 = vsel %vm3512, %v3514, %v3510
    %v3516 = vmul.f32 1.0, %v3515
    %3517 = vrot.lane.b32.xlu0 %v3452, 48
    %v3518 = vpop.permute.xlu0 %3517
    %v3520 = vmul.f32 %v3516, %v3518
    %3522 = vrot.lane.b32.xlu0 %v3520, 32
    %v3523 = vpop.permute.xlu0 %3522
    %v3525 = vadd.f32 %v3426, %v3523
    %v3526 = vtanh.pop %v3525
    %v3527 = vsub.f32 1.0, %v3516
    %3529 = vrot.lane.b32.xlu0 %v3526, 112
    %v3530 = vpop.permute.xlu0 %3529
    %v3532 = vmul.f32 %v3527, %v3530
    %v3533 = vmul.f32 %v3516, %v3414
    %v3534 = vadd.f32 %v3532, %v3533
    %3536 = vrot.lane.b32.xlu0 %v3492, 112
    %v3537 = vpop.permute.xlu0 %3536
    %3539 = vst.msk [vmem:[#allocation4 + $0x50] sm:$0xff] %vm1101, %v3537
    %3541 = vrot.lane.b32.xlu0 %v3534, 112
    %v3542 = vpop.permute.xlu0 %3541
    %3544 = vst.msk [vmem:[#allocation5 + $0x18] sm:$0xff] %vm1101, %v3542
    %v3545 = vld [vmem:[#allocation2 + $0x58] sm:$0xff]
    %v3546 = vld [vmem:[#allocation3 + $0x10] sm:$0xff]
    %v3547 = vsel %vm1101, %v3537, 0
    %v3549 = vsel %vm1101, %v3542, 0
    %3551 = vmatpush.msra.mxu0 0.0
    %3552 = vmatpush.msra.mxu0 0.0
    %3553 = vmatpush.msra.mxu0 0.0
    %3554 = vmatpush.msra.mxu0 0.0
    %3555 = vmatpush.msra.mxu0 0.0
    %3556 = vmatpush.msra.mxu0 0.0
    %3557 = vmatpush.msra.mxu0 0.0
    %3558 = vmatpush.msra.mxu0 0.0
    %3559 = vmatpush.msra.mxu0 0.0
    %3560 = vmatpush.msra.mxu0 0.0
    %3561 = vmatpush.msra.mxu0 0.0
    %3562 = vmatpush.msra.mxu0 0.0
    %3563 = vmatpush.msra.mxu0 0.0
    %3564 = vmatpush.msra.mxu0 0.0
    %3565 = vmatpush.msra.mxu0 %v2221
    %3566 = vmatpush.msra.mxu0 %v2220
    %3567 = vmatmul.f32.gmra.mxu0 %v3547
    %v3568 = vpop.f32.mrf.mxu0
    %v3569 = vadd.f32 %v2226, %v3568
    %3570 = vmatmul.f32.gmra.mxu0 %v3549
    %v3571 = vpop.f32.mrf.mxu0
    %v3572 = vadd.f32 %v2226, %v3571
    %3573 = vdwg.mxu0
    %v3574 = vadd.f32 %v3545, %v3569
    %v3575 = vxor.u32 %v3574, 2147483648
    %v3576 = vmul.f32 %v3575, 1.442695
    %v3577 = vpow.pop %v3576
    %v3578 = vadd.f32 %v3577, 1.0
    %v3579 = vrcp.pop %v3578
    %v3580 = vmul.f32 %v3578, %v3579
    %v3581 = vsub.f32 1.0, %v3580
    %v3582 = vmul.f32 %v3579, %v3581
    %v3583 = vadd.f32 %v3579, %v3582
    %vm3584 = vweird.f32 %v3578
    %vm3585 = vweird.f32 %v3579
    %vm3586 = vmor %vm3584, %vm3585
    %v3587 = vsel %vm3586, %v3579, %v3583
    %v3588 = vand.u32 2147483647, %v3578
    %vm3589 = vcmp.eq.f32.partialorder %v3588, 8.507059e+37
    %v3590 = vand.u32 %v3578, 2147483648
    %v3591 = vor.u32 1.1754944e-38, %v3590
    %v3592 = vsel %vm3589, %v3591, %v3587
    %v3593 = vmul.f32 1.0, %v3592
    %3595 = vrot.lane.b32.xlu0 %v3569, 96
    %v3596 = vpop.permute.xlu0 %3595
    %v3598 = vmul.f32 %v3593, %v3596
    %3600 = vrot.lane.b32.xlu0 %v3598, 32
    %v3601 = vpop.permute.xlu0 %3600
    %v3603 = vadd.f32 %v3545, %v3601
    %v3604 = vtanh.pop %v3603
    %v3605 = vsub.f32 1.0, %v3593
    %3607 = vrot.lane.b32.xlu0 %v3604, 112
    %v3608 = vpop.permute.xlu0 %3607
    %v3610 = vmul.f32 %v3605, %v3608
    %v3611 = vmul.f32 %v3593, %v3492
    %v3612 = vadd.f32 %v3610, %v3611
    %3614 = vrot.lane.b32.xlu0 %v3572, 80
    %v3615 = vpop.permute.xlu0 %3614
    %v3617 = vadd.f32 %v3546, %v3615
    %v3618 = vxor.u32 %v3617, 2147483648
    %v3619 = vmul.f32 %v3618, 1.442695
    %v3620 = vpow.pop %v3619
    %v3621 = vadd.f32 %v3620, 1.0
    %v3622 = vrcp.pop %v3621
    %v3623 = vmul.f32 %v3621, %v3622
    %v3624 = vsub.f32 1.0, %v3623
    %v3625 = vmul.f32 %v3622, %v3624
    %v3626 = vadd.f32 %v3622, %v3625
    %vm3627 = vweird.f32 %v3621
    %vm3628 = vweird.f32 %v3622
    %vm3629 = vmor %vm3627, %vm3628
    %v3630 = vsel %vm3629, %v3622, %v3626
    %v3631 = vand.u32 2147483647, %v3621
    %vm3632 = vcmp.eq.f32.partialorder %v3631, 8.507059e+37
    %v3633 = vand.u32 %v3621, 2147483648
    %v3634 = vor.u32 1.1754944e-38, %v3633
    %v3635 = vsel %vm3632, %v3634, %v3630
    %v3636 = vmul.f32 1.0, %v3635
    %3637 = vrot.lane.b32.xlu0 %v3572, 48
    %v3638 = vpop.permute.xlu0 %3637
    %v3640 = vmul.f32 %v3636, %v3638
    %3642 = vrot.lane.b32.xlu0 %v3640, 32
    %v3643 = vpop.permute.xlu0 %3642
    %v3645 = vadd.f32 %v3546, %v3643
    %v3646 = vtanh.pop %v3645
    %v3647 = vsub.f32 1.0, %v3636
    %3649 = vrot.lane.b32.xlu0 %v3646, 112
    %v3650 = vpop.permute.xlu0 %3649
    %v3652 = vmul.f32 %v3647, %v3650
    %v3653 = vmul.f32 %v3636, %v3534
    %v3654 = vadd.f32 %v3652, %v3653
    %3656 = vrot.lane.b32.xlu0 %v3612, 112
    %v3657 = vpop.permute.xlu0 %3656
    %3659 = vst.msk [vmem:[#allocation4 + $0x58] sm:$0xff] %vm1101, %v3657
    %3661 = vrot.lane.b32.xlu0 %v3654, 112
    %v3662 = vpop.permute.xlu0 %3661
    %3664 = vst.msk [vmem:[#allocation5 + $0x10] sm:$0xff] %vm1101, %v3662
    %v3665 = vld [vmem:[#allocation2 + $0x60] sm:$0xff]
    %v3666 = vld [vmem:[#allocation3 + $0x8] sm:$0xff]
    %v3667 = vsel %vm1101, %v3657, 0
    %v3669 = vsel %vm1101, %v3662, 0
    %3671 = vmatpush.msra.mxu0 0.0
    %3672 = vmatpush.msra.mxu0 0.0
    %3673 = vmatpush.msra.mxu0 0.0
    %3674 = vmatpush.msra.mxu0 0.0
    %3675 = vmatpush.msra.mxu0 0.0
    %3676 = vmatpush.msra.mxu0 0.0
    %3677 = vmatpush.msra.mxu0 0.0
    %3678 = vmatpush.msra.mxu0 0.0
    %3679 = vmatpush.msra.mxu0 0.0
    %3680 = vmatpush.msra.mxu0 0.0
    %3681 = vmatpush.msra.mxu0 0.0
    %3682 = vmatpush.msra.mxu0 0.0
    %3683 = vmatpush.msra.mxu0 0.0
    %3684 = vmatpush.msra.mxu0 0.0
    %3685 = vmatpush.msra.mxu0 %v2221
    %3686 = vmatpush.msra.mxu0 %v2220
    %3687 = vmatmul.f32.gmra.mxu0 %v3667
    %v3688 = vpop.f32.mrf.mxu0
    %v3689 = vadd.f32 %v2226, %v3688
    %3690 = vmatmul.f32.gmra.mxu0 %v3669
    %v3691 = vpop.f32.mrf.mxu0
    %v3692 = vadd.f32 %v2226, %v3691
    %3693 = vdwg.mxu0
    %v3694 = vadd.f32 %v3665, %v3689
    %v3695 = vxor.u32 %v3694, 2147483648
    %v3696 = vmul.f32 %v3695, 1.442695
    %v3697 = vpow.pop %v3696
    %v3698 = vadd.f32 %v3697, 1.0
    %v3699 = vrcp.pop %v3698
    %v3700 = vmul.f32 %v3698, %v3699
    %v3701 = vsub.f32 1.0, %v3700
    %v3702 = vmul.f32 %v3699, %v3701
    %v3703 = vadd.f32 %v3699, %v3702
    %vm3704 = vweird.f32 %v3698
    %vm3705 = vweird.f32 %v3699
    %vm3706 = vmor %vm3704, %vm3705
    %v3707 = vsel %vm3706, %v3699, %v3703
    %v3708 = vand.u32 2147483647, %v3698
    %vm3709 = vcmp.eq.f32.partialorder %v3708, 8.507059e+37
    %v3710 = vand.u32 %v3698, 2147483648
    %v3711 = vor.u32 1.1754944e-38, %v3710
    %v3712 = vsel %vm3709, %v3711, %v3707
    %v3713 = vmul.f32 1.0, %v3712
    %3715 = vrot.lane.b32.xlu0 %v3689, 96
    %v3716 = vpop.permute.xlu0 %3715
    %v3718 = vmul.f32 %v3713, %v3716
    %3720 = vrot.lane.b32.xlu0 %v3718, 32
    %v3721 = vpop.permute.xlu0 %3720
    %v3723 = vadd.f32 %v3665, %v3721
    %v3724 = vtanh.pop %v3723
    %v3725 = vsub.f32 1.0, %v3713
    %3727 = vrot.lane.b32.xlu0 %v3724, 112
    %v3728 = vpop.permute.xlu0 %3727
    %v3730 = vmul.f32 %v3725, %v3728
    %v3731 = vmul.f32 %v3713, %v3612
    %v3732 = vadd.f32 %v3730, %v3731
    %3734 = vrot.lane.b32.xlu0 %v3692, 80
    %v3735 = vpop.permute.xlu0 %3734
    %v3737 = vadd.f32 %v3666, %v3735
    %v3738 = vxor.u32 %v3737, 2147483648
    %v3739 = vmul.f32 %v3738, 1.442695
    %v3740 = vpow.pop %v3739
    %v3741 = vadd.f32 %v3740, 1.0
    %v3742 = vrcp.pop %v3741
    %v3743 = vmul.f32 %v3741, %v3742
    %v3744 = vsub.f32 1.0, %v3743
    %v3745 = vmul.f32 %v3742, %v3744
    %v3746 = vadd.f32 %v3742, %v3745
    %vm3747 = vweird.f32 %v3741
    %vm3748 = vweird.f32 %v3742
    %vm3749 = vmor %vm3747, %vm3748
    %v3750 = vsel %vm3749, %v3742, %v3746
    %v3751 = vand.u32 2147483647, %v3741
    %vm3752 = vcmp.eq.f32.partialorder %v3751, 8.507059e+37
    %v3753 = vand.u32 %v3741, 2147483648
    %v3754 = vor.u32 1.1754944e-38, %v3753
    %v3755 = vsel %vm3752, %v3754, %v3750
    %v3756 = vmul.f32 1.0, %v3755
    %3757 = vrot.lane.b32.xlu0 %v3692, 48
    %v3758 = vpop.permute.xlu0 %3757
    %v3760 = vmul.f32 %v3756, %v3758
    %3762 = vrot.lane.b32.xlu0 %v3760, 32
    %v3763 = vpop.permute.xlu0 %3762
    %v3765 = vadd.f32 %v3666, %v3763
    %v3766 = vtanh.pop %v3765
    %v3767 = vsub.f32 1.0, %v3756
    %3769 = vrot.lane.b32.xlu0 %v3766, 112
    %v3770 = vpop.permute.xlu0 %3769
    %v3772 = vmul.f32 %v3767, %v3770
    %v3773 = vmul.f32 %v3756, %v3654
    %v3774 = vadd.f32 %v3772, %v3773
    %3776 = vrot.lane.b32.xlu0 %v3732, 112
    %v3777 = vpop.permute.xlu0 %3776
    %3779 = vst.msk [vmem:[#allocation4 + $0x60] sm:$0xff] %vm1101, %v3777
    %3781 = vrot.lane.b32.xlu0 %v3774, 112
    %v3782 = vpop.permute.xlu0 %3781
    %3784 = vst.msk [vmem:[#allocation5 + $0x8] sm:$0xff] %vm1101, %v3782
    %v3785 = vld [vmem:[#allocation2 + $0x68] sm:$0xff]
    %v3786 = vld [vmem:[#allocation3] sm:$0xff]
    %v3787 = vsel %vm1101, %v3777, 0
    %v3789 = vsel %vm1101, %v3782, 0
    %3791 = vmatpush.msra.mxu0 0.0
    %3792 = vmatpush.msra.mxu0 0.0
    %3793 = vmatpush.msra.mxu0 0.0
    %3794 = vmatpush.msra.mxu0 0.0
    %3795 = vmatpush.msra.mxu0 0.0
    %3796 = vmatpush.msra.mxu0 0.0
    %3797 = vmatpush.msra.mxu0 0.0
    %3798 = vmatpush.msra.mxu0 0.0
    %3799 = vmatpush.msra.mxu0 0.0
    %3800 = vmatpush.msra.mxu0 0.0
    %3801 = vmatpush.msra.mxu0 0.0
    %3802 = vmatpush.msra.mxu0 0.0
    %3803 = vmatpush.msra.mxu0 0.0
    %3804 = vmatpush.msra.mxu0 0.0
    %3805 = vmatpush.msra.mxu0 %v2221
    %3806 = vmatpush.msra.mxu0 %v2220
    %3807 = vmatmul.f32.gmra.mxu0 %v3787
    %v3808 = vpop.f32.mrf.mxu0
    %v3809 = vadd.f32 %v2226, %v3808
    %3810 = vmatmul.f32.gmra.mxu0 %v3789
    %v3811 = vpop.f32.mrf.mxu0
    %v3812 = vadd.f32 %v2226, %v3811
    %3813 = vdwg.mxu0
    %v3814 = vadd.f32 %v3785, %v3809
    %v3815 = vxor.u32 %v3814, 2147483648
    %v3816 = vmul.f32 %v3815, 1.442695
    %v3817 = vpow.pop %v3816
    %v3818 = vadd.f32 %v3817, 1.0
    %v3819 = vrcp.pop %v3818
    %v3820 = vmul.f32 %v3818, %v3819
    %v3821 = vsub.f32 1.0, %v3820
    %v3822 = vmul.f32 %v3819, %v3821
    %v3823 = vadd.f32 %v3819, %v3822
    %vm3824 = vweird.f32 %v3818
    %vm3825 = vweird.f32 %v3819
    %vm3826 = vmor %vm3824, %vm3825
    %v3827 = vsel %vm3826, %v3819, %v3823
    %v3828 = vand.u32 2147483647, %v3818
    %vm3829 = vcmp.eq.f32.partialorder %v3828, 8.507059e+37
    %v3830 = vand.u32 %v3818, 2147483648
    %v3831 = vor.u32 1.1754944e-38, %v3830
    %v3832 = vsel %vm3829, %v3831, %v3827
    %v3833 = vmul.f32 1.0, %v3832
    %3835 = vrot.lane.b32.xlu0 %v3809, 96
    %v3836 = vpop.permute.xlu0 %3835
    %v3838 = vmul.f32 %v3833, %v3836
    %3840 = vrot.lane.b32.xlu0 %v3838, 32
    %v3841 = vpop.permute.xlu0 %3840
    %v3843 = vadd.f32 %v3785, %v3841
    %v3844 = vtanh.pop %v3843
    %v3845 = vsub.f32 1.0, %v3833
    %3847 = vrot.lane.b32.xlu0 %v3844, 112
    %v3848 = vpop.permute.xlu0 %3847
    %v3850 = vmul.f32 %v3845, %v3848
    %v3851 = vmul.f32 %v3833, %v3732
    %v3852 = vadd.f32 %v3850, %v3851
    %3854 = vrot.lane.b32.xlu0 %v3812, 80
    %v3855 = vpop.permute.xlu0 %3854
    %v3857 = vadd.f32 %v3786, %v3855
    %v3858 = vxor.u32 %v3857, 2147483648
    %v3859 = vmul.f32 %v3858, 1.442695
    %v3860 = vpow.pop %v3859
    %v3861 = vadd.f32 %v3860, 1.0
    %v3862 = vrcp.pop %v3861
    %v3863 = vmul.f32 %v3861, %v3862
    %v3864 = vsub.f32 1.0, %v3863
    %v3865 = vmul.f32 %v3862, %v3864
    %v3866 = vadd.f32 %v3862, %v3865
    %vm3867 = vweird.f32 %v3861
    %vm3868 = vweird.f32 %v3862
    %vm3869 = vmor %vm3867, %vm3868
    %v3870 = vsel %vm3869, %v3862, %v3866
    %v3871 = vand.u32 2147483647, %v3861
    %vm3872 = vcmp.eq.f32.partialorder %v3871, 8.507059e+37
    %v3873 = vand.u32 %v3861, 2147483648
    %v3874 = vor.u32 1.1754944e-38, %v3873
    %v3875 = vsel %vm3872, %v3874, %v3870
    %v3876 = vmul.f32 1.0, %v3875
    %3877 = vrot.lane.b32.xlu0 %v3812, 48
    %v3878 = vpop.permute.xlu0 %3877
    %v3880 = vmul.f32 %v3876, %v3878
    %3882 = vrot.lane.b32.xlu0 %v3880, 32
    %v3883 = vpop.permute.xlu0 %3882
    %v3885 = vadd.f32 %v3786, %v3883
    %v3886 = vtanh.pop %v3885
    %v3887 = vsub.f32 1.0, %v3876
    %3889 = vrot.lane.b32.xlu0 %v3886, 112
    %v3890 = vpop.permute.xlu0 %3889
    %v3892 = vmul.f32 %v3887, %v3890
    %v3893 = vmul.f32 %v3876, %v3774
    %v3894 = vadd.f32 %v3892, %v3893
    %3896 = vrot.lane.b32.xlu0 %v3852, 112
    %v3897 = vpop.permute.xlu0 %3896
    %3899 = vst.msk [vmem:[#allocation4 + $0x68] sm:$0xff] %vm1101, %v3897
    %3901 = vrot.lane.b32.xlu0 %v3894, 112
    %v3902 = vpop.permute.xlu0 %3901
    %3904 = vst.msk [vmem:[#allocation5] sm:$0xff] %vm1101, %v3902
    %v3905 = vld [vmem:[#allocation4] sm:$0xff]
    %v3906 = vld [vmem:[#allocation4 + $0x8] sm:$0xff]
    %v3907 = vld [vmem:[#allocation4 + $0x10] sm:$0xff]
    %v3908 = vld [vmem:[#allocation4 + $0x18] sm:$0xff]
    %v3909 = vld [vmem:[#allocation4 + $0x20] sm:$0xff]
    %v3910 = vld [vmem:[#allocation4 + $0x28] sm:$0xff]
    %v3911 = vld [vmem:[#allocation4 + $0x30] sm:$0xff]
    %v3912 = vld [vmem:[#allocation4 + $0x38] sm:$0xff]
    %v3913 = vld [vmem:[#allocation4 + $0x40] sm:$0xff]
    %v3914 = vld [vmem:[#allocation4 + $0x48] sm:$0xff]
    %v3915 = vld [vmem:[#allocation4 + $0x50] sm:$0xff]
    %v3916 = vld [vmem:[#allocation4 + $0x58] sm:$0xff]
    %v3917 = vld [vmem:[#allocation4 + $0x60] sm:$0xff]
    %v3918 = vld [vmem:[#allocation4 + $0x68] sm:$0xff]
    %v3919 = vtanh.pop %v3905
    %v3920 = vtanh.pop %v3906
    %v3921 = vtanh.pop %v3907
    %v3922 = vtanh.pop %v3908
    %v3923 = vtanh.pop %v3909
    %v3924 = vtanh.pop %v3910
    %v3925 = vtanh.pop %v3911
    %v3926 = vtanh.pop %v3912
    %v3927 = vtanh.pop %v3913
    %v3928 = vtanh.pop %v3914
    %v3929 = vtanh.pop %v3915
    %v3930 = vtanh.pop %v3916
    %v3931 = vtanh.pop %v3917
    %v3932 = vtanh.pop %v3918
    %v3933 = vld [vmem:[#allocation5] sm:$0xff]
    %v3934 = vld [vmem:[#allocation5 + $0x8] sm:$0xff]
    %v3935 = vld [vmem:[#allocation5 + $0x10] sm:$0xff]
    %v3936 = vld [vmem:[#allocation5 + $0x18] sm:$0xff]
    %v3937 = vld [vmem:[#allocation5 + $0x20] sm:$0xff]
    %v3938 = vld [vmem:[#allocation5 + $0x28] sm:$0xff]
    %v3939 = vld [vmem:[#allocation5 + $0x30] sm:$0xff]
    %v3940 = vld [vmem:[#allocation5 + $0x38] sm:$0xff]
    %v3941 = vld [vmem:[#allocation5 + $0x40] sm:$0xff]
    %v3942 = vld [vmem:[#allocation5 + $0x48] sm:$0xff]
    %v3943 = vld [vmem:[#allocation5 + $0x50] sm:$0xff]
    %v3944 = vld [vmem:[#allocation5 + $0x58] sm:$0xff]
    %v3945 = vld [vmem:[#allocation5 + $0x60] sm:$0xff]
    %v3946 = vld [vmem:[#allocation5 + $0x68] sm:$0xff]
    %v3947 = vtanh.pop %v3933
    %v3948 = vtanh.pop %v3934
    %v3949 = vtanh.pop %v3935
    %v3950 = vtanh.pop %v3936
    %v3951 = vtanh.pop %v3937
    %v3952 = vtanh.pop %v3938
    %v3953 = vtanh.pop %v3939
    %v3954 = vtanh.pop %v3940
    %v3955 = vtanh.pop %v3941
    %v3956 = vtanh.pop %v3942
    %v3957 = vtanh.pop %v3943
    %v3958 = vtanh.pop %v3944
    %v3959 = vtanh.pop %v3945
    %v3960 = vtanh.pop %v3946
    %3975 = vrot.lane.b32.xlu0 %v3947, 16
    %v3976 = vpop.permute.xlu0 %3975
    %3977 = vrot.lane.b32.xlu0 %v3948, 16
    %v3978 = vpop.permute.xlu0 %3977
    %3979 = vrot.lane.b32.xlu0 %v3949, 16
    %v3980 = vpop.permute.xlu0 %3979
    %3981 = vrot.lane.b32.xlu0 %v3950, 16
    %v3982 = vpop.permute.xlu0 %3981
    %3983 = vrot.lane.b32.xlu0 %v3951, 16
    %v3984 = vpop.permute.xlu0 %3983
    %3985 = vrot.lane.b32.xlu0 %v3952, 16
    %v3986 = vpop.permute.xlu0 %3985
    %3987 = vrot.lane.b32.xlu0 %v3953, 16
    %v3988 = vpop.permute.xlu0 %3987
    %3989 = vrot.lane.b32.xlu0 %v3954, 16
    %v3990 = vpop.permute.xlu0 %3989
    %3991 = vrot.lane.b32.xlu0 %v3955, 16
    %v3992 = vpop.permute.xlu0 %3991
    %3993 = vrot.lane.b32.xlu0 %v3956, 16
    %v3994 = vpop.permute.xlu0 %3993
    %3995 = vrot.lane.b32.xlu0 %v3957, 16
    %v3996 = vpop.permute.xlu0 %3995
    %3997 = vrot.lane.b32.xlu0 %v3958, 16
    %v3998 = vpop.permute.xlu0 %3997
    %3999 = vrot.lane.b32.xlu0 %v3959, 16
    %v4000 = vpop.permute.xlu0 %3999
    %4001 = vrot.lane.b32.xlu0 %v3960, 16
    %v4002 = vpop.permute.xlu0 %4001
    %v4017 = vsel %vm1101, %v3919, %v3976
    %v4018 = vsel %vm1101, %v3920, %v3978
    %v4019 = vsel %vm1101, %v3921, %v3980
    %v4020 = vsel %vm1101, %v3922, %v3982
    %v4021 = vsel %vm1101, %v3923, %v3984
    %v4022 = vsel %vm1101, %v3924, %v3986
    %v4023 = vsel %vm1101, %v3925, %v3988
    %v4024 = vsel %vm1101, %v3926, %v3990
    %v4025 = vsel %vm1101, %v3927, %v3992
    %v4026 = vsel %vm1101, %v3928, %v3994
    %v4027 = vsel %vm1101, %v3929, %v3996
    %v4028 = vsel %vm1101, %v3930, %v3998
    %v4029 = vsel %vm1101, %v3931, %v4000
    %v4030 = vsel %vm1101, %v3932, %v4002
    %v4031 = vld [vmem:[%s12] sm:$0xff]
    %v4032 = vld [vmem:[%s12 + $0x8] sm:$0xff]
    %v4033 = vld [vmem:[%s12 + $0x10] sm:$0xff]
    %v4034 = vld [vmem:[%s12 + $0x18] sm:$0xff]
    %v4035 = vld [vmem:[%s13] sm:$0x1]
    %v4037 = vperm.slane %v4035, 0
    %v4040 = vsel %vm1135, %v4017, 0
    %v4043 = vsel %vm1135, %v4018, 0
    %v4046 = vsel %vm1135, %v4019, 0
    %v4049 = vsel %vm1135, %v4020, 0
    %v4052 = vsel %vm1135, %v4021, 0
    %v4055 = vsel %vm1135, %v4022, 0
    %v4058 = vsel %vm1135, %v4023, 0
    %v4061 = vsel %vm1135, %v4024, 0
    %v4064 = vsel %vm1135, %v4025, 0
    %v4067 = vsel %vm1135, %v4026, 0
    %v4070 = vsel %vm1135, %v4027, 0
    %v4073 = vsel %vm1135, %v4028, 0
    %v4076 = vsel %vm1135, %v4029, 0
    %v4079 = vsel %vm1135, %v4030, 0
    %4081 = vmatpush.msra.mxu0 0.0
    %4082 = vmatpush.msra.mxu0 0.0
    %4083 = vmatpush.msra.mxu0 0.0
    %4084 = vmatpush.msra.mxu0 0.0
    %4085 = vmatpush.msra.mxu0 0.0
    %4086 = vmatpush.msra.mxu0 0.0
    %4087 = vmatpush.msra.mxu0 0.0
    %4088 = vmatpush.msra.mxu0 0.0
    %4089 = vmatpush.msra.mxu0 0.0
    %4090 = vmatpush.msra.mxu0 0.0
    %4091 = vmatpush.msra.mxu0 0.0
    %4092 = vmatpush.msra.mxu0 0.0
    %4093 = vmatpush.msra.mxu0 %v4034
    %4094 = vmatpush.msra.mxu0 %v4033
    %4095 = vmatpush.msra.mxu0 %v4032
    %4096 = vmatpush.msra.mxu0 %v4031
    %4097 = vmatmul.f32.gmra.mxu0 %v4040
    %v4098 = vpop.f32.mrf.mxu0
    %v4099 = vadd.f32 %v4037, %v4098
    %4100 = vmatmul.f32.gmra.mxu0 %v4043
    %v4101 = vpop.f32.mrf.mxu0
    %v4102 = vadd.f32 %v4037, %v4101
    %4103 = vmatmul.f32.gmra.mxu0 %v4046
    %v4104 = vpop.f32.mrf.mxu0
    %v4105 = vadd.f32 %v4037, %v4104
    %4106 = vmatmul.f32.gmra.mxu0 %v4049
    %v4107 = vpop.f32.mrf.mxu0
    %v4108 = vadd.f32 %v4037, %v4107
    %4109 = vmatmul.f32.gmra.mxu0 %v4052
    %v4110 = vpop.f32.mrf.mxu0
    %v4111 = vadd.f32 %v4037, %v4110
    %4112 = vmatmul.f32.gmra.mxu0 %v4055
    %v4113 = vpop.f32.mrf.mxu0
    %v4114 = vadd.f32 %v4037, %v4113
    %4115 = vmatmul.f32.gmra.mxu0 %v4058
    %v4116 = vpop.f32.mrf.mxu0
    %v4117 = vadd.f32 %v4037, %v4116
    %4118 = vmatmul.f32.gmra.mxu0 %v4061
    %v4119 = vpop.f32.mrf.mxu0
    %v4120 = vadd.f32 %v4037, %v4119
    %4121 = vmatmul.f32.gmra.mxu0 %v4064
    %v4122 = vpop.f32.mrf.mxu0
    %v4123 = vadd.f32 %v4037, %v4122
    %4124 = vmatmul.f32.gmra.mxu0 %v4067
    %v4125 = vpop.f32.mrf.mxu0
    %v4126 = vadd.f32 %v4037, %v4125
    %4127 = vmatmul.f32.gmra.mxu0 %v4070
    %v4128 = vpop.f32.mrf.mxu0
    %v4129 = vadd.f32 %v4037, %v4128
    %4130 = vmatmul.f32.gmra.mxu0 %v4073
    %v4131 = vpop.f32.mrf.mxu0
    %v4132 = vadd.f32 %v4037, %v4131
    %4133 = vmatmul.f32.gmra.mxu0 %v4076
    %v4134 = vpop.f32.mrf.mxu0
    %v4135 = vadd.f32 %v4037, %v4134
    %4136 = vmatmul.f32.gmra.mxu0 %v4079
    %v4137 = vpop.f32.mrf.mxu0
    %v4138 = vadd.f32 %v4037, %v4137
    %4139 = vdwg.mxu0
    %v4140 = vmax.f32 %v4099, 0.0
    %v4141 = vmax.f32 %v4102, 0.0
    %v4142 = vmax.f32 %v4105, 0.0
    %v4143 = vmax.f32 %v4108, 0.0
    %v4144 = vmax.f32 %v4111, 0.0
    %v4145 = vmax.f32 %v4114, 0.0
    %v4146 = vmax.f32 %v4117, 0.0
    %v4147 = vmax.f32 %v4120, 0.0
    %v4148 = vmax.f32 %v4123, 0.0
    %v4149 = vmax.f32 %v4126, 0.0
    %v4150 = vmax.f32 %v4129, 0.0
    %v4151 = vmax.f32 %v4132, 0.0
    %v4152 = vmax.f32 %v4135, 0.0
    %v4153 = vmax.f32 %v4138, 0.0
    %v4154 = vld [vmem:[%s14] sm:$0xff]
    %vm4155 = vcmask 916480
    %v4157 = vsel %vm4155, %v4154, 0
    %4159 = vmatpush.msra.mxu0 0.0
    %4160 = vmatpush.msra.mxu0 0.0
    %4161 = vmatpush.msra.mxu0 %v4153
    %4162 = vmatpush.msra.mxu0 %v4152
    %4163 = vmatpush.msra.mxu0 %v4151
    %4164 = vmatpush.msra.mxu0 %v4150
    %4165 = vmatpush.msra.mxu0 %v4149
    %4166 = vmatpush.msra.mxu0 %v4148
    %4167 = vmatpush.msra.mxu0 %v4147
    %4168 = vmatpush.msra.mxu0 %v4146
    %4169 = vmatpush.msra.mxu0 %v4145
    %4170 = vmatpush.msra.mxu0 %v4144
    %4171 = vmatpush.msra.mxu0 %v4143
    %4172 = vmatpush.msra.mxu0 %v4142
    %4173 = vmatpush.msra.mxu0 %v4141
    %4174 = vmatpush.msra.mxu0 %v4140
    %4175 = vmatmul.f32.gmra.mxu0 %v4157
    %v4176 = vpop.f32.mrf.mxu0
    %v4177 = vadd.f32 0.0, %v4176
    %4178 = vdwg.mxu0
    %4179 = vst [vmem:[#allocation6] sm:$0xff] %v4177
    // Predicated region
    $region62: #{tpu_custom_call.1} parent=1 // pred_check
      _
    $region63: #{tpu_custom_call.1} parent=1 // pred_check_branch
      %4181 = sbr.rel (0) target = $region65
    $region64: #{tpu_custom_call.1} parent=1 // pred_region
      %4183 = vsyncadd [#allocation7], 0
      %s4185 = sshll.u32 [#allocation6], 4
      %s4186 = int_to_ptr.vmem [resolvable:$true] %s4185
      %s4187 = sshll.u32 %s15, 4
      %s4188 = int_to_ptr.hbm [resolvable:$true] %s4187
      %4190 = dma.vmem_to_hbm [thread:$0]  %s4186, 128, %s4188, [#allocation7]
    $region65: #{tpu_custom_call.1} parent=1 // pred_fallthru
      _
    // Predicated region
    $region66: #{tpu_custom_call.1} parent=1 // pred_check
      _
    $region67: #{tpu_custom_call.1} parent=1 // pred_check_branch
      %4192 = sbr.rel (0) target = $region69
    $region68: #{tpu_custom_call.1} parent=1 // pred_region
      %4194 = dma.done [#allocation7], 128
    $region69: #{tpu_custom_call.1} parent=1 // pred_fallthru
      _
    %4195 = vsyncpa [#allocation7], 1

</llo_original>
